<compile_context>
chip_gen: v6e
topology: v6e:2x2x1
jax: 0.10.0
libtpu: 0.0.40
codegen_flags: <defaults>
</compile_context>

<pallas_src>
import functools

import jax
import jax.numpy as jnp
from jax.experimental import pallas as pl
from jax.experimental.pallas import tpu as pltpu

VMEM_SPEC = pl.BlockSpec(memory_space=pltpu.MemorySpace.VMEM)
C_PAD = 128  # lane-dense padding of the final class dimension


def _elu(x):
    # ELU with the dead branch clamped (no inf from exp of large positives).
    return jnp.where(x > 0, x, jnp.exp(jnp.minimum(x, 0.0)) - 1.0)


# ------------------------------ Pallas kernel --------------------------------

def _gat_fused_kernel(xp_ref, w1_ref, b1_ref, w2_ref, b2_ref, w3_ref, b3_ref,
                      w4_ref, b4_ref, wall_ref, wproj_ref, wout_ref, woa_ref,
                      o_ref, *, nheads, nhid, nclass, alpha):
    # ---- BasicBlock: 4x (weight-norm conv -> eval BN -> ReLU) --------------
    # conv1 (1x1) / conv2 (3x1) are applied per-tap of the composed 3x3
    # im2col via block-diagonal weights (BN scale pre-folded into w/b).
    s1 = jnp.maximum(jnp.dot(xp_ref[...], w1_ref[...],
                             preferred_element_type=jnp.float32) + b1_ref[...], 0.0)
    s2 = jnp.maximum(jnp.dot(s1, w2_ref[...],
                             preferred_element_type=jnp.float32) + b2_ref[...], 0.0)
    s3 = jnp.maximum(jnp.dot(s2, w3_ref[...],
                             preferred_element_type=jnp.float32) + b3_ref[...], 0.0)
    nodes = jnp.maximum(jnp.dot(s3, w4_ref[...],
                                preferred_element_type=jnp.float32) + b4_ref[...], 0.0)
    # F.dropout(training=False) -> identity.

    # ---- all attention heads from two packed matmuls ------------------------
    h_all = jnp.dot(nodes, wall_ref[...],
                    preferred_element_type=jnp.float32)          # [N, nheads*nhid]
    f12 = jnp.dot(nodes, wproj_ref[...],
                  preferred_element_type=jnp.float32)            # [N, 2*nheads]
    wout = wout_ref[...]                                         # [nheads*nhid, C_PAD]
    woa = woa_ref[...]                                           # [nheads*nhid, 2]

    n = h_all.shape[0]
    # out_att consumes concat(head outputs); accumulate its two projections
    # block-by-block instead of materializing the concatenation.
    h_out = jnp.zeros((n, wout.shape[1]), jnp.float32)
    fo = jnp.zeros((n, 2), jnp.float32)
    for hd in range(nheads):
        f1 = f12[:, hd:hd + 1]                                   # [N, 1]
        f2r = jnp.transpose(f12[:, nheads + hd:nheads + hd + 1]) # [1, N] (tiny XLU op)
        e = f1 + f2r                                             # [N, N]
        e = jnp.where(e > 0, e, alpha * e)                       # LeakyReLU(alpha)
        m = jnp.max(e, axis=1, keepdims=True)
        p = jnp.exp(e - m)
        s = jnp.sum(p, axis=1, keepdims=True)
        att = p * pl.reciprocal(s, approx=True)                  # softmax(dim=1)
        # attention dropout: eval mode -> identity
        feat = jnp.dot(att, h_all[:, hd * nhid:(hd + 1) * nhid],
                       preferred_element_type=jnp.float32)       # [N, nhid]
        feat = _elu(feat)                                        # concat=True -> ELU
        wo_blk = wout[hd * nhid:(hd + 1) * nhid, :]
        wa_blk = woa[hd * nhid:(hd + 1) * nhid, :]
        h_out = h_out + jnp.dot(feat, wo_blk, preferred_element_type=jnp.float32)
        fo = fo + jnp.dot(feat, wa_blk, preferred_element_type=jnp.float32)

    # ---- out_att head (concat=False), class dim padded to C_PAD lanes ------
    e = fo[:, 0:1] + jnp.transpose(fo[:, 1:2])
    e = jnp.where(e > 0, e, alpha * e)
    m = jnp.max(e, axis=1, keepdims=True)
    p = jnp.exp(e - m)
    s = jnp.sum(p, axis=1, keepdims=True)
    att = p * pl.reciprocal(s, approx=True)
    feat = jnp.dot(att, h_out, preferred_element_type=jnp.float32)   # [N, C_PAD]

    # ---- GAT epilogue: F.elu then log_softmax over the real classes --------
    y = _elu(feat)
    col = jax.lax.broadcasted_iota(jnp.int32, y.shape, 1)
    y = jnp.where(col < nclass, y, -1e30)                        # mask padded lanes
    m = jnp.max(y, axis=1, keepdims=True)
    z = y - m
    lse = jnp.log(jnp.sum(jnp.exp(z), axis=1, keepdims=True))
    o_ref[...] = z - lse


def gat_fused(xp, cp, gp, *, nheads, nhid, nclass, alpha):
    n = xp.shape[0]
    kern = functools.partial(_gat_fused_kernel, nheads=nheads, nhid=nhid,
                             nclass=nclass, alpha=alpha)
    return pl.pallas_call(
        kern,
        out_shape=jax.ShapeDtypeStruct((n, C_PAD), jnp.float32),
        in_specs=[VMEM_SPEC] * 13,
        out_specs=VMEM_SPEC,
    )(xp, cp["w1blk"], cp["b1rep"], cp["w2blk"], cp["b2rep"],
      cp["w3"], cp["b3"], cp["w4"], cp["b4"],
      gp["w_all"], gp["wproj"], gp["wout"], gp["woa"])


# --------------------------- wrapper / param prep ----------------------------

def im2col(x, kh, kw):
    # x: [B, H, W, C], stride 1, no padding; column order (kh, kw, C).
    B, H, W, C = x.shape
    Ho, Wo = H - kh + 1, W - kw + 1
    cols = []
    for i in range(kh):
        for j in range(kw):
            cols.append(x[:, i:i + Ho, j:j + Wo, :])
    p = jnp.concatenate(cols, axis=-1)
    return p.reshape(B * Ho * Wo, kh * kw * C), (B, Ho, Wo)


def weight_norm_matrix(v):
    # weight_norm(dim=0) with weight_g fixed to 1:  w = v / ||v||_2 per out-chan
    Cout, Cin, kh, kw = v.shape
    norm = jnp.sqrt(jnp.sum(v.reshape(Cout, -1) ** 2, axis=1))
    w = v / norm[:, None, None, None]
    # matmul form [kh*kw*Cin, Cout]; flat K order (kh, kw, Cin) matches im2col
    return jnp.transpose(w, (2, 3, 1, 0)).reshape(kh * kw * Cin, Cout)


def fold_conv_bn(v, bias, eps=1e-5):
    # TODO(synk): reference uses nonexistent `nn.BatchNorm`; interpreted as
    # BatchNorm2d in eval mode with default stats (mean=0, var=1, gamma=1,
    # beta=0), folded into the conv weight and bias.
    scale = 1.0 / jnp.sqrt(1.0 + eps)
    wmat = (weight_norm_matrix(v) * scale).astype(jnp.float32)
    shift = (bias * scale).reshape(1, -1).astype(jnp.float32)
    return wmat, shift


def build_conv_params(res, eps=1e-5):
    """Lift conv1/conv2 onto the composed 3x3 im2col via block-diag weights."""
    (v1, c1b), (v2, c2b), (v3, c3b), (v4, c4b) = res
    w1, b1 = fold_conv_bn(v1, c1b, eps)     # [3, 64],  [1, 64]
    w2, b2 = fold_conv_bn(v2, c2b, eps)     # [192, 64],[1, 64]
    w3, b3 = fold_conv_bn(v3, c3b, eps)     # [192,128],[1,128]
    w4, b4 = fold_conv_bn(v4, c4b, eps)     # [128,128],[1,128]
    cin, c1 = w1.shape                      # 3, 64
    c2 = w2.shape[1]                        # 64
    kt = 3                                  # kh of conv2 == kw of conv3 == 3
    # conv1 (1x1) applied independently to each of the 9 (k, m) taps.
    w1blk = jnp.zeros((kt * kt * cin, kt * kt * c1), jnp.float32)
    for t in range(kt * kt):
        w1blk = w1blk.at[t * cin:(t + 1) * cin, t * c1:(t + 1) * c1].set(w1)
    b1rep = jnp.tile(b1, (1, kt * kt))                          # [1, 576]
    # conv2 ((3,1), taps k) applied per column-tap m; stage-1 columns are in
    # (k, m, c1) order, stage-2 columns in (m, c2) order (= conv3 patch order).
    w2blk = jnp.zeros((kt * kt * c1, kt * c2), jnp.float32)
    for m in range(kt):
        for k in range(kt):
            w2blk = w2blk.at[k * (kt * c1) + m * c1:
                             k * (kt * c1) + (m + 1) * c1,
                             m * c2:(m + 1) * c2].set(w2[k * c1:(k + 1) * c1, :])
    b2rep = jnp.tile(b2, (1, kt))                               # [1, 192]
    return dict(w1blk=w1blk, b1rep=b1rep, w2blk=w2blk, b2rep=b2rep,
                w3=w3, b3=b3, w4=w4, b4=b4)


def build_gat_params(att, out_att, *, nhid, nheads, nclass, c_pad):
    # Pack per-head W into one matrix; fold W @ a1 / W @ a2 into a packed
    # projection so the kernel needs only two nodes-level matmuls.
    w_all = jnp.concatenate([Wp for (Wp, _) in att], axis=1)             # [nfeat, nheads*nhid]
    wproj = jnp.concatenate(
        [Wp @ ap[:nhid] for (Wp, ap) in att] +
        [Wp @ ap[nhid:] for (Wp, ap) in att], axis=1)                    # [nfeat, 2*nheads]
    Wo, ao = out_att
    wout = jnp.zeros((Wo.shape[0], c_pad), jnp.float32).at[:, :nclass].set(Wo)
    woa = jnp.concatenate([Wo @ ao[:nclass], Wo @ ao[nclass:]], axis=1)  # [nheads*nhid, 2]
    return dict(w_all=w_all.astype(jnp.float32),
                wproj=wproj.astype(jnp.float32),
                wout=wout.astype(jnp.float32),
                woa=woa.astype(jnp.float32))


def gat_forward(x_nchw, conv_p, gat_p, *, nheads, nhid, nclass, alpha):
    # TODO(synk): reference feeds the 4-D conv map into torch.mm (via the
    # `input` builtin); interpreted as flattening spatial positions into
    # graph nodes [B*H'*W', C].  No adjacency matrix is used in the spec, so
    # attention is over all nodes (fully connected).
    x_nhwc = jnp.transpose(x_nchw, (0, 2, 3, 1))               # NCHW -> NHWC
    xp, _ = im2col(x_nhwc, 3, 3)                               # [N, 27] composed 3x3 RF
    out_pad = gat_fused(xp, conv_p, gat_p, nheads=nheads, nhid=nhid,
                        nclass=nclass, alpha=alpha)            # [N, C_PAD]
    return out_pad[:, :nclass]                                 # drop lane padding


# ------------------------------------ main -----------------------------------

if __name__ == "__main__":
    key = jax.random.PRNGKey(0)
    keys = iter(jax.random.split(key, 32))

    B, H, W = 1, 10, 10
    nfeat, nhid, nclass, nheads = 128, 8, 7, 4
    alpha, dropout = 0.2, 0.6  # dropout unused in eval mode

    def conv_params(cin, cout, kh, kw):
        v = jax.random.normal(next(keys), (cout, cin, kh, kw), jnp.float32) * 0.1
        b = jax.random.normal(next(keys), (cout,), jnp.float32) * 0.01
        return (v, b)

    def xavier_uniform(k, shape, gain):
        fan_in, fan_out = shape[0], shape[1]
        bound = gain * (6.0 / (fan_in + fan_out)) ** 0.5
        return jax.random.uniform(k, shape, jnp.float32, -bound, bound)

    res = [
        conv_params(3, 64, 1, 1),
        conv_params(64, 64, 3, 1),
        conv_params(64, 128, 1, 3),
        conv_params(128, 128, 1, 1),
    ]
    att = []
    for _ in range(nheads):
        Wp = xavier_uniform(next(keys), (nfeat, nhid), 1.414)
        ap = xavier_uniform(next(keys), (2 * nhid, 1), 1.414)
        att.append((Wp, ap))
    Wo = xavier_uniform(next(keys), (nhid * nheads, nclass), 1.414)
    ao = xavier_uniform(next(keys), (2 * nclass, 1), 1.414)

    conv_p = build_conv_params(res)
    gat_p = build_gat_params(att, (Wo, ao), nhid=nhid, nheads=nheads,
                             nclass=nclass, c_pad=C_PAD)

    x = jax.random.normal(next(keys), (B, 3, H, W), jnp.float32)

    fwd = jax.jit(functools.partial(gat_forward, nheads=nheads, nhid=nhid,
                                    nclass=nclass, alpha=alpha))
    out = jax.block_until_ready(fwd(x, conv_p, gat_p))
    assert out.shape == (B * (H - 2) * (W - 2), nclass), out.shape
    assert bool(jnp.all(jnp.isfinite(out)))
    print("KERNEL_OK")
</pallas_src>

<mosaic_0001>
module attributes {stable_mosaic.version = 11 : i64} {
  func.func @_gat_fused_kernel(%arg0: memref<64x27xf32, #tpu.memory_space<vmem>>, %arg1: memref<27x576xf32, #tpu.memory_space<vmem>>, %arg2: memref<1x576xf32, #tpu.memory_space<vmem>>, %arg3: memref<576x192xf32, #tpu.memory_space<vmem>>, %arg4: memref<1x192xf32, #tpu.memory_space<vmem>>, %arg5: memref<192x128xf32, #tpu.memory_space<vmem>>, %arg6: memref<1x128xf32, #tpu.memory_space<vmem>>, %arg7: memref<128x128xf32, #tpu.memory_space<vmem>>, %arg8: memref<1x128xf32, #tpu.memory_space<vmem>>, %arg9: memref<128x32xf32, #tpu.memory_space<vmem>>, %arg10: memref<128x8xf32, #tpu.memory_space<vmem>>, %arg11: memref<32x128xf32, #tpu.memory_space<vmem>>, %arg12: memref<32x2xf32, #tpu.memory_space<vmem>>, %arg13: memref<64x128xf32, #tpu.memory_space<vmem>>) attributes {dimension_semantics = [], scalar_prefetch = 0 : i64, scratch_operands = 0 : i64, tpu.core_type = #tpu.core_type<tc>} {
    %c0 = arith.constant 0 : index
    %c0_0 = arith.constant 0 : index
    %0 = vector.load %arg0[%c0, %c0_0] : memref<64x27xf32, #tpu.memory_space<vmem>>, vector<64x27xf32>
    %c0_1 = arith.constant 0 : index
    %c0_2 = arith.constant 0 : index
    %1 = vector.load %arg1[%c0_1, %c0_2] : memref<27x576xf32, #tpu.memory_space<vmem>>, vector<27x576xf32>
    %cst = arith.constant dense<0.000000e+00> : vector<64x576xf32>
    %2 = tpu.matmul %0, %1, %cst {dimension_numbers = #tpu.dot_dimension_numbers<[1], [0], [0], [1], [0, 0, 1, 1], [], []>} : vector<64x27xf32>, vector<27x576xf32>, vector<64x576xf32> -> vector<64x576xf32>
    %c0_3 = arith.constant 0 : index
    %c0_4 = arith.constant 0 : index
    %3 = vector.load %arg2[%c0_3, %c0_4] : memref<1x576xf32, #tpu.memory_space<vmem>>, vector<1x576xf32>
    %4 = vector.broadcast %3 : vector<1x576xf32> to vector<64x576xf32>
    %5 = arith.addf %2, %4 : vector<64x576xf32>
    %cst_5 = arith.constant 0.000000e+00 : f32
    %6 = vector.broadcast %cst_5 : f32 to vector<64x576xf32>
    %7 = arith.maximumf %5, %6 : vector<64x576xf32>
    %c0_6 = arith.constant 0 : index
    %c0_7 = arith.constant 0 : index
    %8 = vector.load %arg3[%c0_6, %c0_7] : memref<576x192xf32, #tpu.memory_space<vmem>>, vector<576x192xf32>
    %cst_8 = arith.constant dense<0.000000e+00> : vector<64x192xf32>
    %9 = tpu.matmul %7, %8, %cst_8 {dimension_numbers = #tpu.dot_dimension_numbers<[1], [0], [0], [1], [0, 0, 1, 1], [], []>} : vector<64x576xf32>, vector<576x192xf32>, vector<64x192xf32> -> vector<64x192xf32>
    %c0_9 = arith.constant 0 : index
    %c0_10 = arith.constant 0 : index
    %10 = vector.load %arg4[%c0_9, %c0_10] : memref<1x192xf32, #tpu.memory_space<vmem>>, vector<1x192xf32>
    %11 = vector.broadcast %10 : vector<1x192xf32> to vector<64x192xf32>
    %12 = arith.addf %9, %11 : vector<64x192xf32>
    %cst_11 = arith.constant 0.000000e+00 : f32
    %13 = vector.broadcast %cst_11 : f32 to vector<64x192xf32>
    %14 = arith.maximumf %12, %13 : vector<64x192xf32>
    %c0_12 = arith.constant 0 : index
    %c0_13 = arith.constant 0 : index
    %15 = vector.load %arg5[%c0_12, %c0_13] : memref<192x128xf32, #tpu.memory_space<vmem>>, vector<192x128xf32>
    %cst_14 = arith.constant dense<0.000000e+00> : vector<64x128xf32>
    %16 = tpu.matmul %14, %15, %cst_14 {dimension_numbers = #tpu.dot_dimension_numbers<[1], [0], [0], [1], [0, 0, 1, 1], [], []>} : vector<64x192xf32>, vector<192x128xf32>, vector<64x128xf32> -> vector<64x128xf32>
    %c0_15 = arith.constant 0 : index
    %c0_16 = arith.constant 0 : index
    %17 = vector.load %arg6[%c0_15, %c0_16] : memref<1x128xf32, #tpu.memory_space<vmem>>, vector<1x128xf32>
    %18 = vector.broadcast %17 : vector<1x128xf32> to vector<64x128xf32>
    %19 = arith.addf %16, %18 : vector<64x128xf32>
    %cst_17 = arith.constant 0.000000e+00 : f32
    %20 = vector.broadcast %cst_17 : f32 to vector<64x128xf32>
    %21 = arith.maximumf %19, %20 : vector<64x128xf32>
    %c0_18 = arith.constant 0 : index
    %c0_19 = arith.constant 0 : index
    %22 = vector.load %arg7[%c0_18, %c0_19] : memref<128x128xf32, #tpu.memory_space<vmem>>, vector<128x128xf32>
    %cst_20 = arith.constant dense<0.000000e+00> : vector<64x128xf32>
    %23 = tpu.matmul %21, %22, %cst_20 {dimension_numbers = #tpu.dot_dimension_numbers<[1], [0], [0], [1], [0, 0, 1, 1], [], []>} : vector<64x128xf32>, vector<128x128xf32>, vector<64x128xf32> -> vector<64x128xf32>
    %c0_21 = arith.constant 0 : index
    %c0_22 = arith.constant 0 : index
    %24 = vector.load %arg8[%c0_21, %c0_22] : memref<1x128xf32, #tpu.memory_space<vmem>>, vector<1x128xf32>
    %25 = vector.broadcast %24 : vector<1x128xf32> to vector<64x128xf32>
    %26 = arith.addf %23, %25 : vector<64x128xf32>
    %cst_23 = arith.constant 0.000000e+00 : f32
    %27 = vector.broadcast %cst_23 : f32 to vector<64x128xf32>
    %28 = arith.maximumf %26, %27 : vector<64x128xf32>
    %c0_24 = arith.constant 0 : index
    %c0_25 = arith.constant 0 : index
    %29 = vector.load %arg9[%c0_24, %c0_25] : memref<128x32xf32, #tpu.memory_space<vmem>>, vector<128x32xf32>
    %cst_26 = arith.constant dense<0.000000e+00> : vector<64x32xf32>
    %30 = tpu.matmul %28, %29, %cst_26 {dimension_numbers = #tpu.dot_dimension_numbers<[1], [0], [0], [1], [0, 0, 1, 1], [], []>} : vector<64x128xf32>, vector<128x32xf32>, vector<64x32xf32> -> vector<64x32xf32>
    %c0_27 = arith.constant 0 : index
    %c0_28 = arith.constant 0 : index
    %31 = vector.load %arg10[%c0_27, %c0_28] : memref<128x8xf32, #tpu.memory_space<vmem>>, vector<128x8xf32>
    %cst_29 = arith.constant dense<0.000000e+00> : vector<64x8xf32>
    %32 = tpu.matmul %28, %31, %cst_29 {dimension_numbers = #tpu.dot_dimension_numbers<[1], [0], [0], [1], [0, 0, 1, 1], [], []>} : vector<64x128xf32>, vector<128x8xf32>, vector<64x8xf32> -> vector<64x8xf32>
    %c0_30 = arith.constant 0 : index
    %c0_31 = arith.constant 0 : index
    %33 = vector.load %arg11[%c0_30, %c0_31] : memref<32x128xf32, #tpu.memory_space<vmem>>, vector<32x128xf32>
    %c0_32 = arith.constant 0 : index
    %c0_33 = arith.constant 0 : index
    %34 = vector.load %arg12[%c0_32, %c0_33] : memref<32x2xf32, #tpu.memory_space<vmem>>, vector<32x2xf32>
    %cst_34 = arith.constant 0.000000e+00 : f32
    %35 = vector.broadcast %cst_34 : f32 to vector<64x128xf32>
    %cst_35 = arith.constant 0.000000e+00 : f32
    %36 = vector.broadcast %cst_35 : f32 to vector<64x2xf32>
    %37 = vector.extract_strided_slice %32 {offsets = [0, 0], sizes = [64, 1], strides = [1, 1]} : vector<64x8xf32> to vector<64x1xf32>
    %38 = vector.extract_strided_slice %32 {offsets = [0, 4], sizes = [64, 1], strides = [1, 1]} : vector<64x8xf32> to vector<64x1xf32>
    %39 = tpu.transpose %38, [1, 0] : vector<64x1xf32> -> vector<1x64xf32>
    %40 = vector.broadcast %37 : vector<64x1xf32> to vector<64x64xf32>
    %41 = vector.broadcast %39 : vector<1x64xf32> to vector<64x64xf32>
    %42 = arith.addf %40, %41 : vector<64x64xf32>
    %cst_36 = arith.constant 0.000000e+00 : f32
    %43 = vector.broadcast %cst_36 : f32 to vector<64x64xf32>
    %44 = arith.cmpf ogt, %42, %43 : vector<64x64xf32>
    %cst_37 = arith.constant 2.000000e-01 : f32
    %45 = vector.broadcast %cst_37 : f32 to vector<64x64xf32>
    %46 = arith.mulf %45, %42 : vector<64x64xf32>
    %47 = arith.select %44, %42, %46 : vector<64x64xi1>, vector<64x64xf32>
    %cst_38 = arith.constant dense<0xFF800000> : vector<64xf32>
    %48 = vector.multi_reduction <maximumf>, %47, %cst_38 [1] : vector<64x64xf32> to vector<64xf32>
    %49 = vector.shape_cast %48 : vector<64xf32> to vector<64x1xf32>
    %50 = vector.broadcast %49 : vector<64x1xf32> to vector<64x64xf32>
    %51 = arith.subf %47, %50 : vector<64x64xf32>
    %52 = math.exp %51 : vector<64x64xf32>
    %cst_39 = arith.constant dense<0.000000e+00> : vector<64xf32>
    %53 = vector.multi_reduction <add>, %52, %cst_39 [1] : vector<64x64xf32> to vector<64xf32>
    %54 = vector.shape_cast %53 : vector<64xf32> to vector<64x1xf32>
    %55 = tpu.reciprocal %54 {approx = true} : vector<64x1xf32> -> vector<64x1xf32>
    %56 = vector.broadcast %55 : vector<64x1xf32> to vector<64x64xf32>
    %57 = arith.mulf %52, %56 : vector<64x64xf32>
    %58 = vector.extract_strided_slice %30 {offsets = [0, 0], sizes = [64, 8], strides = [1, 1]} : vector<64x32xf32> to vector<64x8xf32>
    %cst_40 = arith.constant dense<0.000000e+00> : vector<64x8xf32>
    %59 = tpu.matmul %57, %58, %cst_40 {dimension_numbers = #tpu.dot_dimension_numbers<[1], [0], [0], [1], [0, 0, 1, 1], [], []>} : vector<64x64xf32>, vector<64x8xf32>, vector<64x8xf32> -> vector<64x8xf32>
    %cst_41 = arith.constant 0.000000e+00 : f32
    %60 = vector.broadcast %cst_41 : f32 to vector<64x8xf32>
    %61 = arith.cmpf ogt, %59, %60 : vector<64x8xf32>
    %cst_42 = arith.constant 0.000000e+00 : f32
    %62 = vector.broadcast %cst_42 : f32 to vector<64x8xf32>
    %63 = arith.minimumf %59, %62 : vector<64x8xf32>
    %64 = math.exp %63 : vector<64x8xf32>
    %cst_43 = arith.constant 1.000000e+00 : f32
    %65 = vector.broadcast %cst_43 : f32 to vector<64x8xf32>
    %66 = arith.subf %64, %65 : vector<64x8xf32>
    %67 = arith.select %61, %59, %66 : vector<64x8xi1>, vector<64x8xf32>
    %68 = vector.extract_strided_slice %33 {offsets = [0, 0], sizes = [8, 128], strides = [1, 1]} : vector<32x128xf32> to vector<8x128xf32>
    %69 = vector.extract_strided_slice %34 {offsets = [0, 0], sizes = [8, 2], strides = [1, 1]} : vector<32x2xf32> to vector<8x2xf32>
    %cst_44 = arith.constant dense<0.000000e+00> : vector<64x128xf32>
    %70 = tpu.matmul %67, %68, %cst_44 {dimension_numbers = #tpu.dot_dimension_numbers<[1], [0], [0], [1], [0, 0, 1, 1], [], []>} : vector<64x8xf32>, vector<8x128xf32>, vector<64x128xf32> -> vector<64x128xf32>
    %71 = arith.addf %35, %70 : vector<64x128xf32>
    %cst_45 = arith.constant dense<0.000000e+00> : vector<64x2xf32>
    %72 = tpu.matmul %67, %69, %cst_45 {dimension_numbers = #tpu.dot_dimension_numbers<[1], [0], [0], [1], [0, 0, 1, 1], [], []>} : vector<64x8xf32>, vector<8x2xf32>, vector<64x2xf32> -> vector<64x2xf32>
    %73 = arith.addf %36, %72 : vector<64x2xf32>
    %74 = vector.extract_strided_slice %32 {offsets = [0, 1], sizes = [64, 1], strides = [1, 1]} : vector<64x8xf32> to vector<64x1xf32>
    %75 = vector.extract_strided_slice %32 {offsets = [0, 5], sizes = [64, 1], strides = [1, 1]} : vector<64x8xf32> to vector<64x1xf32>
    %76 = tpu.transpose %75, [1, 0] : vector<64x1xf32> -> vector<1x64xf32>
    %77 = vector.broadcast %74 : vector<64x1xf32> to vector<64x64xf32>
    %78 = vector.broadcast %76 : vector<1x64xf32> to vector<64x64xf32>
    %79 = arith.addf %77, %78 : vector<64x64xf32>
    %cst_46 = arith.constant 0.000000e+00 : f32
    %80 = vector.broadcast %cst_46 : f32 to vector<64x64xf32>
    %81 = arith.cmpf ogt, %79, %80 : vector<64x64xf32>
    %cst_47 = arith.constant 2.000000e-01 : f32
    %82 = vector.broadcast %cst_47 : f32 to vector<64x64xf32>
    %83 = arith.mulf %82, %79 : vector<64x64xf32>
    %84 = arith.select %81, %79, %83 : vector<64x64xi1>, vector<64x64xf32>
    %cst_48 = arith.constant dense<0xFF800000> : vector<64xf32>
    %85 = vector.multi_reduction <maximumf>, %84, %cst_48 [1] : vector<64x64xf32> to vector<64xf32>
    %86 = vector.shape_cast %85 : vector<64xf32> to vector<64x1xf32>
    %87 = vector.broadcast %86 : vector<64x1xf32> to vector<64x64xf32>
    %88 = arith.subf %84, %87 : vector<64x64xf32>
    %89 = math.exp %88 : vector<64x64xf32>
    %cst_49 = arith.constant dense<0.000000e+00> : vector<64xf32>
    %90 = vector.multi_reduction <add>, %89, %cst_49 [1] : vector<64x64xf32> to vector<64xf32>
    %91 = vector.shape_cast %90 : vector<64xf32> to vector<64x1xf32>
    %92 = tpu.reciprocal %91 {approx = true} : vector<64x1xf32> -> vector<64x1xf32>
    %93 = vector.broadcast %92 : vector<64x1xf32> to vector<64x64xf32>
    %94 = arith.mulf %89, %93 : vector<64x64xf32>
    %95 = vector.extract_strided_slice %30 {offsets = [0, 8], sizes = [64, 8], strides = [1, 1]} : vector<64x32xf32> to vector<64x8xf32>
    %cst_50 = arith.constant dense<0.000000e+00> : vector<64x8xf32>
    %96 = tpu.matmul %94, %95, %cst_50 {dimension_numbers = #tpu.dot_dimension_numbers<[1], [0], [0], [1], [0, 0, 1, 1], [], []>} : vector<64x64xf32>, vector<64x8xf32>, vector<64x8xf32> -> vector<64x8xf32>
    %cst_51 = arith.constant 0.000000e+00 : f32
    %97 = vector.broadcast %cst_51 : f32 to vector<64x8xf32>
    %98 = arith.cmpf ogt, %96, %97 : vector<64x8xf32>
    %cst_52 = arith.constant 0.000000e+00 : f32
    %99 = vector.broadcast %cst_52 : f32 to vector<64x8xf32>
    %100 = arith.minimumf %96, %99 : vector<64x8xf32>
    %101 = math.exp %100 : vector<64x8xf32>
    %cst_53 = arith.constant 1.000000e+00 : f32
    %102 = vector.broadcast %cst_53 : f32 to vector<64x8xf32>
    %103 = arith.subf %101, %102 : vector<64x8xf32>
    %104 = arith.select %98, %96, %103 : vector<64x8xi1>, vector<64x8xf32>
    %105 = vector.extract_strided_slice %33 {offsets = [8, 0], sizes = [8, 128], strides = [1, 1]} : vector<32x128xf32> to vector<8x128xf32>
    %106 = vector.extract_strided_slice %34 {offsets = [8, 0], sizes = [8, 2], strides = [1, 1]} : vector<32x2xf32> to vector<8x2xf32>
    %cst_54 = arith.constant dense<0.000000e+00> : vector<64x128xf32>
    %107 = tpu.matmul %104, %105, %cst_54 {dimension_numbers = #tpu.dot_dimension_numbers<[1], [0], [0], [1], [0, 0, 1, 1], [], []>} : vector<64x8xf32>, vector<8x128xf32>, vector<64x128xf32> -> vector<64x128xf32>
    %108 = arith.addf %71, %107 : vector<64x128xf32>
    %cst_55 = arith.constant dense<0.000000e+00> : vector<64x2xf32>
    %109 = tpu.matmul %104, %106, %cst_55 {dimension_numbers = #tpu.dot_dimension_numbers<[1], [0], [0], [1], [0, 0, 1, 1], [], []>} : vector<64x8xf32>, vector<8x2xf32>, vector<64x2xf32> -> vector<64x2xf32>
    %110 = arith.addf %73, %109 : vector<64x2xf32>
    %111 = vector.extract_strided_slice %32 {offsets = [0, 2], sizes = [64, 1], strides = [1, 1]} : vector<64x8xf32> to vector<64x1xf32>
    %112 = vector.extract_strided_slice %32 {offsets = [0, 6], sizes = [64, 1], strides = [1, 1]} : vector<64x8xf32> to vector<64x1xf32>
    %113 = tpu.transpose %112, [1, 0] : vector<64x1xf32> -> vector<1x64xf32>
    %114 = vector.broadcast %111 : vector<64x1xf32> to vector<64x64xf32>
    %115 = vector.broadcast %113 : vector<1x64xf32> to vector<64x64xf32>
    %116 = arith.addf %114, %115 : vector<64x64xf32>
    %cst_56 = arith.constant 0.000000e+00 : f32
    %117 = vector.broadcast %cst_56 : f32 to vector<64x64xf32>
    %118 = arith.cmpf ogt, %116, %117 : vector<64x64xf32>
    %cst_57 = arith.constant 2.000000e-01 : f32
    %119 = vector.broadcast %cst_57 : f32 to vector<64x64xf32>
    %120 = arith.mulf %119, %116 : vector<64x64xf32>
    %121 = arith.select %118, %116, %120 : vector<64x64xi1>, vector<64x64xf32>
    %cst_58 = arith.constant dense<0xFF800000> : vector<64xf32>
    %122 = vector.multi_reduction <maximumf>, %121, %cst_58 [1] : vector<64x64xf32> to vector<64xf32>
    %123 = vector.shape_cast %122 : vector<64xf32> to vector<64x1xf32>
    %124 = vector.broadcast %123 : vector<64x1xf32> to vector<64x64xf32>
    %125 = arith.subf %121, %124 : vector<64x64xf32>
    %126 = math.exp %125 : vector<64x64xf32>
    %cst_59 = arith.constant dense<0.000000e+00> : vector<64xf32>
    %127 = vector.multi_reduction <add>, %126, %cst_59 [1] : vector<64x64xf32> to vector<64xf32>
    %128 = vector.shape_cast %127 : vector<64xf32> to vector<64x1xf32>
    %129 = tpu.reciprocal %128 {approx = true} : vector<64x1xf32> -> vector<64x1xf32>
    %130 = vector.broadcast %129 : vector<64x1xf32> to vector<64x64xf32>
    %131 = arith.mulf %126, %130 : vector<64x64xf32>
    %132 = vector.extract_strided_slice %30 {offsets = [0, 16], sizes = [64, 8], strides = [1, 1]} : vector<64x32xf32> to vector<64x8xf32>
    %cst_60 = arith.constant dense<0.000000e+00> : vector<64x8xf32>
    %133 = tpu.matmul %131, %132, %cst_60 {dimension_numbers = #tpu.dot_dimension_numbers<[1], [0], [0], [1], [0, 0, 1, 1], [], []>} : vector<64x64xf32>, vector<64x8xf32>, vector<64x8xf32> -> vector<64x8xf32>
    %cst_61 = arith.constant 0.000000e+00 : f32
    %134 = vector.broadcast %cst_61 : f32 to vector<64x8xf32>
    %135 = arith.cmpf ogt, %133, %134 : vector<64x8xf32>
    %cst_62 = arith.constant 0.000000e+00 : f32
    %136 = vector.broadcast %cst_62 : f32 to vector<64x8xf32>
    %137 = arith.minimumf %133, %136 : vector<64x8xf32>
    %138 = math.exp %137 : vector<64x8xf32>
    %cst_63 = arith.constant 1.000000e+00 : f32
    %139 = vector.broadcast %cst_63 : f32 to vector<64x8xf32>
    %140 = arith.subf %138, %139 : vector<64x8xf32>
    %141 = arith.select %135, %133, %140 : vector<64x8xi1>, vector<64x8xf32>
    %142 = vector.extract_strided_slice %33 {offsets = [16, 0], sizes = [8, 128], strides = [1, 1]} : vector<32x128xf32> to vector<8x128xf32>
    %143 = vector.extract_strided_slice %34 {offsets = [16, 0], sizes = [8, 2], strides = [1, 1]} : vector<32x2xf32> to vector<8x2xf32>
    %cst_64 = arith.constant dense<0.000000e+00> : vector<64x128xf32>
    %144 = tpu.matmul %141, %142, %cst_64 {dimension_numbers = #tpu.dot_dimension_numbers<[1], [0], [0], [1], [0, 0, 1, 1], [], []>} : vector<64x8xf32>, vector<8x128xf32>, vector<64x128xf32> -> vector<64x128xf32>
    %145 = arith.addf %108, %144 : vector<64x128xf32>
    %cst_65 = arith.constant dense<0.000000e+00> : vector<64x2xf32>
    %146 = tpu.matmul %141, %143, %cst_65 {dimension_numbers = #tpu.dot_dimension_numbers<[1], [0], [0], [1], [0, 0, 1, 1], [], []>} : vector<64x8xf32>, vector<8x2xf32>, vector<64x2xf32> -> vector<64x2xf32>
    %147 = arith.addf %110, %146 : vector<64x2xf32>
    %148 = vector.extract_strided_slice %32 {offsets = [0, 3], sizes = [64, 1], strides = [1, 1]} : vector<64x8xf32> to vector<64x1xf32>
    %149 = vector.extract_strided_slice %32 {offsets = [0, 7], sizes = [64, 1], strides = [1, 1]} : vector<64x8xf32> to vector<64x1xf32>
    %150 = tpu.transpose %149, [1, 0] : vector<64x1xf32> -> vector<1x64xf32>
    %151 = vector.broadcast %148 : vector<64x1xf32> to vector<64x64xf32>
    %152 = vector.broadcast %150 : vector<1x64xf32> to vector<64x64xf32>
    %153 = arith.addf %151, %152 : vector<64x64xf32>
    %cst_66 = arith.constant 0.000000e+00 : f32
    %154 = vector.broadcast %cst_66 : f32 to vector<64x64xf32>
    %155 = arith.cmpf ogt, %153, %154 : vector<64x64xf32>
    %cst_67 = arith.constant 2.000000e-01 : f32
    %156 = vector.broadcast %cst_67 : f32 to vector<64x64xf32>
    %157 = arith.mulf %156, %153 : vector<64x64xf32>
    %158 = arith.select %155, %153, %157 : vector<64x64xi1>, vector<64x64xf32>
    %cst_68 = arith.constant dense<0xFF800000> : vector<64xf32>
    %159 = vector.multi_reduction <maximumf>, %158, %cst_68 [1] : vector<64x64xf32> to vector<64xf32>
    %160 = vector.shape_cast %159 : vector<64xf32> to vector<64x1xf32>
    %161 = vector.broadcast %160 : vector<64x1xf32> to vector<64x64xf32>
    %162 = arith.subf %158, %161 : vector<64x64xf32>
    %163 = math.exp %162 : vector<64x64xf32>
    %cst_69 = arith.constant dense<0.000000e+00> : vector<64xf32>
    %164 = vector.multi_reduction <add>, %163, %cst_69 [1] : vector<64x64xf32> to vector<64xf32>
    %165 = vector.shape_cast %164 : vector<64xf32> to vector<64x1xf32>
    %166 = tpu.reciprocal %165 {approx = true} : vector<64x1xf32> -> vector<64x1xf32>
    %167 = vector.broadcast %166 : vector<64x1xf32> to vector<64x64xf32>
    %168 = arith.mulf %163, %167 : vector<64x64xf32>
    %169 = vector.extract_strided_slice %30 {offsets = [0, 24], sizes = [64, 8], strides = [1, 1]} : vector<64x32xf32> to vector<64x8xf32>
    %cst_70 = arith.constant dense<0.000000e+00> : vector<64x8xf32>
    %170 = tpu.matmul %168, %169, %cst_70 {dimension_numbers = #tpu.dot_dimension_numbers<[1], [0], [0], [1], [0, 0, 1, 1], [], []>} : vector<64x64xf32>, vector<64x8xf32>, vector<64x8xf32> -> vector<64x8xf32>
    %cst_71 = arith.constant 0.000000e+00 : f32
    %171 = vector.broadcast %cst_71 : f32 to vector<64x8xf32>
    %172 = arith.cmpf ogt, %170, %171 : vector<64x8xf32>
    %cst_72 = arith.constant 0.000000e+00 : f32
    %173 = vector.broadcast %cst_72 : f32 to vector<64x8xf32>
    %174 = arith.minimumf %170, %173 : vector<64x8xf32>
    %175 = math.exp %174 : vector<64x8xf32>
    %cst_73 = arith.constant 1.000000e+00 : f32
    %176 = vector.broadcast %cst_73 : f32 to vector<64x8xf32>
    %177 = arith.subf %175, %176 : vector<64x8xf32>
    %178 = arith.select %172, %170, %177 : vector<64x8xi1>, vector<64x8xf32>
    %179 = vector.extract_strided_slice %33 {offsets = [24, 0], sizes = [8, 128], strides = [1, 1]} : vector<32x128xf32> to vector<8x128xf32>
    %180 = vector.extract_strided_slice %34 {offsets = [24, 0], sizes = [8, 2], strides = [1, 1]} : vector<32x2xf32> to vector<8x2xf32>
    %cst_74 = arith.constant dense<0.000000e+00> : vector<64x128xf32>
    %181 = tpu.matmul %178, %179, %cst_74 {dimension_numbers = #tpu.dot_dimension_numbers<[1], [0], [0], [1], [0, 0, 1, 1], [], []>} : vector<64x8xf32>, vector<8x128xf32>, vector<64x128xf32> -> vector<64x128xf32>
    %182 = arith.addf %145, %181 : vector<64x128xf32>
    %cst_75 = arith.constant dense<0.000000e+00> : vector<64x2xf32>
    %183 = tpu.matmul %178, %180, %cst_75 {dimension_numbers = #tpu.dot_dimension_numbers<[1], [0], [0], [1], [0, 0, 1, 1], [], []>} : vector<64x8xf32>, vector<8x2xf32>, vector<64x2xf32> -> vector<64x2xf32>
    %184 = arith.addf %147, %183 : vector<64x2xf32>
    %185 = vector.extract_strided_slice %184 {offsets = [0, 0], sizes = [64, 1], strides = [1, 1]} : vector<64x2xf32> to vector<64x1xf32>
    %186 = vector.extract_strided_slice %184 {offsets = [0, 1], sizes = [64, 1], strides = [1, 1]} : vector<64x2xf32> to vector<64x1xf32>
    %187 = tpu.transpose %186, [1, 0] : vector<64x1xf32> -> vector<1x64xf32>
    %188 = vector.broadcast %185 : vector<64x1xf32> to vector<64x64xf32>
    %189 = vector.broadcast %187 : vector<1x64xf32> to vector<64x64xf32>
    %190 = arith.addf %188, %189 : vector<64x64xf32>
    %cst_76 = arith.constant 0.000000e+00 : f32
    %191 = vector.broadcast %cst_76 : f32 to vector<64x64xf32>
    %192 = arith.cmpf ogt, %190, %191 : vector<64x64xf32>
    %cst_77 = arith.constant 2.000000e-01 : f32
    %193 = vector.broadcast %cst_77 : f32 to vector<64x64xf32>
    %194 = arith.mulf %193, %190 : vector<64x64xf32>
    %195 = arith.select %192, %190, %194 : vector<64x64xi1>, vector<64x64xf32>
    %cst_78 = arith.constant dense<0xFF800000> : vector<64xf32>
    %196 = vector.multi_reduction <maximumf>, %195, %cst_78 [1] : vector<64x64xf32> to vector<64xf32>
    %197 = vector.shape_cast %196 : vector<64xf32> to vector<64x1xf32>
    %198 = vector.broadcast %197 : vector<64x1xf32> to vector<64x64xf32>
    %199 = arith.subf %195, %198 : vector<64x64xf32>
    %200 = math.exp %199 : vector<64x64xf32>
    %cst_79 = arith.constant dense<0.000000e+00> : vector<64xf32>
    %201 = vector.multi_reduction <add>, %200, %cst_79 [1] : vector<64x64xf32> to vector<64xf32>
    %202 = vector.shape_cast %201 : vector<64xf32> to vector<64x1xf32>
    %203 = tpu.reciprocal %202 {approx = true} : vector<64x1xf32> -> vector<64x1xf32>
    %204 = vector.broadcast %203 : vector<64x1xf32> to vector<64x64xf32>
    %205 = arith.mulf %200, %204 : vector<64x64xf32>
    %cst_80 = arith.constant dense<0.000000e+00> : vector<64x128xf32>
    %206 = tpu.matmul %205, %182, %cst_80 {dimension_numbers = #tpu.dot_dimension_numbers<[1], [0], [0], [1], [0, 0, 1, 1], [], []>} : vector<64x64xf32>, vector<64x128xf32>, vector<64x128xf32> -> vector<64x128xf32>
    %cst_81 = arith.constant 0.000000e+00 : f32
    %207 = vector.broadcast %cst_81 : f32 to vector<64x128xf32>
    %208 = arith.cmpf ogt, %206, %207 : vector<64x128xf32>
    %cst_82 = arith.constant 0.000000e+00 : f32
    %209 = vector.broadcast %cst_82 : f32 to vector<64x128xf32>
    %210 = arith.minimumf %206, %209 : vector<64x128xf32>
    %211 = math.exp %210 : vector<64x128xf32>
    %cst_83 = arith.constant 1.000000e+00 : f32
    %212 = vector.broadcast %cst_83 : f32 to vector<64x128xf32>
    %213 = arith.subf %211, %212 : vector<64x128xf32>
    %214 = arith.select %208, %206, %213 : vector<64x128xi1>, vector<64x128xf32>
    %215 = tpu.iota {dimensions = array<i32: 1>} : vector<64x128xi32>
    %c7_i32 = arith.constant 7 : i32
    %216 = vector.broadcast %c7_i32 : i32 to vector<64x128xi32>
    %217 = arith.cmpi slt, %215, %216 : vector<64x128xi32>
    %cst_84 = arith.constant -1.000000e+30 : f32
    %218 = vector.broadcast %cst_84 : f32 to vector<64x128xf32>
    %219 = arith.select %217, %214, %218 : vector<64x128xi1>, vector<64x128xf32>
    %cst_85 = arith.constant dense<0xFF800000> : vector<64xf32>
    %220 = vector.multi_reduction <maximumf>, %219, %cst_85 [1] : vector<64x128xf32> to vector<64xf32>
    %221 = vector.shape_cast %220 : vector<64xf32> to vector<64x1xf32>
    %222 = vector.broadcast %221 : vector<64x1xf32> to vector<64x128xf32>
    %223 = arith.subf %219, %222 : vector<64x128xf32>
    %224 = math.exp %223 : vector<64x128xf32>
    %cst_86 = arith.constant dense<0.000000e+00> : vector<64xf32>
    %225 = vector.multi_reduction <add>, %224, %cst_86 [1] : vector<64x128xf32> to vector<64xf32>
    %226 = vector.shape_cast %225 : vector<64xf32> to vector<64x1xf32>
    %227 = math.log %226 : vector<64x1xf32>
    %228 = vector.broadcast %227 : vector<64x1xf32> to vector<64x128xf32>
    %229 = arith.subf %223, %228 : vector<64x128xf32>
    %c0_87 = arith.constant 0 : index
    %c0_88 = arith.constant 0 : index
    %230 = vector.load %arg13[%c0_87, %c0_88] : memref<64x128xf32, #tpu.memory_space<vmem>>, vector<64x128xf32>
    tpu.vector_store %arg13[%c0_87, %c0_88], %229 {strides = array<i32>} : memref<64x128xf32, #tpu.memory_space<vmem>>, vector<64x128xf32>,
    return
  }
}

</mosaic_0001>

<llo_original>
// kernel: gat_forward.1
$region0: #{gat_forward.1}
  #allocation0 [shape = 'u32[]', space=smem, size = 0x4, offset = 0x4, fixed_abs, tag = 'smem constant byte address 0x4 - core index']
  #allocation1 [shape = 'u32[144,128]{1,0:T(1,128)}', space=vmem, size = 0x12000, scoped, tag = 'internal scratch']
  %s0 = inlined_call_operand.vmem [shape: f32[64,27], index: 0, kind: input, shape index: {}]
  %s1 = inlined_call_operand.vmem [shape: f32[27,576], index: 1, kind: input, shape index: {}]
  %s2 = inlined_call_operand.vmem [shape: f32[1,576], index: 2, kind: input, shape index: {}]
  %s3 = inlined_call_operand.vmem [shape: f32[576,192], index: 3, kind: input, shape index: {}]
  %s4 = inlined_call_operand.vmem [shape: f32[1,192], index: 4, kind: input, shape index: {}]
  %s5 = inlined_call_operand.vmem [shape: f32[192,128], index: 5, kind: input, shape index: {}]
  %s6 = inlined_call_operand.vmem [shape: f32[1,128], index: 6, kind: input, shape index: {}]
  %s7 = inlined_call_operand.vmem [shape: f32[128,128], index: 7, kind: input, shape index: {}]
  %s8 = inlined_call_operand.vmem [shape: f32[1,128], index: 8, kind: input, shape index: {}]
  %s9 = inlined_call_operand.vmem [shape: f32[128,32], index: 9, kind: input, shape index: {}]
  %s10 = inlined_call_operand.vmem [shape: f32[128,8], index: 10, kind: input, shape index: {}]
  %s11 = inlined_call_operand.vmem [shape: f32[32,128], index: 11, kind: input, shape index: {}]
  %s12 = inlined_call_operand.vmem [shape: f32[32,2], index: 12, kind: input, shape index: {}]
  %s13 = inlined_call_operand.vmem [shape: f32[64,128], index: 13, kind: output, shape index: {}]
  %s14 = sld [smem:[#allocation0]]
  $region62: #{gat_forward.1} parent=0
    _
  %s16 = ssub.s32 1, %s14
  %s17 = scalar_select 0, %s16, %s14
  // Predicated region
  $region2: #{gat_forward.1} parent=0 // pred_check
    _
  $region3: #{gat_forward.1} parent=0 // pred_check_branch
    %19 = sbr.rel (0) target = $region5
  $region4: #{gat_forward.1} parent=0 // pred_region
    _
  $region5: #{gat_forward.1} parent=0 // pred_fallthru
    _
  // Predicated region
  $region6: #{gat_forward.1} parent=0 // pred_check
    _
  $region7: #{gat_forward.1} parent=0 // pred_check_branch
    %21 = sbr.rel (0) target = $region9
  $region8: #{gat_forward.1} parent=0 // pred_region
    _
  $region9: #{gat_forward.1} parent=0 // pred_fallthru
    _
  // Predicated region
  $region10: #{gat_forward.1} parent=0 // pred_check
    _
  $region11: #{gat_forward.1} parent=0 // pred_check_branch
    %23 = sbr.rel (0) target = $region13
  $region12: #{gat_forward.1} parent=0 // pred_region
    _
  $region13: #{gat_forward.1} parent=0 // pred_fallthru
    _
  // Predicated region
  $region14: #{gat_forward.1} parent=0 // pred_check
    _
  $region15: #{gat_forward.1} parent=0 // pred_check_branch
    %25 = sbr.rel (0) target = $region17
  $region16: #{gat_forward.1} parent=0 // pred_region
    _
  $region17: #{gat_forward.1} parent=0 // pred_fallthru
    _
  // Predicated region
  $region18: #{gat_forward.1} parent=0 // pred_check
    _
  $region19: #{gat_forward.1} parent=0 // pred_check_branch
    %27 = sbr.rel (0) target = $region21
  $region20: #{gat_forward.1} parent=0 // pred_region
    _
  $region21: #{gat_forward.1} parent=0 // pred_fallthru
    _
  // Predicated region
  $region22: #{gat_forward.1} parent=0 // pred_check
    _
  $region23: #{gat_forward.1} parent=0 // pred_check_branch
    %29 = sbr.rel (0) target = $region25
  $region24: #{gat_forward.1} parent=0 // pred_region
    _
  $region25: #{gat_forward.1} parent=0 // pred_fallthru
    _
  // Predicated region
  $region26: #{gat_forward.1} parent=0 // pred_check
    _
  $region27: #{gat_forward.1} parent=0 // pred_check_branch
    %31 = sbr.rel (0) target = $region29
  $region28: #{gat_forward.1} parent=0 // pred_region
    _
  $region29: #{gat_forward.1} parent=0 // pred_fallthru
    _
  // Predicated region
  $region30: #{gat_forward.1} parent=0 // pred_check
    _
  $region31: #{gat_forward.1} parent=0 // pred_check_branch
    %33 = sbr.rel (0) target = $region33
  $region32: #{gat_forward.1} parent=0 // pred_region
    _
  $region33: #{gat_forward.1} parent=0 // pred_fallthru
    _
  // Predicated region
  $region34: #{gat_forward.1} parent=0 // pred_check
    _
  $region35: #{gat_forward.1} parent=0 // pred_check_branch
    %35 = sbr.rel (0) target = $region37
  $region36: #{gat_forward.1} parent=0 // pred_region
    _
  $region37: #{gat_forward.1} parent=0 // pred_fallthru
    _
  // Predicated region
  $region38: #{gat_forward.1} parent=0 // pred_check
    _
  $region39: #{gat_forward.1} parent=0 // pred_check_branch
    %37 = sbr.rel (0) target = $region41
  $region40: #{gat_forward.1} parent=0 // pred_region
    _
  $region41: #{gat_forward.1} parent=0 // pred_fallthru
    _
  // Predicated region
  $region42: #{gat_forward.1} parent=0 // pred_check
    _
  $region43: #{gat_forward.1} parent=0 // pred_check_branch
    %39 = sbr.rel (0) target = $region45
  $region44: #{gat_forward.1} parent=0 // pred_region
    _
  $region45: #{gat_forward.1} parent=0 // pred_fallthru
    _
  // Predicated region
  $region46: #{gat_forward.1} parent=0 // pred_check
    _
  $region47: #{gat_forward.1} parent=0 // pred_check_branch
    %41 = sbr.rel (0) target = $region49
  $region48: #{gat_forward.1} parent=0 // pred_region
    _
  $region49: #{gat_forward.1} parent=0 // pred_fallthru
    _
  // Predicated region
  $region50: #{gat_forward.1} parent=0 // pred_check
    _
  $region51: #{gat_forward.1} parent=0 // pred_check_branch
    %43 = sbr.rel (0) target = $region53
  $region52: #{gat_forward.1} parent=0 // pred_region
    _
  $region53: #{gat_forward.1} parent=0 // pred_fallthru
    _
  %v44 = vld [vmem:[%s0] sm:$0xff]
  %v45 = vld [vmem:[%s0 + $0x8] sm:$0xff]
  %v46 = vld [vmem:[%s0 + $0x10] sm:$0xff]
  %v47 = vld [vmem:[%s0 + $0x18] sm:$0xff]
  %v48 = vld [vmem:[%s0 + $0x20] sm:$0xff]
  %v49 = vld [vmem:[%s0 + $0x28] sm:$0xff]
  %v50 = vld [vmem:[%s0 + $0x30] sm:$0xff]
  %v51 = vld [vmem:[%s0 + $0x38] sm:$0xff]
  %v52 = vld [vmem:[%s1] sm:$0xff]
  %v53 = vld [vmem:[%s1 + $0x8] sm:$0xff]
  %v54 = vld [vmem:[%s1 + $0x10] sm:$0xff]
  %v55 = vld [vmem:[%s1 + $0x18] sm:$0xff]
  %v56 = vld [vmem:[%s1 + $0x20] sm:$0xff]
  %v57 = vld [vmem:[%s1 + $0x28] sm:$0xff]
  %v58 = vld [vmem:[%s1 + $0x30] sm:$0xff]
  %v59 = vld [vmem:[%s1 + $0x38] sm:$0xff]
  %v60 = vld [vmem:[%s1 + $0x40] sm:$0xff]
  %v61 = vld [vmem:[%s1 + $0x48] sm:$0xff]
  %v62 = vld [vmem:[%s1 + $0x50] sm:$0xff]
  %v63 = vld [vmem:[%s1 + $0x58] sm:$0xff]
  %v64 = vld [vmem:[%s1 + $0x60] sm:$0xff]
  %v65 = vld [vmem:[%s1 + $0x68] sm:$0xff]
  %v66 = vld [vmem:[%s1 + $0x70] sm:$0xff]
  %v67 = vld [vmem:[%s1 + $0x78] sm:$0x7]
  %v68 = vld [vmem:[%s1 + $0x80] sm:$0x7]
  %v69 = vld [vmem:[%s1 + $0x88] sm:$0x7]
  %v70 = vld [vmem:[%s1 + $0x90] sm:$0x7]
  %v71 = vld [vmem:[%s1 + $0x98] sm:$0x7]
  %v72 = vld [vmem:[%s2] sm:$0x1f]
  %v74 = vlaneseq
  %v75 = vshrl.u32 %v74, 7
  %v76 = vsub.s32 0, %v75
  %v77 = vrot.slane %v72, %v76
  %v78 = vlaneseq
  %v79 = vshrl.u32 %v78, 7
  %v80 = vsub.s32 1, %v79
  %v81 = vrot.slane %v72, %v80
  %v82 = vlaneseq
  %v83 = vshrl.u32 %v82, 7
  %v84 = vsub.s32 2, %v83
  %v85 = vrot.slane %v72, %v84
  %v86 = vlaneseq
  %v87 = vshrl.u32 %v86, 7
  %v88 = vsub.s32 3, %v87
  %v89 = vrot.slane %v72, %v88
  %v90 = vlaneseq
  %v91 = vshrl.u32 %v90, 7
  %v92 = vsub.s32 4, %v91
  %v93 = vrot.slane %v72, %v92
  %vm99 = vcmask 220160
  %v101 = vsel %vm99, %v44, 0
  %v104 = vsel %vm99, %v45, 0
  %v107 = vsel %vm99, %v46, 0
  %v110 = vsel %vm99, %v47, 0
  %v113 = vsel %vm99, %v48, 0
  %v116 = vsel %vm99, %v49, 0
  %v119 = vsel %vm99, %v50, 0
  %v122 = vsel %vm99, %v51, 0
  %vm124 = vcmask 1042432
  %v126 = vsel %vm124, %v67, 0
  %v129 = vsel %vm124, %v68, 0
  %v132 = vsel %vm124, %v69, 0
  %v135 = vsel %vm124, %v70, 0
  %v138 = vsel %vm124, %v71, 0
  %140 = vmatprep.subr.mxu0 0.0
  %141 = vmatpush1.msra.mxu0 0.0
  %142 = vmatprep.subr.mxu0 0.0
  %143 = vmatpush1.msra.mxu0 0.0
  %144 = vmatprep.subr.mxu0 0.0
  %145 = vmatpush1.msra.mxu0 0.0
  %146 = vmatprep.subr.mxu0 0.0
  %147 = vmatpush1.msra.mxu0 0.0
  %148 = vmatprep.subr.mxu0 0.0
  %149 = vmatpush1.msra.mxu0 0.0
  %150 = vmatprep.subr.mxu0 0.0
  %151 = vmatpush1.msra.mxu0 0.0
  %152 = vmatprep.subr.mxu0 0.0
  %153 = vmatpush1.msra.mxu0 0.0
  %154 = vmatprep.subr.mxu0 0.0
  %155 = vmatpush1.msra.mxu0 0.0
  %156 = vmatprep.subr.mxu0 0.0
  %157 = vmatpush1.msra.mxu0 0.0
  %158 = vmatprep.subr.mxu0 0.0
  %159 = vmatpush1.msra.mxu0 0.0
  %160 = vmatprep.subr.mxu0 0.0
  %161 = vmatpush1.msra.mxu0 0.0
  %162 = vmatprep.subr.mxu0 0.0
  %163 = vmatpush1.msra.mxu0 0.0
  %164 = vmatprep.subr.mxu0 %v129
  %165 = vmatpush1.msra.mxu0 %v126
  %166 = vmatprep.subr.mxu0 %v63
  %167 = vmatpush1.msra.mxu0 %v62
  %168 = vmatprep.subr.mxu0 %v58
  %169 = vmatpush1.msra.mxu0 %v57
  %170 = vmatprep.subr.mxu0 %v53
  %171 = vmatpush1.msra.mxu0 %v52
  %172 = vmatprep.subr.mxu0 0.0
  %173 = vmatpush2.msra.mxu0 0.0
  %174 = vmatprep.subr.mxu0 0.0
  %175 = vmatpush2.msra.mxu0 0.0
  %176 = vmatprep.subr.mxu0 0.0
  %177 = vmatpush2.msra.mxu0 0.0
  %178 = vmatprep.subr.mxu0 0.0
  %179 = vmatpush2.msra.mxu0 0.0
  %180 = vmatprep.subr.mxu0 0.0
  %181 = vmatpush2.msra.mxu0 0.0
  %182 = vmatprep.subr.mxu0 0.0
  %183 = vmatpush2.msra.mxu0 0.0
  %184 = vmatprep.subr.mxu0 0.0
  %185 = vmatpush2.msra.mxu0 0.0
  %186 = vmatprep.subr.mxu0 0.0
  %187 = vmatpush2.msra.mxu0 0.0
  %188 = vmatprep.subr.mxu0 0.0
  %189 = vmatpush2.msra.mxu0 0.0
  %190 = vmatprep.subr.mxu0 0.0
  %191 = vmatpush2.msra.mxu0 0.0
  %192 = vmatprep.subr.mxu0 0.0
  %193 = vmatpush2.msra.mxu0 0.0
  %194 = vmatprep.subr.mxu0 0.0
  %195 = vmatpush2.msra.mxu0 0.0
  %196 = vmatprep.subr.mxu0 0.0
  %197 = vmatpush2.msra.mxu0 0.0
  %198 = vmatprep.subr.mxu0 0.0
  %199 = vmatpush2.msra.mxu0 0.0
  %200 = vmatprep.subr.mxu0 0.0
  %201 = vmatpush2.msra.mxu0 0.0
  %202 = vmatprep.subr.mxu0 0.0
  %203 = vmatpush2.msra.mxu0 0.0
  %204 = vmatprep.mubr.f32.mxu0 0.0
  %205 = vmatmul.mubr.f32.gmra.mxu0 %v101
  %v206 = vpop.f32.mrf.mxu0
  %v207 = vadd.f32 %v77, %v206
  %v208 = vpop.f32.mrf.mxu0
  %v209 = vadd.f32 %v81, %v208
  %210 = vmatprep.mubr.f32.mxu0 0.0
  %211 = vmatmul.mubr.f32.gmra.mxu0 %v104
  %v212 = vpop.f32.mrf.mxu0
  %v213 = vadd.f32 %v77, %v212
  %v214 = vpop.f32.mrf.mxu0
  %v215 = vadd.f32 %v81, %v214
  %216 = vmatprep.mubr.f32.mxu0 0.0
  %217 = vmatmul.mubr.f32.gmra.mxu0 %v107
  %v218 = vpop.f32.mrf.mxu0
  %v219 = vadd.f32 %v77, %v218
  %v220 = vpop.f32.mrf.mxu0
  %v221 = vadd.f32 %v81, %v220
  %222 = vmatprep.mubr.f32.mxu0 0.0
  %223 = vmatmul.mubr.f32.gmra.mxu0 %v110
  %v224 = vpop.f32.mrf.mxu0
  %v225 = vadd.f32 %v77, %v224
  %v226 = vpop.f32.mrf.mxu0
  %v227 = vadd.f32 %v81, %v226
  %228 = vmatprep.mubr.f32.mxu0 0.0
  %229 = vmatmul.mubr.f32.gmra.mxu0 %v113
  %v230 = vpop.f32.mrf.mxu0
  %v231 = vadd.f32 %v77, %v230
  %v232 = vpop.f32.mrf.mxu0
  %v233 = vadd.f32 %v81, %v232
  %234 = vmatprep.mubr.f32.mxu0 0.0
  %235 = vmatmul.mubr.f32.gmra.mxu0 %v116
  %v236 = vpop.f32.mrf.mxu0
  %v237 = vadd.f32 %v77, %v236
  %v238 = vpop.f32.mrf.mxu0
  %v239 = vadd.f32 %v81, %v238
  %240 = vmatprep.mubr.f32.mxu0 0.0
  %241 = vmatmul.mubr.f32.gmra.mxu0 %v119
  %v242 = vpop.f32.mrf.mxu0
  %v243 = vadd.f32 %v77, %v242
  %v244 = vpop.f32.mrf.mxu0
  %v245 = vadd.f32 %v81, %v244
  %246 = vmatprep.mubr.f32.mxu0 0.0
  %247 = vmatmul.mubr.f32.gmra.mxu0 %v122
  %v248 = vpop.f32.mrf.mxu0
  %v249 = vadd.f32 %v77, %v248
  %v250 = vpop.f32.mrf.mxu0
  %v251 = vadd.f32 %v81, %v250
  %252 = vdwg.mxu0
  %253 = vmatprep.subr.mxu0 0.0
  %254 = vmatpush1.msra.mxu0 0.0
  %255 = vmatprep.subr.mxu0 0.0
  %256 = vmatpush1.msra.mxu0 0.0
  %257 = vmatprep.subr.mxu0 0.0
  %258 = vmatpush1.msra.mxu0 0.0
  %259 = vmatprep.subr.mxu0 0.0
  %260 = vmatpush1.msra.mxu0 0.0
  %261 = vmatprep.subr.mxu0 0.0
  %262 = vmatpush1.msra.mxu0 0.0
  %263 = vmatprep.subr.mxu0 0.0
  %264 = vmatpush1.msra.mxu0 0.0
  %265 = vmatprep.subr.mxu0 0.0
  %266 = vmatpush1.msra.mxu0 0.0
  %267 = vmatprep.subr.mxu0 0.0
  %268 = vmatpush1.msra.mxu0 0.0
  %269 = vmatprep.subr.mxu0 0.0
  %270 = vmatpush1.msra.mxu0 0.0
  %271 = vmatprep.subr.mxu0 0.0
  %272 = vmatpush1.msra.mxu0 0.0
  %273 = vmatprep.subr.mxu0 0.0
  %274 = vmatpush1.msra.mxu0 0.0
  %275 = vmatprep.subr.mxu0 0.0
  %276 = vmatpush1.msra.mxu0 0.0
  %277 = vmatprep.subr.mxu0 %v135
  %278 = vmatpush1.msra.mxu0 %v132
  %279 = vmatprep.subr.mxu0 %v65
  %280 = vmatpush1.msra.mxu0 %v64
  %281 = vmatprep.subr.mxu0 %v60
  %282 = vmatpush1.msra.mxu0 %v59
  %283 = vmatprep.subr.mxu0 %v55
  %284 = vmatpush1.msra.mxu0 %v54
  %285 = vmatprep.subr.mxu0 0.0
  %286 = vmatpush2.msra.mxu0 0.0
  %287 = vmatprep.subr.mxu0 0.0
  %288 = vmatpush2.msra.mxu0 0.0
  %289 = vmatprep.subr.mxu0 0.0
  %290 = vmatpush2.msra.mxu0 0.0
  %291 = vmatprep.subr.mxu0 0.0
  %292 = vmatpush2.msra.mxu0 0.0
  %293 = vmatprep.subr.mxu0 0.0
  %294 = vmatpush2.msra.mxu0 0.0
  %295 = vmatprep.subr.mxu0 0.0
  %296 = vmatpush2.msra.mxu0 0.0
  %297 = vmatprep.subr.mxu0 0.0
  %298 = vmatpush2.msra.mxu0 0.0
  %299 = vmatprep.subr.mxu0 0.0
  %300 = vmatpush2.msra.mxu0 0.0
  %301 = vmatprep.subr.mxu0 0.0
  %302 = vmatpush2.msra.mxu0 0.0
  %303 = vmatprep.subr.mxu0 0.0
  %304 = vmatpush2.msra.mxu0 0.0
  %305 = vmatprep.subr.mxu0 0.0
  %306 = vmatpush2.msra.mxu0 0.0
  %307 = vmatprep.subr.mxu0 0.0
  %308 = vmatpush2.msra.mxu0 0.0
  %309 = vmatprep.subr.mxu0 0.0
  %310 = vmatpush2.msra.mxu0 0.0
  %311 = vmatprep.subr.mxu0 0.0
  %312 = vmatpush2.msra.mxu0 0.0
  %313 = vmatprep.subr.mxu0 0.0
  %314 = vmatpush2.msra.mxu0 0.0
  %315 = vmatprep.subr.mxu0 0.0
  %316 = vmatpush2.msra.mxu0 0.0
  %317 = vmatprep.mubr.f32.mxu0 0.0
  %318 = vmatmul.mubr.f32.gmra.mxu0 %v101
  %v319 = vpop.f32.mrf.mxu0
  %v320 = vadd.f32 %v85, %v319
  %v321 = vpop.f32.mrf.mxu0
  %v322 = vadd.f32 %v89, %v321
  %323 = vmatprep.mubr.f32.mxu0 0.0
  %324 = vmatmul.mubr.f32.gmra.mxu0 %v104
  %v325 = vpop.f32.mrf.mxu0
  %v326 = vadd.f32 %v85, %v325
  %v327 = vpop.f32.mrf.mxu0
  %v328 = vadd.f32 %v89, %v327
  %329 = vmatprep.mubr.f32.mxu0 0.0
  %330 = vmatmul.mubr.f32.gmra.mxu0 %v107
  %v331 = vpop.f32.mrf.mxu0
  %v332 = vadd.f32 %v85, %v331
  %v333 = vpop.f32.mrf.mxu0
  %v334 = vadd.f32 %v89, %v333
  %335 = vmatprep.mubr.f32.mxu0 0.0
  %336 = vmatmul.mubr.f32.gmra.mxu0 %v110
  %v337 = vpop.f32.mrf.mxu0
  %v338 = vadd.f32 %v85, %v337
  %v339 = vpop.f32.mrf.mxu0
  %v340 = vadd.f32 %v89, %v339
  %341 = vmatprep.mubr.f32.mxu0 0.0
  %342 = vmatmul.mubr.f32.gmra.mxu0 %v113
  %v343 = vpop.f32.mrf.mxu0
  %v344 = vadd.f32 %v85, %v343
  %v345 = vpop.f32.mrf.mxu0
  %v346 = vadd.f32 %v89, %v345
  %347 = vmatprep.mubr.f32.mxu0 0.0
  %348 = vmatmul.mubr.f32.gmra.mxu0 %v116
  %v349 = vpop.f32.mrf.mxu0
  %v350 = vadd.f32 %v85, %v349
  %v351 = vpop.f32.mrf.mxu0
  %v352 = vadd.f32 %v89, %v351
  %353 = vmatprep.mubr.f32.mxu0 0.0
  %354 = vmatmul.mubr.f32.gmra.mxu0 %v119
  %v355 = vpop.f32.mrf.mxu0
  %v356 = vadd.f32 %v85, %v355
  %v357 = vpop.f32.mrf.mxu0
  %v358 = vadd.f32 %v89, %v357
  %359 = vmatprep.mubr.f32.mxu0 0.0
  %360 = vmatmul.mubr.f32.gmra.mxu0 %v122
  %v361 = vpop.f32.mrf.mxu0
  %v362 = vadd.f32 %v85, %v361
  %v363 = vpop.f32.mrf.mxu0
  %v364 = vadd.f32 %v89, %v363
  %365 = vdwg.mxu0
  %366 = vmatprep.subr.mxu0 0.0
  %367 = vmatpush1.msra.mxu0 0.0
  %368 = vmatprep.subr.mxu0 0.0
  %369 = vmatpush1.msra.mxu0 0.0
  %370 = vmatprep.subr.mxu0 0.0
  %371 = vmatpush1.msra.mxu0 0.0
  %372 = vmatprep.subr.mxu0 0.0
  %373 = vmatpush1.msra.mxu0 0.0
  %374 = vmatprep.subr.mxu0 0.0
  %375 = vmatpush1.msra.mxu0 0.0
  %376 = vmatprep.subr.mxu0 0.0
  %377 = vmatpush1.msra.mxu0 0.0
  %378 = vmatprep.subr.mxu0 0.0
  %379 = vmatpush1.msra.mxu0 0.0
  %380 = vmatprep.subr.mxu0 0.0
  %381 = vmatpush1.msra.mxu0 0.0
  %382 = vmatprep.subr.mxu0 0.0
  %383 = vmatpush1.msra.mxu0 0.0
  %384 = vmatprep.subr.mxu0 0.0
  %385 = vmatpush1.msra.mxu0 0.0
  %386 = vmatprep.subr.mxu0 0.0
  %387 = vmatpush1.msra.mxu0 0.0
  %388 = vmatprep.subr.mxu0 0.0
  %389 = vmatpush1.msra.mxu0 0.0
  %390 = vmatprep.subr.mxu0 0.0
  %391 = vmatpush1.msra.mxu0 %v138
  %392 = vmatprep.subr.mxu0 0.0
  %393 = vmatpush1.msra.mxu0 %v66
  %394 = vmatprep.subr.mxu0 0.0
  %395 = vmatpush1.msra.mxu0 %v61
  %396 = vmatprep.subr.mxu0 0.0
  %397 = vmatpush1.msra.mxu0 %v56
  %398 = vmatprep.subr.mxu0 0.0
  %399 = vmatpush2.msra.mxu0 0.0
  %400 = vmatprep.subr.mxu0 0.0
  %401 = vmatpush2.msra.mxu0 0.0
  %402 = vmatprep.subr.mxu0 0.0
  %403 = vmatpush2.msra.mxu0 0.0
  %404 = vmatprep.subr.mxu0 0.0
  %405 = vmatpush2.msra.mxu0 0.0
  %406 = vmatprep.subr.mxu0 0.0
  %407 = vmatpush2.msra.mxu0 0.0
  %408 = vmatprep.subr.mxu0 0.0
  %409 = vmatpush2.msra.mxu0 0.0
  %410 = vmatprep.subr.mxu0 0.0
  %411 = vmatpush2.msra.mxu0 0.0
  %412 = vmatprep.subr.mxu0 0.0
  %413 = vmatpush2.msra.mxu0 0.0
  %414 = vmatprep.subr.mxu0 0.0
  %415 = vmatpush2.msra.mxu0 0.0
  %416 = vmatprep.subr.mxu0 0.0
  %417 = vmatpush2.msra.mxu0 0.0
  %418 = vmatprep.subr.mxu0 0.0
  %419 = vmatpush2.msra.mxu0 0.0
  %420 = vmatprep.subr.mxu0 0.0
  %421 = vmatpush2.msra.mxu0 0.0
  %422 = vmatprep.subr.mxu0 0.0
  %423 = vmatpush2.msra.mxu0 0.0
  %424 = vmatprep.subr.mxu0 0.0
  %425 = vmatpush2.msra.mxu0 0.0
  %426 = vmatprep.subr.mxu0 0.0
  %427 = vmatpush2.msra.mxu0 0.0
  %428 = vmatprep.subr.mxu0 0.0
  %429 = vmatpush2.msra.mxu0 0.0
  %430 = vmatprep.mubr.f32.mxu0 0.0
  %431 = vmatmul.mubr.f32.gmra.mxu0 %v101
  %v432 = vpop.f32.mrf.mxu0
  %v433 = vadd.f32 %v93, %v432
  %v434 = vpop.f32.mrf.mxu0
  %435 = vmatprep.mubr.f32.mxu0 0.0
  %436 = vmatmul.mubr.f32.gmra.mxu0 %v104
  %v437 = vpop.f32.mrf.mxu0
  %v438 = vadd.f32 %v93, %v437
  %v439 = vpop.f32.mrf.mxu0
  %440 = vmatprep.mubr.f32.mxu0 0.0
  %441 = vmatmul.mubr.f32.gmra.mxu0 %v107
  %v442 = vpop.f32.mrf.mxu0
  %v443 = vadd.f32 %v93, %v442
  %v444 = vpop.f32.mrf.mxu0
  %445 = vmatprep.mubr.f32.mxu0 0.0
  %446 = vmatmul.mubr.f32.gmra.mxu0 %v110
  %v447 = vpop.f32.mrf.mxu0
  %v448 = vadd.f32 %v93, %v447
  %v449 = vpop.f32.mrf.mxu0
  %450 = vmatprep.mubr.f32.mxu0 0.0
  %451 = vmatmul.mubr.f32.gmra.mxu0 %v113
  %v452 = vpop.f32.mrf.mxu0
  %v453 = vadd.f32 %v93, %v452
  %v454 = vpop.f32.mrf.mxu0
  %455 = vmatprep.mubr.f32.mxu0 0.0
  %456 = vmatmul.mubr.f32.gmra.mxu0 %v116
  %v457 = vpop.f32.mrf.mxu0
  %v458 = vadd.f32 %v93, %v457
  %v459 = vpop.f32.mrf.mxu0
  %460 = vmatprep.mubr.f32.mxu0 0.0
  %461 = vmatmul.mubr.f32.gmra.mxu0 %v119
  %v462 = vpop.f32.mrf.mxu0
  %v463 = vadd.f32 %v93, %v462
  %v464 = vpop.f32.mrf.mxu0
  %465 = vmatprep.mubr.f32.mxu0 0.0
  %466 = vmatmul.mubr.f32.gmra.mxu0 %v122
  %v467 = vpop.f32.mrf.mxu0
  %v468 = vadd.f32 %v93, %v467
  %v469 = vpop.f32.mrf.mxu0
  %470 = vdwg.mxu0
  %v471 = vmax.f32 %v207, 0.0
  %v472 = vmax.f32 %v209, 0.0
  %v473 = vmax.f32 %v320, 0.0
  %v474 = vmax.f32 %v322, 0.0
  %v475 = vmax.f32 %v433, 0.0
  %v476 = vmax.f32 %v213, 0.0
  %v477 = vmax.f32 %v215, 0.0
  %v478 = vmax.f32 %v326, 0.0
  %v479 = vmax.f32 %v328, 0.0
  %v480 = vmax.f32 %v438, 0.0
  %v481 = vmax.f32 %v219, 0.0
  %v482 = vmax.f32 %v221, 0.0
  %v483 = vmax.f32 %v332, 0.0
  %v484 = vmax.f32 %v334, 0.0
  %v485 = vmax.f32 %v443, 0.0
  %v486 = vmax.f32 %v225, 0.0
  %v487 = vmax.f32 %v227, 0.0
  %v488 = vmax.f32 %v338, 0.0
  %v489 = vmax.f32 %v340, 0.0
  %v490 = vmax.f32 %v448, 0.0
  %v491 = vmax.f32 %v231, 0.0
  %v492 = vmax.f32 %v233, 0.0
  %v493 = vmax.f32 %v344, 0.0
  %v494 = vmax.f32 %v346, 0.0
  %v495 = vmax.f32 %v453, 0.0
  %v496 = vmax.f32 %v237, 0.0
  %v497 = vmax.f32 %v239, 0.0
  %v498 = vmax.f32 %v350, 0.0
  %v499 = vmax.f32 %v352, 0.0
  %v500 = vmax.f32 %v458, 0.0
  %v501 = vmax.f32 %v243, 0.0
  %v502 = vmax.f32 %v245, 0.0
  %v503 = vmax.f32 %v356, 0.0
  %v504 = vmax.f32 %v358, 0.0
  %v505 = vmax.f32 %v463, 0.0
  %v506 = vmax.f32 %v249, 0.0
  %v507 = vmax.f32 %v251, 0.0
  %v508 = vmax.f32 %v362, 0.0
  %v509 = vmax.f32 %v364, 0.0
  %v510 = vmax.f32 %v468, 0.0
  %v511 = vld [vmem:[%s3] sm:$0xff]
  %v512 = vld [vmem:[%s3 + $0x8] sm:$0xff]
  %v513 = vld [vmem:[%s3 + $0x10] sm:$0xff]
  %v514 = vld [vmem:[%s3 + $0x18] sm:$0xff]
  %v515 = vld [vmem:[%s3 + $0x20] sm:$0xff]
  %v516 = vld [vmem:[%s3 + $0x28] sm:$0xff]
  %v517 = vld [vmem:[%s3 + $0x30] sm:$0xff]
  %v518 = vld [vmem:[%s3 + $0x38] sm:$0xff]
  %v519 = vld [vmem:[%s3 + $0x40] sm:$0xff]
  %v520 = vld [vmem:[%s3 + $0x48] sm:$0xff]
  %v521 = vld [vmem:[%s3 + $0x50] sm:$0xff]
  %v522 = vld [vmem:[%s3 + $0x58] sm:$0xff]
  %v523 = vld [vmem:[%s3 + $0x60] sm:$0xff]
  %v524 = vld [vmem:[%s3 + $0x68] sm:$0xff]
  %v525 = vld [vmem:[%s3 + $0x70] sm:$0xff]
  %v526 = vld [vmem:[%s3 + $0x78] sm:$0xff]
  %v527 = vld [vmem:[%s3 + $0x80] sm:$0xff]
  %v528 = vld [vmem:[%s3 + $0x88] sm:$0xff]
  %v529 = vld [vmem:[%s3 + $0x90] sm:$0xff]
  %v530 = vld [vmem:[%s3 + $0x98] sm:$0xff]
  %v531 = vld [vmem:[%s3 + $0xa0] sm:$0xff]
  %v532 = vld [vmem:[%s3 + $0xa8] sm:$0xff]
  %v533 = vld [vmem:[%s3 + $0xb0] sm:$0xff]
  %v534 = vld [vmem:[%s3 + $0xb8] sm:$0xff]
  %v535 = vld [vmem:[%s3 + $0xc0] sm:$0xff]
  %v536 = vld [vmem:[%s3 + $0xc8] sm:$0xff]
  %v537 = vld [vmem:[%s3 + $0xd0] sm:$0xff]
  %v538 = vld [vmem:[%s3 + $0xd8] sm:$0xff]
  %v539 = vld [vmem:[%s3 + $0xe0] sm:$0xff]
  %v540 = vld [vmem:[%s3 + $0xe8] sm:$0xff]
  %v541 = vld [vmem:[%s3 + $0xf0] sm:$0xff]
  %v542 = vld [vmem:[%s3 + $0xf8] sm:$0xff]
  %v543 = vld [vmem:[%s3 + $0x100] sm:$0xff]
  %v544 = vld [vmem:[%s3 + $0x108] sm:$0xff]
  %v545 = vld [vmem:[%s3 + $0x110] sm:$0xff]
  %v546 = vld [vmem:[%s3 + $0x118] sm:$0xff]
  %v547 = vld [vmem:[%s3 + $0x120] sm:$0xff]
  %v548 = vld [vmem:[%s3 + $0x128] sm:$0xff]
  %v549 = vld [vmem:[%s3 + $0x130] sm:$0xff]
  %v550 = vld [vmem:[%s3 + $0x138] sm:$0xff]
  %v551 = vld [vmem:[%s3 + $0x140] sm:$0xff]
  %v552 = vld [vmem:[%s3 + $0x148] sm:$0xff]
  %v553 = vld [vmem:[%s3 + $0x150] sm:$0xff]
  %v554 = vld [vmem:[%s3 + $0x158] sm:$0xff]
  %v555 = vld [vmem:[%s3 + $0x160] sm:$0xff]
  %v556 = vld [vmem:[%s3 + $0x168] sm:$0xff]
  %v557 = vld [vmem:[%s3 + $0x170] sm:$0xff]
  %v558 = vld [vmem:[%s3 + $0x178] sm:$0xff]
  %v559 = vld [vmem:[%s3 + $0x180] sm:$0xff]
  %v560 = vld [vmem:[%s3 + $0x188] sm:$0xff]
  %v561 = vld [vmem:[%s3 + $0x190] sm:$0xff]
  %v562 = vld [vmem:[%s3 + $0x198] sm:$0xff]
  %v563 = vld [vmem:[%s3 + $0x1a0] sm:$0xff]
  %v564 = vld [vmem:[%s3 + $0x1a8] sm:$0xff]
  %v565 = vld [vmem:[%s3 + $0x1b0] sm:$0xff]
  %v566 = vld [vmem:[%s3 + $0x1b8] sm:$0xff]
  %v567 = vld [vmem:[%s3 + $0x1c0] sm:$0xff]
  %v568 = vld [vmem:[%s3 + $0x1c8] sm:$0xff]
  %v569 = vld [vmem:[%s3 + $0x1d0] sm:$0xff]
  %v570 = vld [vmem:[%s3 + $0x1d8] sm:$0xff]
  %v571 = vld [vmem:[%s3 + $0x1e0] sm:$0xff]
  %v572 = vld [vmem:[%s3 + $0x1e8] sm:$0xff]
  %v573 = vld [vmem:[%s3 + $0x1f0] sm:$0xff]
  %v574 = vld [vmem:[%s3 + $0x1f8] sm:$0xff]
  %v575 = vld [vmem:[%s3 + $0x200] sm:$0xff]
  %v576 = vld [vmem:[%s3 + $0x208] sm:$0xff]
  %v577 = vld [vmem:[%s3 + $0x210] sm:$0xff]
  %v578 = vld [vmem:[%s3 + $0x218] sm:$0xff]
  %v579 = vld [vmem:[%s3 + $0x220] sm:$0xff]
  %v580 = vld [vmem:[%s3 + $0x228] sm:$0xff]
  %v581 = vld [vmem:[%s3 + $0x230] sm:$0xff]
  %v582 = vld [vmem:[%s3 + $0x238] sm:$0xff]
  %v583 = vld [vmem:[%s3 + $0x240] sm:$0xff]
  %v584 = vld [vmem:[%s3 + $0x248] sm:$0xff]
  %v585 = vld [vmem:[%s3 + $0x250] sm:$0xff]
  %v586 = vld [vmem:[%s3 + $0x258] sm:$0xff]
  %v587 = vld [vmem:[%s3 + $0x260] sm:$0xff]
  %v588 = vld [vmem:[%s3 + $0x268] sm:$0xff]
  %v589 = vld [vmem:[%s3 + $0x270] sm:$0xff]
  %v590 = vld [vmem:[%s3 + $0x278] sm:$0xff]
  %v591 = vld [vmem:[%s3 + $0x280] sm:$0xff]
  %v592 = vld [vmem:[%s3 + $0x288] sm:$0xff]
  %v593 = vld [vmem:[%s3 + $0x290] sm:$0xff]
  %v594 = vld [vmem:[%s3 + $0x298] sm:$0xff]
  %v595 = vld [vmem:[%s3 + $0x2a0] sm:$0xff]
  %v596 = vld [vmem:[%s3 + $0x2a8] sm:$0xff]
  %v597 = vld [vmem:[%s3 + $0x2b0] sm:$0xff]
  %v598 = vld [vmem:[%s3 + $0x2b8] sm:$0xff]
  %v599 = vld [vmem:[%s3 + $0x2c0] sm:$0xff]
  %v600 = vld [vmem:[%s3 + $0x2c8] sm:$0xff]
  %v601 = vld [vmem:[%s3 + $0x2d0] sm:$0xff]
  %v602 = vld [vmem:[%s3 + $0x2d8] sm:$0xff]
  %v603 = vld [vmem:[%s3 + $0x2e0] sm:$0xff]
  %v604 = vld [vmem:[%s3 + $0x2e8] sm:$0xff]
  %v605 = vld [vmem:[%s3 + $0x2f0] sm:$0xff]
  %v606 = vld [vmem:[%s3 + $0x2f8] sm:$0xff]
  %v607 = vld [vmem:[%s3 + $0x300] sm:$0xff]
  %v608 = vld [vmem:[%s3 + $0x308] sm:$0xff]
  %v609 = vld [vmem:[%s3 + $0x310] sm:$0xff]
  %v610 = vld [vmem:[%s3 + $0x318] sm:$0xff]
  %v611 = vld [vmem:[%s3 + $0x320] sm:$0xff]
  %v612 = vld [vmem:[%s3 + $0x328] sm:$0xff]
  %v613 = vld [vmem:[%s3 + $0x330] sm:$0xff]
  %v614 = vld [vmem:[%s3 + $0x338] sm:$0xff]
  %v615 = vld [vmem:[%s3 + $0x340] sm:$0xff]
  %v616 = vld [vmem:[%s3 + $0x348] sm:$0xff]
  %v617 = vld [vmem:[%s3 + $0x350] sm:$0xff]
  %v618 = vld [vmem:[%s3 + $0x358] sm:$0xff]
  %v619 = vld [vmem:[%s3 + $0x360] sm:$0xff]
  %v620 = vld [vmem:[%s3 + $0x368] sm:$0xff]
  %v621 = vld [vmem:[%s3 + $0x370] sm:$0xff]
  %v622 = vld [vmem:[%s3 + $0x378] sm:$0xff]
  %v623 = vld [vmem:[%s3 + $0x380] sm:$0xff]
  %v624 = vld [vmem:[%s3 + $0x388] sm:$0xff]
  %v625 = vld [vmem:[%s3 + $0x390] sm:$0xff]
  %v626 = vld [vmem:[%s3 + $0x398] sm:$0xff]
  %v627 = vld [vmem:[%s3 + $0x3a0] sm:$0xff]
  %v628 = vld [vmem:[%s3 + $0x3a8] sm:$0xff]
  %v629 = vld [vmem:[%s3 + $0x3b0] sm:$0xff]
  %v630 = vld [vmem:[%s3 + $0x3b8] sm:$0xff]
  %v631 = vld [vmem:[%s3 + $0x3c0] sm:$0xff]
  %v632 = vld [vmem:[%s3 + $0x3c8] sm:$0xff]
  %v633 = vld [vmem:[%s3 + $0x3d0] sm:$0xff]
  %v634 = vld [vmem:[%s3 + $0x3d8] sm:$0xff]
  %v635 = vld [vmem:[%s3 + $0x3e0] sm:$0xff]
  %v636 = vld [vmem:[%s3 + $0x3e8] sm:$0xff]
  %v637 = vld [vmem:[%s3 + $0x3f0] sm:$0xff]
  %v638 = vld [vmem:[%s3 + $0x3f8] sm:$0xff]
  %v639 = vld [vmem:[%s3 + $0x400] sm:$0xff]
  %v640 = vld [vmem:[%s3 + $0x408] sm:$0xff]
  %v641 = vld [vmem:[%s3 + $0x410] sm:$0xff]
  %v642 = vld [vmem:[%s3 + $0x418] sm:$0xff]
  %v643 = vld [vmem:[%s3 + $0x420] sm:$0xff]
  %v644 = vld [vmem:[%s3 + $0x428] sm:$0xff]
  %v645 = vld [vmem:[%s3 + $0x430] sm:$0xff]
  %v646 = vld [vmem:[%s3 + $0x438] sm:$0xff]
  %v647 = vld [vmem:[%s3 + $0x440] sm:$0xff]
  %v648 = vld [vmem:[%s3 + $0x448] sm:$0xff]
  %v649 = vld [vmem:[%s3 + $0x450] sm:$0xff]
  %v650 = vld [vmem:[%s3 + $0x458] sm:$0xff]
  %v651 = vld [vmem:[%s3 + $0x460] sm:$0xff]
  %v652 = vld [vmem:[%s3 + $0x468] sm:$0xff]
  %v653 = vld [vmem:[%s3 + $0x470] sm:$0xff]
  %v654 = vld [vmem:[%s3 + $0x478] sm:$0xff]
  %v655 = vld [vmem:[%s4] sm:$0x3]
  %v657 = vlaneseq
  %v658 = vshrl.u32 %v657, 7
  %v659 = vsub.s32 0, %v658
  %v660 = vrot.slane %v655, %v659
  %v661 = vlaneseq
  %v662 = vshrl.u32 %v661, 7
  %v663 = vsub.s32 1, %v662
  %v664 = vrot.slane %v655, %v663
  %vm667 = vcmask 523264
  %v669 = vsel %vm667, %v475, 0
  %v672 = vsel %vm667, %v480, 0
  %v675 = vsel %vm667, %v485, 0
  %v678 = vsel %vm667, %v490, 0
  %v681 = vsel %vm667, %v495, 0
  %v684 = vsel %vm667, %v500, 0
  %v687 = vsel %vm667, %v505, 0
  %v690 = vsel %vm667, %v510, 0
  %692 = vmatprep.subr.mxu0 %v542
  %693 = vmatpush1.msra.mxu0 %v541
  %694 = vmatprep.subr.mxu0 %v540
  %695 = vmatpush1.msra.mxu0 %v539
  %696 = vmatprep.subr.mxu0 %v538
  %697 = vmatpush1.msra.mxu0 %v537
  %698 = vmatprep.subr.mxu0 %v536
  %699 = vmatpush1.msra.mxu0 %v535
  %700 = vmatprep.subr.mxu0 %v534
  %701 = vmatpush1.msra.mxu0 %v533
  %702 = vmatprep.subr.mxu0 %v532
  %703 = vmatpush1.msra.mxu0 %v531
  %704 = vmatprep.subr.mxu0 %v530
  %705 = vmatpush1.msra.mxu0 %v529
  %706 = vmatprep.subr.mxu0 %v528
  %707 = vmatpush1.msra.mxu0 %v527
  %708 = vmatprep.subr.mxu0 %v526
  %709 = vmatpush1.msra.mxu0 %v525
  %710 = vmatprep.subr.mxu0 %v524
  %711 = vmatpush1.msra.mxu0 %v523
  %712 = vmatprep.subr.mxu0 %v522
  %713 = vmatpush1.msra.mxu0 %v521
  %714 = vmatprep.subr.mxu0 %v520
  %715 = vmatpush1.msra.mxu0 %v519
  %716 = vmatprep.subr.mxu0 %v518
  %717 = vmatpush1.msra.mxu0 %v517
  %718 = vmatprep.subr.mxu0 %v516
  %719 = vmatpush1.msra.mxu0 %v515
  %720 = vmatprep.subr.mxu0 %v514
  %721 = vmatpush1.msra.mxu0 %v513
  %722 = vmatprep.subr.mxu0 %v512
  %723 = vmatpush1.msra.mxu0 %v511
  %724 = vmatprep.subr.mxu0 %v574
  %725 = vmatpush2.msra.mxu0 %v573
  %726 = vmatprep.subr.mxu0 %v572
  %727 = vmatpush2.msra.mxu0 %v571
  %728 = vmatprep.subr.mxu0 %v570
  %729 = vmatpush2.msra.mxu0 %v569
  %730 = vmatprep.subr.mxu0 %v568
  %731 = vmatpush2.msra.mxu0 %v567
  %732 = vmatprep.subr.mxu0 %v566
  %733 = vmatpush2.msra.mxu0 %v565
  %734 = vmatprep.subr.mxu0 %v564
  %735 = vmatpush2.msra.mxu0 %v563
  %736 = vmatprep.subr.mxu0 %v562
  %737 = vmatpush2.msra.mxu0 %v561
  %738 = vmatprep.subr.mxu0 %v560
  %739 = vmatpush2.msra.mxu0 %v559
  %740 = vmatprep.subr.mxu0 %v558
  %741 = vmatpush2.msra.mxu0 %v557
  %742 = vmatprep.subr.mxu0 %v556
  %743 = vmatpush2.msra.mxu0 %v555
  %744 = vmatprep.subr.mxu0 %v554
  %745 = vmatpush2.msra.mxu0 %v553
  %746 = vmatprep.subr.mxu0 %v552
  %747 = vmatpush2.msra.mxu0 %v551
  %748 = vmatprep.subr.mxu0 %v550
  %749 = vmatpush2.msra.mxu0 %v549
  %750 = vmatprep.subr.mxu0 %v548
  %751 = vmatpush2.msra.mxu0 %v547
  %752 = vmatprep.subr.mxu0 %v546
  %753 = vmatpush2.msra.mxu0 %v545
  %754 = vmatprep.subr.mxu0 %v544
  %755 = vmatpush2.msra.mxu0 %v543
  %756 = vmatprep.mubr.f32.mxu0 %v472
  %757 = vmatmul.mubr.f32.gmra.mxu0 %v471
  %v758 = vpop.f32.mrf.mxu0
  %v759 = vadd.f32 %v660, %v758
  %v760 = vpop.f32.mrf.mxu0
  %v761 = vadd.f32 %v664, %v760
  %762 = vmatprep.mubr.f32.mxu0 %v477
  %763 = vmatmul.mubr.f32.gmra.mxu0 %v476
  %v764 = vpop.f32.mrf.mxu0
  %v765 = vadd.f32 %v660, %v764
  %v766 = vpop.f32.mrf.mxu0
  %v767 = vadd.f32 %v664, %v766
  %768 = vmatprep.mubr.f32.mxu0 %v482
  %769 = vmatmul.mubr.f32.gmra.mxu0 %v481
  %v770 = vpop.f32.mrf.mxu0
  %v771 = vadd.f32 %v660, %v770
  %v772 = vpop.f32.mrf.mxu0
  %v773 = vadd.f32 %v664, %v772
  %774 = vmatprep.mubr.f32.mxu0 %v487
  %775 = vmatmul.mubr.f32.gmra.mxu0 %v486
  %v776 = vpop.f32.mrf.mxu0
  %v777 = vadd.f32 %v660, %v776
  %v778 = vpop.f32.mrf.mxu0
  %v779 = vadd.f32 %v664, %v778
  %780 = vmatprep.mubr.f32.mxu0 %v492
  %781 = vmatmul.mubr.f32.gmra.mxu0 %v491
  %v782 = vpop.f32.mrf.mxu0
  %v783 = vadd.f32 %v660, %v782
  %v784 = vpop.f32.mrf.mxu0
  %v785 = vadd.f32 %v664, %v784
  %786 = vmatprep.mubr.f32.mxu0 %v497
  %787 = vmatmul.mubr.f32.gmra.mxu0 %v496
  %v788 = vpop.f32.mrf.mxu0
  %v789 = vadd.f32 %v660, %v788
  %v790 = vpop.f32.mrf.mxu0
  %v791 = vadd.f32 %v664, %v790
  %792 = vmatprep.mubr.f32.mxu0 %v502
  %793 = vmatmul.mubr.f32.gmra.mxu0 %v501
  %v794 = vpop.f32.mrf.mxu0
  %v795 = vadd.f32 %v660, %v794
  %v796 = vpop.f32.mrf.mxu0
  %v797 = vadd.f32 %v664, %v796
  %798 = vmatprep.mubr.f32.mxu0 %v507
  %799 = vmatmul.mubr.f32.gmra.mxu0 %v506
  %v800 = vpop.f32.mrf.mxu0
  %v801 = vadd.f32 %v660, %v800
  %v802 = vpop.f32.mrf.mxu0
  %v803 = vadd.f32 %v664, %v802
  %804 = vdwg.mxu0
  %805 = vmatprep.subr.mxu0 %v606
  %806 = vmatpush1.msra.mxu0 %v605
  %807 = vmatprep.subr.mxu0 %v604
  %808 = vmatpush1.msra.mxu0 %v603
  %809 = vmatprep.subr.mxu0 %v602
  %810 = vmatpush1.msra.mxu0 %v601
  %811 = vmatprep.subr.mxu0 %v600
  %812 = vmatpush1.msra.mxu0 %v599
  %813 = vmatprep.subr.mxu0 %v598
  %814 = vmatpush1.msra.mxu0 %v597
  %815 = vmatprep.subr.mxu0 %v596
  %816 = vmatpush1.msra.mxu0 %v595
  %817 = vmatprep.subr.mxu0 %v594
  %818 = vmatpush1.msra.mxu0 %v593
  %819 = vmatprep.subr.mxu0 %v592
  %820 = vmatpush1.msra.mxu0 %v591
  %821 = vmatprep.subr.mxu0 %v590
  %822 = vmatpush1.msra.mxu0 %v589
  %823 = vmatprep.subr.mxu0 %v588
  %824 = vmatpush1.msra.mxu0 %v587
  %825 = vmatprep.subr.mxu0 %v586
  %826 = vmatpush1.msra.mxu0 %v585
  %827 = vmatprep.subr.mxu0 %v584
  %828 = vmatpush1.msra.mxu0 %v583
  %829 = vmatprep.subr.mxu0 %v582
  %830 = vmatpush1.msra.mxu0 %v581
  %831 = vmatprep.subr.mxu0 %v580
  %832 = vmatpush1.msra.mxu0 %v579
  %833 = vmatprep.subr.mxu0 %v578
  %834 = vmatpush1.msra.mxu0 %v577
  %835 = vmatprep.subr.mxu0 %v576
  %836 = vmatpush1.msra.mxu0 %v575
  %837 = vmatprep.subr.mxu0 %v638
  %838 = vmatpush2.msra.mxu0 %v637
  %839 = vmatprep.subr.mxu0 %v636
  %840 = vmatpush2.msra.mxu0 %v635
  %841 = vmatprep.subr.mxu0 %v634
  %842 = vmatpush2.msra.mxu0 %v633
  %843 = vmatprep.subr.mxu0 %v632
  %844 = vmatpush2.msra.mxu0 %v631
  %845 = vmatprep.subr.mxu0 %v630
  %846 = vmatpush2.msra.mxu0 %v629
  %847 = vmatprep.subr.mxu0 %v628
  %848 = vmatpush2.msra.mxu0 %v627
  %849 = vmatprep.subr.mxu0 %v626
  %850 = vmatpush2.msra.mxu0 %v625
  %851 = vmatprep.subr.mxu0 %v624
  %852 = vmatpush2.msra.mxu0 %v623
  %853 = vmatprep.subr.mxu0 %v622
  %854 = vmatpush2.msra.mxu0 %v621
  %855 = vmatprep.subr.mxu0 %v620
  %856 = vmatpush2.msra.mxu0 %v619
  %857 = vmatprep.subr.mxu0 %v618
  %858 = vmatpush2.msra.mxu0 %v617
  %859 = vmatprep.subr.mxu0 %v616
  %860 = vmatpush2.msra.mxu0 %v615
  %861 = vmatprep.subr.mxu0 %v614
  %862 = vmatpush2.msra.mxu0 %v613
  %863 = vmatprep.subr.mxu0 %v612
  %864 = vmatpush2.msra.mxu0 %v611
  %865 = vmatprep.subr.mxu0 %v610
  %866 = vmatpush2.msra.mxu0 %v609
  %867 = vmatprep.subr.mxu0 %v608
  %868 = vmatpush2.msra.mxu0 %v607
  %869 = vmatprep.mubr.f32.mxu0 %v474
  %870 = vmatmul.mubr.f32.gmra.mxu0 %v473
  %v871 = vpop.f32.mrf.mxu0
  %v872 = vadd.f32 %v759, %v871
  %v873 = vpop.f32.mrf.mxu0
  %v874 = vadd.f32 %v761, %v873
  %875 = vmatprep.mubr.f32.mxu0 %v479
  %876 = vmatmul.mubr.f32.gmra.mxu0 %v478
  %v877 = vpop.f32.mrf.mxu0
  %v878 = vadd.f32 %v765, %v877
  %v879 = vpop.f32.mrf.mxu0
  %v880 = vadd.f32 %v767, %v879
  %881 = vmatprep.mubr.f32.mxu0 %v484
  %882 = vmatmul.mubr.f32.gmra.mxu0 %v483
  %v883 = vpop.f32.mrf.mxu0
  %v884 = vadd.f32 %v771, %v883
  %v885 = vpop.f32.mrf.mxu0
  %v886 = vadd.f32 %v773, %v885
  %887 = vmatprep.mubr.f32.mxu0 %v489
  %888 = vmatmul.mubr.f32.gmra.mxu0 %v488
  %v889 = vpop.f32.mrf.mxu0
  %v890 = vadd.f32 %v777, %v889
  %v891 = vpop.f32.mrf.mxu0
  %v892 = vadd.f32 %v779, %v891
  %893 = vmatprep.mubr.f32.mxu0 %v494
  %894 = vmatmul.mubr.f32.gmra.mxu0 %v493
  %v895 = vpop.f32.mrf.mxu0
  %v896 = vadd.f32 %v783, %v895
  %v897 = vpop.f32.mrf.mxu0
  %v898 = vadd.f32 %v785, %v897
  %899 = vmatprep.mubr.f32.mxu0 %v499
  %900 = vmatmul.mubr.f32.gmra.mxu0 %v498
  %v901 = vpop.f32.mrf.mxu0
  %v902 = vadd.f32 %v789, %v901
  %v903 = vpop.f32.mrf.mxu0
  %v904 = vadd.f32 %v791, %v903
  %905 = vmatprep.mubr.f32.mxu0 %v504
  %906 = vmatmul.mubr.f32.gmra.mxu0 %v503
  %v907 = vpop.f32.mrf.mxu0
  %v908 = vadd.f32 %v795, %v907
  %v909 = vpop.f32.mrf.mxu0
  %v910 = vadd.f32 %v797, %v909
  %911 = vmatprep.mubr.f32.mxu0 %v509
  %912 = vmatmul.mubr.f32.gmra.mxu0 %v508
  %v913 = vpop.f32.mrf.mxu0
  %v914 = vadd.f32 %v801, %v913
  %v915 = vpop.f32.mrf.mxu0
  %v916 = vadd.f32 %v803, %v915
  %917 = vdwg.mxu0
  %918 = vmatprep.subr.mxu0 0.0
  %919 = vmatpush1.msra.mxu0 0.0
  %920 = vmatprep.subr.mxu0 0.0
  %921 = vmatpush1.msra.mxu0 0.0
  %922 = vmatprep.subr.mxu0 0.0
  %923 = vmatpush1.msra.mxu0 0.0
  %924 = vmatprep.subr.mxu0 0.0
  %925 = vmatpush1.msra.mxu0 0.0
  %926 = vmatprep.subr.mxu0 0.0
  %927 = vmatpush1.msra.mxu0 0.0
  %928 = vmatprep.subr.mxu0 0.0
  %929 = vmatpush1.msra.mxu0 0.0
  %930 = vmatprep.subr.mxu0 0.0
  %931 = vmatpush1.msra.mxu0 0.0
  %932 = vmatprep.subr.mxu0 0.0
  %933 = vmatpush1.msra.mxu0 0.0
  %934 = vmatprep.subr.mxu0 %v654
  %935 = vmatpush1.msra.mxu0 %v653
  %936 = vmatprep.subr.mxu0 %v652
  %937 = vmatpush1.msra.mxu0 %v651
  %938 = vmatprep.subr.mxu0 %v650
  %939 = vmatpush1.msra.mxu0 %v649
  %940 = vmatprep.subr.mxu0 %v648
  %941 = vmatpush1.msra.mxu0 %v647
  %942 = vmatprep.subr.mxu0 %v646
  %943 = vmatpush1.msra.mxu0 %v645
  %944 = vmatprep.subr.mxu0 %v644
  %945 = vmatpush1.msra.mxu0 %v643
  %946 = vmatprep.subr.mxu0 %v642
  %947 = vmatpush1.msra.mxu0 %v641
  %948 = vmatprep.subr.mxu0 %v640
  %949 = vmatpush1.msra.mxu0 %v639
  %950 = vmatprep.subr.mxu0 0.0
  %951 = vmatpush2.msra.mxu0 0.0
  %952 = vmatprep.subr.mxu0 0.0
  %953 = vmatpush2.msra.mxu0 0.0
  %954 = vmatprep.subr.mxu0 0.0
  %955 = vmatpush2.msra.mxu0 0.0
  %956 = vmatprep.subr.mxu0 0.0
  %957 = vmatpush2.msra.mxu0 0.0
  %958 = vmatprep.subr.mxu0 0.0
  %959 = vmatpush2.msra.mxu0 0.0
  %960 = vmatprep.subr.mxu0 0.0
  %961 = vmatpush2.msra.mxu0 0.0
  %962 = vmatprep.subr.mxu0 0.0
  %963 = vmatpush2.msra.mxu0 0.0
  %964 = vmatprep.subr.mxu0 0.0
  %965 = vmatpush2.msra.mxu0 0.0
  %966 = vmatprep.subr.mxu0 0.0
  %967 = vmatpush2.msra.mxu0 0.0
  %968 = vmatprep.subr.mxu0 0.0
  %969 = vmatpush2.msra.mxu0 0.0
  %970 = vmatprep.subr.mxu0 0.0
  %971 = vmatpush2.msra.mxu0 0.0
  %972 = vmatprep.subr.mxu0 0.0
  %973 = vmatpush2.msra.mxu0 0.0
  %974 = vmatprep.subr.mxu0 0.0
  %975 = vmatpush2.msra.mxu0 0.0
  %976 = vmatprep.subr.mxu0 0.0
  %977 = vmatpush2.msra.mxu0 0.0
  %978 = vmatprep.subr.mxu0 0.0
  %979 = vmatpush2.msra.mxu0 0.0
  %980 = vmatprep.subr.mxu0 0.0
  %981 = vmatpush2.msra.mxu0 0.0
  %982 = vmatprep.mubr.f32.mxu0 0.0
  %983 = vmatmul.mubr.f32.gmra.mxu0 %v669
  %v984 = vpop.f32.mrf.mxu0
  %v985 = vadd.f32 %v872, %v984
  %v986 = vpop.f32.mrf.mxu0
  %v987 = vadd.f32 %v874, %v986
  %988 = vmatprep.mubr.f32.mxu0 0.0
  %989 = vmatmul.mubr.f32.gmra.mxu0 %v672
  %v990 = vpop.f32.mrf.mxu0
  %v991 = vadd.f32 %v878, %v990
  %v992 = vpop.f32.mrf.mxu0
  %v993 = vadd.f32 %v880, %v992
  %994 = vmatprep.mubr.f32.mxu0 0.0
  %995 = vmatmul.mubr.f32.gmra.mxu0 %v675
  %v996 = vpop.f32.mrf.mxu0
  %v997 = vadd.f32 %v884, %v996
  %v998 = vpop.f32.mrf.mxu0
  %v999 = vadd.f32 %v886, %v998
  %1000 = vmatprep.mubr.f32.mxu0 0.0
  %1001 = vmatmul.mubr.f32.gmra.mxu0 %v678
  %v1002 = vpop.f32.mrf.mxu0
  %v1003 = vadd.f32 %v890, %v1002
  %v1004 = vpop.f32.mrf.mxu0
  %v1005 = vadd.f32 %v892, %v1004
  %1006 = vmatprep.mubr.f32.mxu0 0.0
  %1007 = vmatmul.mubr.f32.gmra.mxu0 %v681
  %v1008 = vpop.f32.mrf.mxu0
  %v1009 = vadd.f32 %v896, %v1008
  %v1010 = vpop.f32.mrf.mxu0
  %v1011 = vadd.f32 %v898, %v1010
  %1012 = vmatprep.mubr.f32.mxu0 0.0
  %1013 = vmatmul.mubr.f32.gmra.mxu0 %v684
  %v1014 = vpop.f32.mrf.mxu0
  %v1015 = vadd.f32 %v902, %v1014
  %v1016 = vpop.f32.mrf.mxu0
  %v1017 = vadd.f32 %v904, %v1016
  %1018 = vmatprep.mubr.f32.mxu0 0.0
  %1019 = vmatmul.mubr.f32.gmra.mxu0 %v687
  %v1020 = vpop.f32.mrf.mxu0
  %v1021 = vadd.f32 %v908, %v1020
  %v1022 = vpop.f32.mrf.mxu0
  %v1023 = vadd.f32 %v910, %v1022
  %1024 = vmatprep.mubr.f32.mxu0 0.0
  %1025 = vmatmul.mubr.f32.gmra.mxu0 %v690
  %v1026 = vpop.f32.mrf.mxu0
  %v1027 = vadd.f32 %v914, %v1026
  %v1028 = vpop.f32.mrf.mxu0
  %v1029 = vadd.f32 %v916, %v1028
  %1030 = vdwg.mxu0
  %v1031 = vmax.f32 %v985, 0.0
  %v1032 = vmax.f32 %v987, 0.0
  %v1033 = vmax.f32 %v991, 0.0
  %v1034 = vmax.f32 %v993, 0.0
  %v1035 = vmax.f32 %v997, 0.0
  %v1036 = vmax.f32 %v999, 0.0
  %v1037 = vmax.f32 %v1003, 0.0
  %v1038 = vmax.f32 %v1005, 0.0
  %v1039 = vmax.f32 %v1009, 0.0
  %v1040 = vmax.f32 %v1011, 0.0
  %v1041 = vmax.f32 %v1015, 0.0
  %v1042 = vmax.f32 %v1017, 0.0
  %v1043 = vmax.f32 %v1021, 0.0
  %v1044 = vmax.f32 %v1023, 0.0
  %v1045 = vmax.f32 %v1027, 0.0
  %v1046 = vmax.f32 %v1029, 0.0
  %v1047 = vld [vmem:[%s5] sm:$0xff]
  %v1048 = vld [vmem:[%s5 + $0x8] sm:$0xff]
  %v1049 = vld [vmem:[%s5 + $0x10] sm:$0xff]
  %v1050 = vld [vmem:[%s5 + $0x18] sm:$0xff]
  %v1051 = vld [vmem:[%s5 + $0x20] sm:$0xff]
  %v1052 = vld [vmem:[%s5 + $0x28] sm:$0xff]
  %v1053 = vld [vmem:[%s5 + $0x30] sm:$0xff]
  %v1054 = vld [vmem:[%s5 + $0x38] sm:$0xff]
  %v1055 = vld [vmem:[%s5 + $0x40] sm:$0xff]
  %v1056 = vld [vmem:[%s5 + $0x48] sm:$0xff]
  %v1057 = vld [vmem:[%s5 + $0x50] sm:$0xff]
  %v1058 = vld [vmem:[%s5 + $0x58] sm:$0xff]
  %v1059 = vld [vmem:[%s5 + $0x60] sm:$0xff]
  %v1060 = vld [vmem:[%s5 + $0x68] sm:$0xff]
  %v1061 = vld [vmem:[%s5 + $0x70] sm:$0xff]
  %v1062 = vld [vmem:[%s5 + $0x78] sm:$0xff]
  %v1063 = vld [vmem:[%s5 + $0x80] sm:$0xff]
  %v1064 = vld [vmem:[%s5 + $0x88] sm:$0xff]
  %v1065 = vld [vmem:[%s5 + $0x90] sm:$0xff]
  %v1066 = vld [vmem:[%s5 + $0x98] sm:$0xff]
  %v1067 = vld [vmem:[%s5 + $0xa0] sm:$0xff]
  %v1068 = vld [vmem:[%s5 + $0xa8] sm:$0xff]
  %v1069 = vld [vmem:[%s5 + $0xb0] sm:$0xff]
  %v1070 = vld [vmem:[%s5 + $0xb8] sm:$0xff]
  %v1071 = vld [vmem:[%s6] sm:$0x1]
  %v1073 = vlaneseq
  %v1074 = vshrl.u32 %v1073, 7
  %v1075 = vsub.s32 0, %v1074
  %v1076 = vrot.slane %v1071, %v1075
  %v1079 = vsel %vm667, %v1032, 0
  %v1082 = vsel %vm667, %v1034, 0
  %v1085 = vsel %vm667, %v1036, 0
  %v1088 = vsel %vm667, %v1038, 0
  %v1091 = vsel %vm667, %v1040, 0
  %v1094 = vsel %vm667, %v1042, 0
  %v1097 = vsel %vm667, %v1044, 0
  %v1100 = vsel %vm667, %v1046, 0
  %1102 = vmatprep.subr.mxu0 0.0
  %1103 = vmatpush1.msra.mxu0 %v1062
  %1104 = vmatprep.subr.mxu0 0.0
  %1105 = vmatpush1.msra.mxu0 %v1061
  %1106 = vmatprep.subr.mxu0 0.0
  %1107 = vmatpush1.msra.mxu0 %v1060
  %1108 = vmatprep.subr.mxu0 0.0
  %1109 = vmatpush1.msra.mxu0 %v1059
  %1110 = vmatprep.subr.mxu0 0.0
  %1111 = vmatpush1.msra.mxu0 %v1058
  %1112 = vmatprep.subr.mxu0 0.0
  %1113 = vmatpush1.msra.mxu0 %v1057
  %1114 = vmatprep.subr.mxu0 0.0
  %1115 = vmatpush1.msra.mxu0 %v1056
  %1116 = vmatprep.subr.mxu0 0.0
  %1117 = vmatpush1.msra.mxu0 %v1055
  %1118 = vmatprep.subr.mxu0 0.0
  %1119 = vmatpush1.msra.mxu0 %v1054
  %1120 = vmatprep.subr.mxu0 0.0
  %1121 = vmatpush1.msra.mxu0 %v1053
  %1122 = vmatprep.subr.mxu0 0.0
  %1123 = vmatpush1.msra.mxu0 %v1052
  %1124 = vmatprep.subr.mxu0 0.0
  %1125 = vmatpush1.msra.mxu0 %v1051
  %1126 = vmatprep.subr.mxu0 0.0
  %1127 = vmatpush1.msra.mxu0 %v1050
  %1128 = vmatprep.subr.mxu0 0.0
  %1129 = vmatpush1.msra.mxu0 %v1049
  %1130 = vmatprep.subr.mxu0 0.0
  %1131 = vmatpush1.msra.mxu0 %v1048
  %1132 = vmatprep.subr.mxu0 0.0
  %1133 = vmatpush1.msra.mxu0 %v1047
  %1134 = vmatprep.subr.mxu0 0.0
  %1135 = vmatpush2.msra.mxu0 0.0
  %1136 = vmatprep.subr.mxu0 0.0
  %1137 = vmatpush2.msra.mxu0 0.0
  %1138 = vmatprep.subr.mxu0 0.0
  %1139 = vmatpush2.msra.mxu0 0.0
  %1140 = vmatprep.subr.mxu0 0.0
  %1141 = vmatpush2.msra.mxu0 0.0
  %1142 = vmatprep.subr.mxu0 0.0
  %1143 = vmatpush2.msra.mxu0 0.0
  %1144 = vmatprep.subr.mxu0 0.0
  %1145 = vmatpush2.msra.mxu0 0.0
  %1146 = vmatprep.subr.mxu0 0.0
  %1147 = vmatpush2.msra.mxu0 0.0
  %1148 = vmatprep.subr.mxu0 0.0
  %1149 = vmatpush2.msra.mxu0 0.0
  %1150 = vmatprep.subr.mxu0 0.0
  %1151 = vmatpush2.msra.mxu0 %v1070
  %1152 = vmatprep.subr.mxu0 0.0
  %1153 = vmatpush2.msra.mxu0 %v1069
  %1154 = vmatprep.subr.mxu0 0.0
  %1155 = vmatpush2.msra.mxu0 %v1068
  %1156 = vmatprep.subr.mxu0 0.0
  %1157 = vmatpush2.msra.mxu0 %v1067
  %1158 = vmatprep.subr.mxu0 0.0
  %1159 = vmatpush2.msra.mxu0 %v1066
  %1160 = vmatprep.subr.mxu0 0.0
  %1161 = vmatpush2.msra.mxu0 %v1065
  %1162 = vmatprep.subr.mxu0 0.0
  %1163 = vmatpush2.msra.mxu0 %v1064
  %1164 = vmatprep.subr.mxu0 0.0
  %1165 = vmatpush2.msra.mxu0 %v1063
  %1166 = vmatprep.mubr.f32.mxu0 %v1079
  %1167 = vmatmul.mubr.f32.gmra.mxu0 %v1031
  %v1168 = vpop.f32.mrf.mxu0
  %v1169 = vadd.f32 %v1076, %v1168
  %v1170 = vpop.f32.mrf.mxu0
  %1171 = vmatprep.mubr.f32.mxu0 %v1082
  %1172 = vmatmul.mubr.f32.gmra.mxu0 %v1033
  %v1173 = vpop.f32.mrf.mxu0
  %v1174 = vadd.f32 %v1076, %v1173
  %v1175 = vpop.f32.mrf.mxu0
  %1176 = vmatprep.mubr.f32.mxu0 %v1085
  %1177 = vmatmul.mubr.f32.gmra.mxu0 %v1035
  %v1178 = vpop.f32.mrf.mxu0
  %v1179 = vadd.f32 %v1076, %v1178
  %v1180 = vpop.f32.mrf.mxu0
  %1181 = vmatprep.mubr.f32.mxu0 %v1088
  %1182 = vmatmul.mubr.f32.gmra.mxu0 %v1037
  %v1183 = vpop.f32.mrf.mxu0
  %v1184 = vadd.f32 %v1076, %v1183
  %v1185 = vpop.f32.mrf.mxu0
  %1186 = vmatprep.mubr.f32.mxu0 %v1091
  %1187 = vmatmul.mubr.f32.gmra.mxu0 %v1039
  %v1188 = vpop.f32.mrf.mxu0
  %v1189 = vadd.f32 %v1076, %v1188
  %v1190 = vpop.f32.mrf.mxu0
  %1191 = vmatprep.mubr.f32.mxu0 %v1094
  %1192 = vmatmul.mubr.f32.gmra.mxu0 %v1041
  %v1193 = vpop.f32.mrf.mxu0
  %v1194 = vadd.f32 %v1076, %v1193
  %v1195 = vpop.f32.mrf.mxu0
  %1196 = vmatprep.mubr.f32.mxu0 %v1097
  %1197 = vmatmul.mubr.f32.gmra.mxu0 %v1043
  %v1198 = vpop.f32.mrf.mxu0
  %v1199 = vadd.f32 %v1076, %v1198
  %v1200 = vpop.f32.mrf.mxu0
  %1201 = vmatprep.mubr.f32.mxu0 %v1100
  %1202 = vmatmul.mubr.f32.gmra.mxu0 %v1045
  %v1203 = vpop.f32.mrf.mxu0
  %v1204 = vadd.f32 %v1076, %v1203
  %v1205 = vpop.f32.mrf.mxu0
  %1206 = vdwg.mxu0
  %v1207 = vmax.f32 %v1169, 0.0
  %v1208 = vmax.f32 %v1174, 0.0
  %v1209 = vmax.f32 %v1179, 0.0
  %v1210 = vmax.f32 %v1184, 0.0
  %v1211 = vmax.f32 %v1189, 0.0
  %v1212 = vmax.f32 %v1194, 0.0
  %v1213 = vmax.f32 %v1199, 0.0
  %v1214 = vmax.f32 %v1204, 0.0
  %v1215 = vld [vmem:[%s7] sm:$0xff]
  %v1216 = vld [vmem:[%s7 + $0x8] sm:$0xff]
  %v1217 = vld [vmem:[%s7 + $0x10] sm:$0xff]
  %v1218 = vld [vmem:[%s7 + $0x18] sm:$0xff]
  %v1219 = vld [vmem:[%s7 + $0x20] sm:$0xff]
  %v1220 = vld [vmem:[%s7 + $0x28] sm:$0xff]
  %v1221 = vld [vmem:[%s7 + $0x30] sm:$0xff]
  %v1222 = vld [vmem:[%s7 + $0x38] sm:$0xff]
  %v1223 = vld [vmem:[%s7 + $0x40] sm:$0xff]
  %v1224 = vld [vmem:[%s7 + $0x48] sm:$0xff]
  %v1225 = vld [vmem:[%s7 + $0x50] sm:$0xff]
  %v1226 = vld [vmem:[%s7 + $0x58] sm:$0xff]
  %v1227 = vld [vmem:[%s7 + $0x60] sm:$0xff]
  %v1228 = vld [vmem:[%s7 + $0x68] sm:$0xff]
  %v1229 = vld [vmem:[%s7 + $0x70] sm:$0xff]
  %v1230 = vld [vmem:[%s7 + $0x78] sm:$0xff]
  %v1231 = vld [vmem:[%s8] sm:$0x1]
  %v1233 = vlaneseq
  %v1234 = vshrl.u32 %v1233, 7
  %v1235 = vsub.s32 0, %v1234
  %v1236 = vrot.slane %v1231, %v1235
  %1238 = vmatprep.subr.mxu0 0.0
  %1239 = vmatpush1.msra.mxu0 %v1230
  %1240 = vmatprep.subr.mxu0 0.0
  %1241 = vmatpush1.msra.mxu0 %v1229
  %1242 = vmatprep.subr.mxu0 0.0
  %1243 = vmatpush1.msra.mxu0 %v1228
  %1244 = vmatprep.subr.mxu0 0.0
  %1245 = vmatpush1.msra.mxu0 %v1227
  %1246 = vmatprep.subr.mxu0 0.0
  %1247 = vmatpush1.msra.mxu0 %v1226
  %1248 = vmatprep.subr.mxu0 0.0
  %1249 = vmatpush1.msra.mxu0 %v1225
  %1250 = vmatprep.subr.mxu0 0.0
  %1251 = vmatpush1.msra.mxu0 %v1224
  %1252 = vmatprep.subr.mxu0 0.0
  %1253 = vmatpush1.msra.mxu0 %v1223
  %1254 = vmatprep.subr.mxu0 0.0
  %1255 = vmatpush1.msra.mxu0 %v1222
  %1256 = vmatprep.subr.mxu0 0.0
  %1257 = vmatpush1.msra.mxu0 %v1221
  %1258 = vmatprep.subr.mxu0 0.0
  %1259 = vmatpush1.msra.mxu0 %v1220
  %1260 = vmatprep.subr.mxu0 0.0
  %1261 = vmatpush1.msra.mxu0 %v1219
  %1262 = vmatprep.subr.mxu0 0.0
  %1263 = vmatpush1.msra.mxu0 %v1218
  %1264 = vmatprep.subr.mxu0 0.0
  %1265 = vmatpush1.msra.mxu0 %v1217
  %1266 = vmatprep.subr.mxu0 0.0
  %1267 = vmatpush1.msra.mxu0 %v1216
  %1268 = vmatprep.subr.mxu0 0.0
  %1269 = vmatpush1.msra.mxu0 %v1215
  %1270 = vmatprep.subr.mxu0 0.0
  %1271 = vmatpush2.msra.mxu0 0.0
  %1272 = vmatprep.subr.mxu0 0.0
  %1273 = vmatpush2.msra.mxu0 0.0
  %1274 = vmatprep.subr.mxu0 0.0
  %1275 = vmatpush2.msra.mxu0 0.0
  %1276 = vmatprep.subr.mxu0 0.0
  %1277 = vmatpush2.msra.mxu0 0.0
  %1278 = vmatprep.subr.mxu0 0.0
  %1279 = vmatpush2.msra.mxu0 0.0
  %1280 = vmatprep.subr.mxu0 0.0
  %1281 = vmatpush2.msra.mxu0 0.0
  %1282 = vmatprep.subr.mxu0 0.0
  %1283 = vmatpush2.msra.mxu0 0.0
  %1284 = vmatprep.subr.mxu0 0.0
  %1285 = vmatpush2.msra.mxu0 0.0
  %1286 = vmatprep.subr.mxu0 0.0
  %1287 = vmatpush2.msra.mxu0 0.0
  %1288 = vmatprep.subr.mxu0 0.0
  %1289 = vmatpush2.msra.mxu0 0.0
  %1290 = vmatprep.subr.mxu0 0.0
  %1291 = vmatpush2.msra.mxu0 0.0
  %1292 = vmatprep.subr.mxu0 0.0
  %1293 = vmatpush2.msra.mxu0 0.0
  %1294 = vmatprep.subr.mxu0 0.0
  %1295 = vmatpush2.msra.mxu0 0.0
  %1296 = vmatprep.subr.mxu0 0.0
  %1297 = vmatpush2.msra.mxu0 0.0
  %1298 = vmatprep.subr.mxu0 0.0
  %1299 = vmatpush2.msra.mxu0 0.0
  %1300 = vmatprep.subr.mxu0 0.0
  %1301 = vmatpush2.msra.mxu0 0.0
  %1302 = vmatprep.mubr.f32.mxu0 0.0
  %1303 = vmatmul.mubr.f32.gmra.mxu0 %v1207
  %v1304 = vpop.f32.mrf.mxu0
  %v1305 = vadd.f32 %v1236, %v1304
  %v1306 = vpop.f32.mrf.mxu0
  %1307 = vmatprep.mubr.f32.mxu0 0.0
  %1308 = vmatmul.mubr.f32.gmra.mxu0 %v1208
  %v1309 = vpop.f32.mrf.mxu0
  %v1310 = vadd.f32 %v1236, %v1309
  %v1311 = vpop.f32.mrf.mxu0
  %1312 = vmatprep.mubr.f32.mxu0 0.0
  %1313 = vmatmul.mubr.f32.gmra.mxu0 %v1209
  %v1314 = vpop.f32.mrf.mxu0
  %v1315 = vadd.f32 %v1236, %v1314
  %v1316 = vpop.f32.mrf.mxu0
  %1317 = vmatprep.mubr.f32.mxu0 0.0
  %1318 = vmatmul.mubr.f32.gmra.mxu0 %v1210
  %v1319 = vpop.f32.mrf.mxu0
  %v1320 = vadd.f32 %v1236, %v1319
  %v1321 = vpop.f32.mrf.mxu0
  %1322 = vmatprep.mubr.f32.mxu0 0.0
  %1323 = vmatmul.mubr.f32.gmra.mxu0 %v1211
  %v1324 = vpop.f32.mrf.mxu0
  %v1325 = vadd.f32 %v1236, %v1324
  %v1326 = vpop.f32.mrf.mxu0
  %1327 = vmatprep.mubr.f32.mxu0 0.0
  %1328 = vmatmul.mubr.f32.gmra.mxu0 %v1212
  %v1329 = vpop.f32.mrf.mxu0
  %v1330 = vadd.f32 %v1236, %v1329
  %v1331 = vpop.f32.mrf.mxu0
  %1332 = vmatprep.mubr.f32.mxu0 0.0
  %1333 = vmatmul.mubr.f32.gmra.mxu0 %v1213
  %v1334 = vpop.f32.mrf.mxu0
  %v1335 = vadd.f32 %v1236, %v1334
  %v1336 = vpop.f32.mrf.mxu0
  %1337 = vmatprep.mubr.f32.mxu0 0.0
  %1338 = vmatmul.mubr.f32.gmra.mxu0 %v1214
  %v1339 = vpop.f32.mrf.mxu0
  %v1340 = vadd.f32 %v1236, %v1339
  %v1341 = vpop.f32.mrf.mxu0
  %1342 = vdwg.mxu0
  %v1343 = vmax.f32 %v1305, 0.0
  %v1344 = vmax.f32 %v1310, 0.0
  %v1345 = vmax.f32 %v1315, 0.0
  %v1346 = vmax.f32 %v1320, 0.0
  %v1347 = vmax.f32 %v1325, 0.0
  %v1348 = vmax.f32 %v1330, 0.0
  %v1349 = vmax.f32 %v1335, 0.0
  %v1350 = vmax.f32 %v1340, 0.0
  %v1351 = vld [vmem:[%s9] sm:$0xff]
  %v1352 = vld [vmem:[%s9 + $0x8] sm:$0xff]
  %v1353 = vld [vmem:[%s9 + $0x10] sm:$0xff]
  %v1354 = vld [vmem:[%s9 + $0x18] sm:$0xff]
  %v1355 = vld [vmem:[%s9 + $0x20] sm:$0xff]
  %v1356 = vld [vmem:[%s9 + $0x28] sm:$0xff]
  %v1357 = vld [vmem:[%s9 + $0x30] sm:$0xff]
  %v1358 = vld [vmem:[%s9 + $0x38] sm:$0xff]
  %v1359 = vld [vmem:[%s9 + $0x40] sm:$0xff]
  %v1360 = vld [vmem:[%s9 + $0x48] sm:$0xff]
  %v1361 = vld [vmem:[%s9 + $0x50] sm:$0xff]
  %v1362 = vld [vmem:[%s9 + $0x58] sm:$0xff]
  %v1363 = vld [vmem:[%s9 + $0x60] sm:$0xff]
  %v1364 = vld [vmem:[%s9 + $0x68] sm:$0xff]
  %v1365 = vld [vmem:[%s9 + $0x70] sm:$0xff]
  %v1366 = vld [vmem:[%s9 + $0x78] sm:$0xff]
  %1367 = vmatprep.subr.mxu0 0.0
  %1368 = vmatpush1.msra.mxu0 %v1366
  %1369 = vmatprep.subr.mxu0 0.0
  %1370 = vmatpush1.msra.mxu0 %v1365
  %1371 = vmatprep.subr.mxu0 0.0
  %1372 = vmatpush1.msra.mxu0 %v1364
  %1373 = vmatprep.subr.mxu0 0.0
  %1374 = vmatpush1.msra.mxu0 %v1363
  %1375 = vmatprep.subr.mxu0 0.0
  %1376 = vmatpush1.msra.mxu0 %v1362
  %1377 = vmatprep.subr.mxu0 0.0
  %1378 = vmatpush1.msra.mxu0 %v1361
  %1379 = vmatprep.subr.mxu0 0.0
  %1380 = vmatpush1.msra.mxu0 %v1360
  %1381 = vmatprep.subr.mxu0 0.0
  %1382 = vmatpush1.msra.mxu0 %v1359
  %1383 = vmatprep.subr.mxu0 0.0
  %1384 = vmatpush1.msra.mxu0 %v1358
  %1385 = vmatprep.subr.mxu0 0.0
  %1386 = vmatpush1.msra.mxu0 %v1357
  %1387 = vmatprep.subr.mxu0 0.0
  %1388 = vmatpush1.msra.mxu0 %v1356
  %1389 = vmatprep.subr.mxu0 0.0
  %1390 = vmatpush1.msra.mxu0 %v1355
  %1391 = vmatprep.subr.mxu0 0.0
  %1392 = vmatpush1.msra.mxu0 %v1354
  %1393 = vmatprep.subr.mxu0 0.0
  %1394 = vmatpush1.msra.mxu0 %v1353
  %1395 = vmatprep.subr.mxu0 0.0
  %1396 = vmatpush1.msra.mxu0 %v1352
  %1397 = vmatprep.subr.mxu0 0.0
  %1398 = vmatpush1.msra.mxu0 %v1351
  %1399 = vmatprep.subr.mxu0 0.0
  %1400 = vmatpush2.msra.mxu0 0.0
  %1401 = vmatprep.subr.mxu0 0.0
  %1402 = vmatpush2.msra.mxu0 0.0
  %1403 = vmatprep.subr.mxu0 0.0
  %1404 = vmatpush2.msra.mxu0 0.0
  %1405 = vmatprep.subr.mxu0 0.0
  %1406 = vmatpush2.msra.mxu0 0.0
  %1407 = vmatprep.subr.mxu0 0.0
  %1408 = vmatpush2.msra.mxu0 0.0
  %1409 = vmatprep.subr.mxu0 0.0
  %1410 = vmatpush2.msra.mxu0 0.0
  %1411 = vmatprep.subr.mxu0 0.0
  %1412 = vmatpush2.msra.mxu0 0.0
  %1413 = vmatprep.subr.mxu0 0.0
  %1414 = vmatpush2.msra.mxu0 0.0
  %1415 = vmatprep.subr.mxu0 0.0
  %1416 = vmatpush2.msra.mxu0 0.0
  %1417 = vmatprep.subr.mxu0 0.0
  %1418 = vmatpush2.msra.mxu0 0.0
  %1419 = vmatprep.subr.mxu0 0.0
  %1420 = vmatpush2.msra.mxu0 0.0
  %1421 = vmatprep.subr.mxu0 0.0
  %1422 = vmatpush2.msra.mxu0 0.0
  %1423 = vmatprep.subr.mxu0 0.0
  %1424 = vmatpush2.msra.mxu0 0.0
  %1425 = vmatprep.subr.mxu0 0.0
  %1426 = vmatpush2.msra.mxu0 0.0
  %1427 = vmatprep.subr.mxu0 0.0
  %1428 = vmatpush2.msra.mxu0 0.0
  %1429 = vmatprep.subr.mxu0 0.0
  %1430 = vmatpush2.msra.mxu0 0.0
  %1431 = vmatprep.mubr.f32.mxu0 0.0
  %1432 = vmatmul.mubr.f32.gmra.mxu0 %v1343
  %v1433 = vpop.f32.mrf.mxu0
  %v1434 = vadd.f32 0.0, %v1433
  %v1435 = vpop.f32.mrf.mxu0
  %1436 = vmatprep.mubr.f32.mxu0 0.0
  %1437 = vmatmul.mubr.f32.gmra.mxu0 %v1344
  %v1438 = vpop.f32.mrf.mxu0
  %v1439 = vadd.f32 0.0, %v1438
  %v1440 = vpop.f32.mrf.mxu0
  %1441 = vmatprep.mubr.f32.mxu0 0.0
  %1442 = vmatmul.mubr.f32.gmra.mxu0 %v1345
  %v1443 = vpop.f32.mrf.mxu0
  %v1444 = vadd.f32 0.0, %v1443
  %v1445 = vpop.f32.mrf.mxu0
  %1446 = vmatprep.mubr.f32.mxu0 0.0
  %1447 = vmatmul.mubr.f32.gmra.mxu0 %v1346
  %v1448 = vpop.f32.mrf.mxu0
  %v1449 = vadd.f32 0.0, %v1448
  %v1450 = vpop.f32.mrf.mxu0
  %1451 = vmatprep.mubr.f32.mxu0 0.0
  %1452 = vmatmul.mubr.f32.gmra.mxu0 %v1347
  %v1453 = vpop.f32.mrf.mxu0
  %v1454 = vadd.f32 0.0, %v1453
  %v1455 = vpop.f32.mrf.mxu0
  %1456 = vmatprep.mubr.f32.mxu0 0.0
  %1457 = vmatmul.mubr.f32.gmra.mxu0 %v1348
  %v1458 = vpop.f32.mrf.mxu0
  %v1459 = vadd.f32 0.0, %v1458
  %v1460 = vpop.f32.mrf.mxu0
  %1461 = vmatprep.mubr.f32.mxu0 0.0
  %1462 = vmatmul.mubr.f32.gmra.mxu0 %v1349
  %v1463 = vpop.f32.mrf.mxu0
  %v1464 = vadd.f32 0.0, %v1463
  %v1465 = vpop.f32.mrf.mxu0
  %1466 = vmatprep.mubr.f32.mxu0 0.0
  %1467 = vmatmul.mubr.f32.gmra.mxu0 %v1350
  %v1468 = vpop.f32.mrf.mxu0
  %v1469 = vadd.f32 0.0, %v1468
  %v1470 = vpop.f32.mrf.mxu0
  %1471 = vdwg.mxu0
  %v1472 = vld [vmem:[%s10] sm:$0xff]
  %v1473 = vld [vmem:[%s10 + $0x8] sm:$0xff]
  %v1474 = vld [vmem:[%s10 + $0x10] sm:$0xff]
  %v1475 = vld [vmem:[%s10 + $0x18] sm:$0xff]
  %v1476 = vld [vmem:[%s10 + $0x20] sm:$0xff]
  %v1477 = vld [vmem:[%s10 + $0x28] sm:$0xff]
  %v1478 = vld [vmem:[%s10 + $0x30] sm:$0xff]
  %v1479 = vld [vmem:[%s10 + $0x38] sm:$0xff]
  %v1480 = vld [vmem:[%s10 + $0x40] sm:$0xff]
  %v1481 = vld [vmem:[%s10 + $0x48] sm:$0xff]
  %v1482 = vld [vmem:[%s10 + $0x50] sm:$0xff]
  %v1483 = vld [vmem:[%s10 + $0x58] sm:$0xff]
  %v1484 = vld [vmem:[%s10 + $0x60] sm:$0xff]
  %v1485 = vld [vmem:[%s10 + $0x68] sm:$0xff]
  %v1486 = vld [vmem:[%s10 + $0x70] sm:$0xff]
  %v1487 = vld [vmem:[%s10 + $0x78] sm:$0xff]
  %1488 = vmatprep.subr.mxu0 0.0
  %1489 = vmatpush1.msra.mxu0 %v1487
  %1490 = vmatprep.subr.mxu0 0.0
  %1491 = vmatpush1.msra.mxu0 %v1486
  %1492 = vmatprep.subr.mxu0 0.0
  %1493 = vmatpush1.msra.mxu0 %v1485
  %1494 = vmatprep.subr.mxu0 0.0
  %1495 = vmatpush1.msra.mxu0 %v1484
  %1496 = vmatprep.subr.mxu0 0.0
  %1497 = vmatpush1.msra.mxu0 %v1483
  %1498 = vmatprep.subr.mxu0 0.0
  %1499 = vmatpush1.msra.mxu0 %v1482
  %1500 = vmatprep.subr.mxu0 0.0
  %1501 = vmatpush1.msra.mxu0 %v1481
  %1502 = vmatprep.subr.mxu0 0.0
  %1503 = vmatpush1.msra.mxu0 %v1480
  %1504 = vmatprep.subr.mxu0 0.0
  %1505 = vmatpush1.msra.mxu0 %v1479
  %1506 = vmatprep.subr.mxu0 0.0
  %1507 = vmatpush1.msra.mxu0 %v1478
  %1508 = vmatprep.subr.mxu0 0.0
  %1509 = vmatpush1.msra.mxu0 %v1477
  %1510 = vmatprep.subr.mxu0 0.0
  %1511 = vmatpush1.msra.mxu0 %v1476
  %1512 = vmatprep.subr.mxu0 0.0
  %1513 = vmatpush1.msra.mxu0 %v1475
  %1514 = vmatprep.subr.mxu0 0.0
  %1515 = vmatpush1.msra.mxu0 %v1474
  %1516 = vmatprep.subr.mxu0 0.0
  %1517 = vmatpush1.msra.mxu0 %v1473
  %1518 = vmatprep.subr.mxu0 0.0
  %1519 = vmatpush1.msra.mxu0 %v1472
  %1520 = vmatprep.subr.mxu0 0.0
  %1521 = vmatpush2.msra.mxu0 0.0
  %1522 = vmatprep.subr.mxu0 0.0
  %1523 = vmatpush2.msra.mxu0 0.0
  %1524 = vmatprep.subr.mxu0 0.0
  %1525 = vmatpush2.msra.mxu0 0.0
  %1526 = vmatprep.subr.mxu0 0.0
  %1527 = vmatpush2.msra.mxu0 0.0
  %1528 = vmatprep.subr.mxu0 0.0
  %1529 = vmatpush2.msra.mxu0 0.0
  %1530 = vmatprep.subr.mxu0 0.0
  %1531 = vmatpush2.msra.mxu0 0.0
  %1532 = vmatprep.subr.mxu0 0.0
  %1533 = vmatpush2.msra.mxu0 0.0
  %1534 = vmatprep.subr.mxu0 0.0
  %1535 = vmatpush2.msra.mxu0 0.0
  %1536 = vmatprep.subr.mxu0 0.0
  %1537 = vmatpush2.msra.mxu0 0.0
  %1538 = vmatprep.subr.mxu0 0.0
  %1539 = vmatpush2.msra.mxu0 0.0
  %1540 = vmatprep.subr.mxu0 0.0
  %1541 = vmatpush2.msra.mxu0 0.0
  %1542 = vmatprep.subr.mxu0 0.0
  %1543 = vmatpush2.msra.mxu0 0.0
  %1544 = vmatprep.subr.mxu0 0.0
  %1545 = vmatpush2.msra.mxu0 0.0
  %1546 = vmatprep.subr.mxu0 0.0
  %1547 = vmatpush2.msra.mxu0 0.0
  %1548 = vmatprep.subr.mxu0 0.0
  %1549 = vmatpush2.msra.mxu0 0.0
  %1550 = vmatprep.subr.mxu0 0.0
  %1551 = vmatpush2.msra.mxu0 0.0
  %1552 = vmatprep.mubr.f32.mxu0 0.0
  %1553 = vmatmul.mubr.f32.gmra.mxu0 %v1343
  %v1554 = vpop.f32.mrf.mxu0
  %v1555 = vadd.f32 0.0, %v1554
  %v1556 = vpop.f32.mrf.mxu0
  %1557 = vmatprep.mubr.f32.mxu0 0.0
  %1558 = vmatmul.mubr.f32.gmra.mxu0 %v1344
  %v1559 = vpop.f32.mrf.mxu0
  %v1560 = vadd.f32 0.0, %v1559
  %v1561 = vpop.f32.mrf.mxu0
  %1562 = vmatprep.mubr.f32.mxu0 0.0
  %1563 = vmatmul.mubr.f32.gmra.mxu0 %v1345
  %v1564 = vpop.f32.mrf.mxu0
  %v1565 = vadd.f32 0.0, %v1564
  %v1566 = vpop.f32.mrf.mxu0
  %1567 = vmatprep.mubr.f32.mxu0 0.0
  %1568 = vmatmul.mubr.f32.gmra.mxu0 %v1346
  %v1569 = vpop.f32.mrf.mxu0
  %v1570 = vadd.f32 0.0, %v1569
  %v1571 = vpop.f32.mrf.mxu0
  %1572 = vmatprep.mubr.f32.mxu0 0.0
  %1573 = vmatmul.mubr.f32.gmra.mxu0 %v1347
  %v1574 = vpop.f32.mrf.mxu0
  %v1575 = vadd.f32 0.0, %v1574
  %v1576 = vpop.f32.mrf.mxu0
  %1577 = vmatprep.mubr.f32.mxu0 0.0
  %1578 = vmatmul.mubr.f32.gmra.mxu0 %v1348
  %v1579 = vpop.f32.mrf.mxu0
  %v1580 = vadd.f32 0.0, %v1579
  %v1581 = vpop.f32.mrf.mxu0
  %1582 = vmatprep.mubr.f32.mxu0 0.0
  %1583 = vmatmul.mubr.f32.gmra.mxu0 %v1349
  %v1584 = vpop.f32.mrf.mxu0
  %v1585 = vadd.f32 0.0, %v1584
  %v1586 = vpop.f32.mrf.mxu0
  %1587 = vmatprep.mubr.f32.mxu0 0.0
  %1588 = vmatmul.mubr.f32.gmra.mxu0 %v1350
  %v1589 = vpop.f32.mrf.mxu0
  %v1590 = vadd.f32 0.0, %v1589
  %v1591 = vpop.f32.mrf.mxu0
  %1592 = vdwg.mxu0
  %v1593 = vld [vmem:[%s11] sm:$0xff]
  %v1594 = vld [vmem:[%s11 + $0x8] sm:$0xff]
  %v1595 = vld [vmem:[%s11 + $0x10] sm:$0xff]
  %v1596 = vld [vmem:[%s11 + $0x18] sm:$0xff]
  %v1597 = vld [vmem:[%s12] sm:$0xff]
  %v1598 = vld [vmem:[%s12 + $0x8] sm:$0xff]
  %v1599 = vld [vmem:[%s12 + $0x10] sm:$0xff]
  %v1600 = vld [vmem:[%s12 + $0x18] sm:$0xff]
  %1609 = vrot.lane.b32.xlu0 %v1555, 124
  %v1610 = vpop.permute.xlu0 %1609
  %1611 = vrot.lane.b32.xlu0 %v1560, 124
  %v1612 = vpop.permute.xlu0 %1611
  %1613 = vrot.lane.b32.xlu0 %v1565, 124
  %v1614 = vpop.permute.xlu0 %1613
  %1615 = vrot.lane.b32.xlu0 %v1570, 124
  %v1616 = vpop.permute.xlu0 %1615
  %1617 = vrot.lane.b32.xlu0 %v1575, 124
  %v1618 = vpop.permute.xlu0 %1617
  %1619 = vrot.lane.b32.xlu0 %v1580, 124
  %v1620 = vpop.permute.xlu0 %1619
  %1621 = vrot.lane.b32.xlu0 %v1585, 124
  %v1622 = vpop.permute.xlu0 %1621
  %1623 = vrot.lane.b32.xlu0 %v1590, 124
  %v1624 = vpop.permute.xlu0 %1623
  %1633 = vxpose.xlu0.b32.start [1/16] %v1610, 128
  %1634 = vxpose.xlu0.b32.cont [2/16] %v1612, 128
  %1635 = vxpose.xlu0.b32.cont [3/16] %v1614, 128
  %1636 = vxpose.xlu0.b32.cont [4/16] %v1616, 128
  %1637 = vxpose.xlu0.b32.cont [5/16] %v1618, 128
  %1638 = vxpose.xlu0.b32.cont [6/16] %v1620, 128
  %1639 = vxpose.xlu0.b32.cont [7/16] %v1622, 128
  %1640 = vxpose.xlu0.b32.cont [8/16] %v1624, 128
  %1641 = vxpose.xlu0.b32.cont [9/16] 0.0, 128
  %1642 = vxpose.xlu0.b32.cont [10/16] 0.0, 128
  %1643 = vxpose.xlu0.b32.cont [11/16] 0.0, 128
  %1644 = vxpose.xlu0.b32.cont [12/16] 0.0, 128
  %1645 = vxpose.xlu0.b32.cont [13/16] 0.0, 128
  %1646 = vxpose.xlu0.b32.cont [14/16] 0.0, 128
  %1647 = vxpose.xlu0.b32.cont [15/16] 0.0, 128
  %1648 = vxpose.xlu0.b32.end [16/16] 0.0, 128
  %v1649 = vpop.trf.xlu0
  %v1650 = vpop.trf.xlu0
  %v1651 = vpop.trf.xlu0
  %v1652 = vpop.trf.xlu0
  %v1653 = vpop.trf.xlu0
  %v1654 = vpop.trf.xlu0
  %v1655 = vpop.trf.xlu0
  %v1656 = vpop.trf.xlu0
  %v1657 = vpop.trf.xlu0
  %v1658 = vpop.trf.xlu0
  %v1659 = vpop.trf.xlu0
  %v1660 = vpop.trf.xlu0
  %v1661 = vpop.trf.xlu0
  %v1662 = vpop.trf.xlu0
  %v1663 = vpop.trf.xlu0
  %v1664 = vpop.trf.xlu0
  %1665 = vset.pattern.permute.xlu0 0
  %1666 = vperm.xlu0 %1665, %v1555
  %v1667 = vpop.permute.xlu0 %1666
  %1669 = vset.pattern.permute.xlu0 0
  %1670 = vperm.xlu0 %1669, %v1560
  %v1671 = vpop.permute.xlu0 %1670
  %1673 = vset.pattern.permute.xlu0 0
  %1674 = vperm.xlu0 %1673, %v1565
  %v1675 = vpop.permute.xlu0 %1674
  %1677 = vset.pattern.permute.xlu0 0
  %1678 = vperm.xlu0 %1677, %v1570
  %v1679 = vpop.permute.xlu0 %1678
  %1681 = vset.pattern.permute.xlu0 0
  %1682 = vperm.xlu0 %1681, %v1575
  %v1683 = vpop.permute.xlu0 %1682
  %1685 = vset.pattern.permute.xlu0 0
  %1686 = vperm.xlu0 %1685, %v1580
  %v1687 = vpop.permute.xlu0 %1686
  %1689 = vset.pattern.permute.xlu0 0
  %1690 = vperm.xlu0 %1689, %v1585
  %v1691 = vpop.permute.xlu0 %1690
  %1693 = vset.pattern.permute.xlu0 0
  %1694 = vperm.xlu0 %1693, %v1590
  %v1695 = vpop.permute.xlu0 %1694
  %v1697 = vlaneseq
  %v1698 = vshrl.u32 %v1697, 7
  %v1699 = vsub.s32 0, %v1698
  %v1700 = vrot.slane %v1649, %v1699
  %v1701 = vadd.f32 %v1667, %v1700
  %v1702 = vadd.f32 %v1671, %v1700
  %v1703 = vadd.f32 %v1675, %v1700
  %v1704 = vadd.f32 %v1679, %v1700
  %v1705 = vadd.f32 %v1683, %v1700
  %v1706 = vadd.f32 %v1687, %v1700
  %v1707 = vadd.f32 %v1691, %v1700
  %v1708 = vadd.f32 %v1695, %v1700
  %vm1709 = vcmp.gt.f32.partialorder %v1701, 0.0
  %vm1710 = vcmp.gt.f32.partialorder %v1702, 0.0
  %vm1711 = vcmp.gt.f32.partialorder %v1703, 0.0
  %vm1712 = vcmp.gt.f32.partialorder %v1704, 0.0
  %vm1713 = vcmp.gt.f32.partialorder %v1705, 0.0
  %vm1714 = vcmp.gt.f32.partialorder %v1706, 0.0
  %vm1715 = vcmp.gt.f32.partialorder %v1707, 0.0
  %vm1716 = vcmp.gt.f32.partialorder %v1708, 0.0
  %v1717 = vmul.f32 %v1701, 0.2
  %v1718 = vmul.f32 %v1702, 0.2
  %v1719 = vmul.f32 %v1703, 0.2
  %v1720 = vmul.f32 %v1704, 0.2
  %v1721 = vmul.f32 %v1705, 0.2
  %v1722 = vmul.f32 %v1706, 0.2
  %v1723 = vmul.f32 %v1707, 0.2
  %v1724 = vmul.f32 %v1708, 0.2
  %v1725 = vsel %vm1709, %v1701, %v1717
  %v1726 = vsel %vm1710, %v1702, %v1718
  %v1727 = vsel %vm1711, %v1703, %v1719
  %v1728 = vsel %vm1712, %v1704, %v1720
  %v1729 = vsel %vm1713, %v1705, %v1721
  %v1730 = vsel %vm1714, %v1706, %v1722
  %v1731 = vsel %vm1715, %v1707, %v1723
  %v1732 = vsel %vm1716, %v1708, %v1724
  %v1733 = vsel %vm667, %v1725, -inf
  %1734 = vmax.xlane.f32.xlu0 %v1733
  %v1735 = vpop.xlane.xlu0 %1734
  %v1736 = vsel %vm667, %v1726, -inf
  %1737 = vmax.xlane.f32.xlu0 %v1736
  %v1738 = vpop.xlane.xlu0 %1737
  %v1739 = vsel %vm667, %v1727, -inf
  %1740 = vmax.xlane.f32.xlu0 %v1739
  %v1741 = vpop.xlane.xlu0 %1740
  %v1742 = vsel %vm667, %v1728, -inf
  %1743 = vmax.xlane.f32.xlu0 %v1742
  %v1744 = vpop.xlane.xlu0 %1743
  %v1745 = vsel %vm667, %v1729, -inf
  %1746 = vmax.xlane.f32.xlu0 %v1745
  %v1747 = vpop.xlane.xlu0 %1746
  %v1748 = vsel %vm667, %v1730, -inf
  %1749 = vmax.xlane.f32.xlu0 %v1748
  %v1750 = vpop.xlane.xlu0 %1749
  %v1751 = vsel %vm667, %v1731, -inf
  %1752 = vmax.xlane.f32.xlu0 %v1751
  %v1753 = vpop.xlane.xlu0 %1752
  %v1754 = vsel %vm667, %v1732, -inf
  %1755 = vmax.xlane.f32.xlu0 %v1754
  %v1756 = vpop.xlane.xlu0 %1755
  %v1757 = vsub.f32 %v1725, %v1735
  %v1758 = vsub.f32 %v1726, %v1738
  %v1759 = vsub.f32 %v1727, %v1741
  %v1760 = vsub.f32 %v1728, %v1744
  %v1761 = vsub.f32 %v1729, %v1747
  %v1762 = vsub.f32 %v1730, %v1750
  %v1763 = vsub.f32 %v1731, %v1753
  %v1764 = vsub.f32 %v1732, %v1756
  %v1765 = vmul.f32 %v1757, 1.442695
  %v1766 = vpow.pop %v1765
  %v1767 = vmul.f32 %v1758, 1.442695
  %v1768 = vpow.pop %v1767
  %v1769 = vmul.f32 %v1759, 1.442695
  %v1770 = vpow.pop %v1769
  %v1771 = vmul.f32 %v1760, 1.442695
  %v1772 = vpow.pop %v1771
  %v1773 = vmul.f32 %v1761, 1.442695
  %v1774 = vpow.pop %v1773
  %v1775 = vmul.f32 %v1762, 1.442695
  %v1776 = vpow.pop %v1775
  %v1777 = vmul.f32 %v1763, 1.442695
  %v1778 = vpow.pop %v1777
  %v1779 = vmul.f32 %v1764, 1.442695
  %v1780 = vpow.pop %v1779
  %v1781 = vsel %vm667, %v1766, 0.0
  %1782 = vadd.xlane.f32.xlu0 %v1781
  %v1783 = vpop.xlane.xlu0 %1782
  %v1784 = vsel %vm667, %v1768, 0.0
  %1785 = vadd.xlane.f32.xlu0 %v1784
  %v1786 = vpop.xlane.xlu0 %1785
  %v1787 = vsel %vm667, %v1770, 0.0
  %1788 = vadd.xlane.f32.xlu0 %v1787
  %v1789 = vpop.xlane.xlu0 %1788
  %v1790 = vsel %vm667, %v1772, 0.0
  %1791 = vadd.xlane.f32.xlu0 %v1790
  %v1792 = vpop.xlane.xlu0 %1791
  %v1793 = vsel %vm667, %v1774, 0.0
  %1794 = vadd.xlane.f32.xlu0 %v1793
  %v1795 = vpop.xlane.xlu0 %1794
  %v1796 = vsel %vm667, %v1776, 0.0
  %1797 = vadd.xlane.f32.xlu0 %v1796
  %v1798 = vpop.xlane.xlu0 %1797
  %v1799 = vsel %vm667, %v1778, 0.0
  %1800 = vadd.xlane.f32.xlu0 %v1799
  %v1801 = vpop.xlane.xlu0 %1800
  %v1802 = vsel %vm667, %v1780, 0.0
  %1803 = vadd.xlane.f32.xlu0 %v1802
  %v1804 = vpop.xlane.xlu0 %1803
  %v1805 = vrcp.pop %v1783
  %v1806 = vrcp.pop %v1786
  %v1807 = vrcp.pop %v1789
  %v1808 = vrcp.pop %v1792
  %v1809 = vrcp.pop %v1795
  %v1810 = vrcp.pop %v1798
  %v1811 = vrcp.pop %v1801
  %v1812 = vrcp.pop %v1804
  %v1813 = vmul.f32 %v1766, %v1805
  %v1814 = vmul.f32 %v1768, %v1806
  %v1815 = vmul.f32 %v1770, %v1807
  %v1816 = vmul.f32 %v1772, %v1808
  %v1817 = vmul.f32 %v1774, %v1809
  %v1818 = vmul.f32 %v1776, %v1810
  %v1819 = vmul.f32 %v1778, %v1811
  %v1820 = vmul.f32 %v1780, %v1812
  %v1822 = vsel %vm667, %v1813, 0
  %v1825 = vsel %vm667, %v1814, 0
  %v1828 = vsel %vm667, %v1815, 0
  %v1831 = vsel %vm667, %v1816, 0
  %v1834 = vsel %vm667, %v1817, 0
  %v1837 = vsel %vm667, %v1818, 0
  %v1840 = vsel %vm667, %v1819, 0
  %v1843 = vsel %vm667, %v1820, 0
  %1845 = vmatprep.subr.mxu0 0.0
  %1846 = vmatpush1.msra.mxu0 0.0
  %1847 = vmatprep.subr.mxu0 0.0
  %1848 = vmatpush1.msra.mxu0 0.0
  %1849 = vmatprep.subr.mxu0 0.0
  %1850 = vmatpush1.msra.mxu0 0.0
  %1851 = vmatprep.subr.mxu0 0.0
  %1852 = vmatpush1.msra.mxu0 0.0
  %1853 = vmatprep.subr.mxu0 0.0
  %1854 = vmatpush1.msra.mxu0 0.0
  %1855 = vmatprep.subr.mxu0 0.0
  %1856 = vmatpush1.msra.mxu0 0.0
  %1857 = vmatprep.subr.mxu0 0.0
  %1858 = vmatpush1.msra.mxu0 0.0
  %1859 = vmatprep.subr.mxu0 0.0
  %1860 = vmatpush1.msra.mxu0 0.0
  %1861 = vmatprep.subr.mxu0 0.0
  %1862 = vmatpush1.msra.mxu0 %v1469
  %1863 = vmatprep.subr.mxu0 0.0
  %1864 = vmatpush1.msra.mxu0 %v1464
  %1865 = vmatprep.subr.mxu0 0.0
  %1866 = vmatpush1.msra.mxu0 %v1459
  %1867 = vmatprep.subr.mxu0 0.0
  %1868 = vmatpush1.msra.mxu0 %v1454
  %1869 = vmatprep.subr.mxu0 0.0
  %1870 = vmatpush1.msra.mxu0 %v1449
  %1871 = vmatprep.subr.mxu0 0.0
  %1872 = vmatpush1.msra.mxu0 %v1444
  %1873 = vmatprep.subr.mxu0 0.0
  %1874 = vmatpush1.msra.mxu0 %v1439
  %1875 = vmatprep.subr.mxu0 0.0
  %1876 = vmatpush1.msra.mxu0 %v1434
  %1877 = vmatprep.subr.mxu0 0.0
  %1878 = vmatpush2.msra.mxu0 0.0
  %1879 = vmatprep.subr.mxu0 0.0
  %1880 = vmatpush2.msra.mxu0 0.0
  %1881 = vmatprep.subr.mxu0 0.0
  %1882 = vmatpush2.msra.mxu0 0.0
  %1883 = vmatprep.subr.mxu0 0.0
  %1884 = vmatpush2.msra.mxu0 0.0
  %1885 = vmatprep.subr.mxu0 0.0
  %1886 = vmatpush2.msra.mxu0 0.0
  %1887 = vmatprep.subr.mxu0 0.0
  %1888 = vmatpush2.msra.mxu0 0.0
  %1889 = vmatprep.subr.mxu0 0.0
  %1890 = vmatpush2.msra.mxu0 0.0
  %1891 = vmatprep.subr.mxu0 0.0
  %1892 = vmatpush2.msra.mxu0 0.0
  %1893 = vmatprep.subr.mxu0 0.0
  %1894 = vmatpush2.msra.mxu0 0.0
  %1895 = vmatprep.subr.mxu0 0.0
  %1896 = vmatpush2.msra.mxu0 0.0
  %1897 = vmatprep.subr.mxu0 0.0
  %1898 = vmatpush2.msra.mxu0 0.0
  %1899 = vmatprep.subr.mxu0 0.0
  %1900 = vmatpush2.msra.mxu0 0.0
  %1901 = vmatprep.subr.mxu0 0.0
  %1902 = vmatpush2.msra.mxu0 0.0
  %1903 = vmatprep.subr.mxu0 0.0
  %1904 = vmatpush2.msra.mxu0 0.0
  %1905 = vmatprep.subr.mxu0 0.0
  %1906 = vmatpush2.msra.mxu0 0.0
  %1907 = vmatprep.subr.mxu0 0.0
  %1908 = vmatpush2.msra.mxu0 0.0
  %1909 = vmatprep.mubr.f32.mxu0 0.0
  %1910 = vmatmul.mubr.f32.gmra.mxu0 %v1822
  %v1911 = vpop.f32.mrf.mxu0
  %v1912 = vadd.f32 0.0, %v1911
  %v1913 = vpop.f32.mrf.mxu0
  %1914 = vmatprep.mubr.f32.mxu0 0.0
  %1915 = vmatmul.mubr.f32.gmra.mxu0 %v1825
  %v1916 = vpop.f32.mrf.mxu0
  %v1917 = vadd.f32 0.0, %v1916
  %v1918 = vpop.f32.mrf.mxu0
  %1919 = vmatprep.mubr.f32.mxu0 0.0
  %1920 = vmatmul.mubr.f32.gmra.mxu0 %v1828
  %v1921 = vpop.f32.mrf.mxu0
  %v1922 = vadd.f32 0.0, %v1921
  %v1923 = vpop.f32.mrf.mxu0
  %1924 = vmatprep.mubr.f32.mxu0 0.0
  %1925 = vmatmul.mubr.f32.gmra.mxu0 %v1831
  %v1926 = vpop.f32.mrf.mxu0
  %v1927 = vadd.f32 0.0, %v1926
  %v1928 = vpop.f32.mrf.mxu0
  %1929 = vmatprep.mubr.f32.mxu0 0.0
  %1930 = vmatmul.mubr.f32.gmra.mxu0 %v1834
  %v1931 = vpop.f32.mrf.mxu0
  %v1932 = vadd.f32 0.0, %v1931
  %v1933 = vpop.f32.mrf.mxu0
  %1934 = vmatprep.mubr.f32.mxu0 0.0
  %1935 = vmatmul.mubr.f32.gmra.mxu0 %v1837
  %v1936 = vpop.f32.mrf.mxu0
  %v1937 = vadd.f32 0.0, %v1936
  %v1938 = vpop.f32.mrf.mxu0
  %1939 = vmatprep.mubr.f32.mxu0 0.0
  %1940 = vmatmul.mubr.f32.gmra.mxu0 %v1840
  %v1941 = vpop.f32.mrf.mxu0
  %v1942 = vadd.f32 0.0, %v1941
  %v1943 = vpop.f32.mrf.mxu0
  %1944 = vmatprep.mubr.f32.mxu0 0.0
  %1945 = vmatmul.mubr.f32.gmra.mxu0 %v1843
  %v1946 = vpop.f32.mrf.mxu0
  %v1947 = vadd.f32 0.0, %v1946
  %v1948 = vpop.f32.mrf.mxu0
  %1949 = vdwg.mxu0
  %vm1950 = vcmp.gt.f32.partialorder %v1912, 0.0
  %vm1951 = vcmp.gt.f32.partialorder %v1917, 0.0
  %vm1952 = vcmp.gt.f32.partialorder %v1922, 0.0
  %vm1953 = vcmp.gt.f32.partialorder %v1927, 0.0
  %vm1954 = vcmp.gt.f32.partialorder %v1932, 0.0
  %vm1955 = vcmp.gt.f32.partialorder %v1937, 0.0
  %vm1956 = vcmp.gt.f32.partialorder %v1942, 0.0
  %vm1957 = vcmp.gt.f32.partialorder %v1947, 0.0
  %v1958 = vmin.f32 %v1912, 0.0
  %v1959 = vmin.f32 %v1917, 0.0
  %v1960 = vmin.f32 %v1922, 0.0
  %v1961 = vmin.f32 %v1927, 0.0
  %v1962 = vmin.f32 %v1932, 0.0
  %v1963 = vmin.f32 %v1937, 0.0
  %v1964 = vmin.f32 %v1942, 0.0
  %v1965 = vmin.f32 %v1947, 0.0
  %v1966 = vmul.f32 %v1958, 1.442695
  %v1967 = vpow.pop %v1966
  %v1968 = vmul.f32 %v1959, 1.442695
  %v1969 = vpow.pop %v1968
  %v1970 = vmul.f32 %v1960, 1.442695
  %v1971 = vpow.pop %v1970
  %v1972 = vmul.f32 %v1961, 1.442695
  %v1973 = vpow.pop %v1972
  %v1974 = vmul.f32 %v1962, 1.442695
  %v1975 = vpow.pop %v1974
  %v1976 = vmul.f32 %v1963, 1.442695
  %v1977 = vpow.pop %v1976
  %v1978 = vmul.f32 %v1964, 1.442695
  %v1979 = vpow.pop %v1978
  %v1980 = vmul.f32 %v1965, 1.442695
  %v1981 = vpow.pop %v1980
  %v1982 = vsub.f32 %v1967, 1.0
  %v1983 = vsub.f32 %v1969, 1.0
  %v1984 = vsub.f32 %v1971, 1.0
  %v1985 = vsub.f32 %v1973, 1.0
  %v1986 = vsub.f32 %v1975, 1.0
  %v1987 = vsub.f32 %v1977, 1.0
  %v1988 = vsub.f32 %v1979, 1.0
  %v1989 = vsub.f32 %v1981, 1.0
  %v1990 = vsel %vm1950, %v1912, %v1982
  %v1991 = vsel %vm1951, %v1917, %v1983
  %v1992 = vsel %vm1952, %v1922, %v1984
  %v1993 = vsel %vm1953, %v1927, %v1985
  %v1994 = vsel %vm1954, %v1932, %v1986
  %v1995 = vsel %vm1955, %v1937, %v1987
  %v1996 = vsel %vm1956, %v1942, %v1988
  %v1997 = vsel %vm1957, %v1947, %v1989
  %1998 = vrot.lane.b32.xlu0 %v1555, 123
  %v1999 = vpop.permute.xlu0 %1998
  %2000 = vrot.lane.b32.xlu0 %v1560, 123
  %v2001 = vpop.permute.xlu0 %2000
  %2002 = vrot.lane.b32.xlu0 %v1565, 123
  %v2003 = vpop.permute.xlu0 %2002
  %2004 = vrot.lane.b32.xlu0 %v1570, 123
  %v2005 = vpop.permute.xlu0 %2004
  %2006 = vrot.lane.b32.xlu0 %v1575, 123
  %v2007 = vpop.permute.xlu0 %2006
  %2008 = vrot.lane.b32.xlu0 %v1580, 123
  %v2009 = vpop.permute.xlu0 %2008
  %2010 = vrot.lane.b32.xlu0 %v1585, 123
  %v2011 = vpop.permute.xlu0 %2010
  %2012 = vrot.lane.b32.xlu0 %v1590, 123
  %v2013 = vpop.permute.xlu0 %2012
  %2022 = vxpose.xlu0.b32.start [1/16] %v1999, 128
  %2023 = vxpose.xlu0.b32.cont [2/16] %v2001, 128
  %2024 = vxpose.xlu0.b32.cont [3/16] %v2003, 128
  %2025 = vxpose.xlu0.b32.cont [4/16] %v2005, 128
  %2026 = vxpose.xlu0.b32.cont [5/16] %v2007, 128
  %2027 = vxpose.xlu0.b32.cont [6/16] %v2009, 128
  %2028 = vxpose.xlu0.b32.cont [7/16] %v2011, 128
  %2029 = vxpose.xlu0.b32.cont [8/16] %v2013, 128
  %2030 = vxpose.xlu0.b32.cont [9/16] 0.0, 128
  %2031 = vxpose.xlu0.b32.cont [10/16] 0.0, 128
  %2032 = vxpose.xlu0.b32.cont [11/16] 0.0, 128
  %2033 = vxpose.xlu0.b32.cont [12/16] 0.0, 128
  %2034 = vxpose.xlu0.b32.cont [13/16] 0.0, 128
  %2035 = vxpose.xlu0.b32.cont [14/16] 0.0, 128
  %2036 = vxpose.xlu0.b32.cont [15/16] 0.0, 128
  %2037 = vxpose.xlu0.b32.end [16/16] 0.0, 128
  %v2038 = vpop.trf.xlu0
  %v2039 = vpop.trf.xlu0
  %v2040 = vpop.trf.xlu0
  %v2041 = vpop.trf.xlu0
  %v2042 = vpop.trf.xlu0
  %v2043 = vpop.trf.xlu0
  %v2044 = vpop.trf.xlu0
  %v2045 = vpop.trf.xlu0
  %v2046 = vpop.trf.xlu0
  %v2047 = vpop.trf.xlu0
  %v2048 = vpop.trf.xlu0
  %v2049 = vpop.trf.xlu0
  %v2050 = vpop.trf.xlu0
  %v2051 = vpop.trf.xlu0
  %v2052 = vpop.trf.xlu0
  %v2053 = vpop.trf.xlu0
  %2054 = vset.pattern.permute.xlu0 1
  %2055 = vperm.xlu0 %2054, %v1555
  %v2056 = vpop.permute.xlu0 %2055
  %2058 = vset.pattern.permute.xlu0 1
  %2059 = vperm.xlu0 %2058, %v1560
  %v2060 = vpop.permute.xlu0 %2059
  %2062 = vset.pattern.permute.xlu0 1
  %2063 = vperm.xlu0 %2062, %v1565
  %v2064 = vpop.permute.xlu0 %2063
  %2066 = vset.pattern.permute.xlu0 1
  %2067 = vperm.xlu0 %2066, %v1570
  %v2068 = vpop.permute.xlu0 %2067
  %2070 = vset.pattern.permute.xlu0 1
  %2071 = vperm.xlu0 %2070, %v1575
  %v2072 = vpop.permute.xlu0 %2071
  %2074 = vset.pattern.permute.xlu0 1
  %2075 = vperm.xlu0 %2074, %v1580
  %v2076 = vpop.permute.xlu0 %2075
  %2078 = vset.pattern.permute.xlu0 1
  %2079 = vperm.xlu0 %2078, %v1585
  %v2080 = vpop.permute.xlu0 %2079
  %2082 = vset.pattern.permute.xlu0 1
  %2083 = vperm.xlu0 %2082, %v1590
  %v2084 = vpop.permute.xlu0 %2083
  %v2086 = vlaneseq
  %v2087 = vshrl.u32 %v2086, 7
  %v2088 = vsub.s32 0, %v2087
  %v2089 = vrot.slane %v2038, %v2088
  %v2090 = vadd.f32 %v2056, %v2089
  %v2091 = vadd.f32 %v2060, %v2089
  %v2092 = vadd.f32 %v2064, %v2089
  %v2093 = vadd.f32 %v2068, %v2089
  %v2094 = vadd.f32 %v2072, %v2089
  %v2095 = vadd.f32 %v2076, %v2089
  %v2096 = vadd.f32 %v2080, %v2089
  %v2097 = vadd.f32 %v2084, %v2089
  %vm2098 = vcmp.gt.f32.partialorder %v2090, 0.0
  %vm2099 = vcmp.gt.f32.partialorder %v2091, 0.0
  %vm2100 = vcmp.gt.f32.partialorder %v2092, 0.0
  %vm2101 = vcmp.gt.f32.partialorder %v2093, 0.0
  %vm2102 = vcmp.gt.f32.partialorder %v2094, 0.0
  %vm2103 = vcmp.gt.f32.partialorder %v2095, 0.0
  %vm2104 = vcmp.gt.f32.partialorder %v2096, 0.0
  %vm2105 = vcmp.gt.f32.partialorder %v2097, 0.0
  %v2106 = vmul.f32 %v2090, 0.2
  %v2107 = vmul.f32 %v2091, 0.2
  %v2108 = vmul.f32 %v2092, 0.2
  %v2109 = vmul.f32 %v2093, 0.2
  %v2110 = vmul.f32 %v2094, 0.2
  %v2111 = vmul.f32 %v2095, 0.2
  %v2112 = vmul.f32 %v2096, 0.2
  %v2113 = vmul.f32 %v2097, 0.2
  %v2114 = vsel %vm2098, %v2090, %v2106
  %v2115 = vsel %vm2099, %v2091, %v2107
  %v2116 = vsel %vm2100, %v2092, %v2108
  %v2117 = vsel %vm2101, %v2093, %v2109
  %v2118 = vsel %vm2102, %v2094, %v2110
  %v2119 = vsel %vm2103, %v2095, %v2111
  %v2120 = vsel %vm2104, %v2096, %v2112
  %v2121 = vsel %vm2105, %v2097, %v2113
  %v2122 = vsel %vm667, %v2114, -inf
  %2123 = vmax.xlane.f32.xlu0 %v2122
  %v2124 = vpop.xlane.xlu0 %2123
  %v2125 = vsel %vm667, %v2115, -inf
  %2126 = vmax.xlane.f32.xlu0 %v2125
  %v2127 = vpop.xlane.xlu0 %2126
  %v2128 = vsel %vm667, %v2116, -inf
  %2129 = vmax.xlane.f32.xlu0 %v2128
  %v2130 = vpop.xlane.xlu0 %2129
  %v2131 = vsel %vm667, %v2117, -inf
  %2132 = vmax.xlane.f32.xlu0 %v2131
  %v2133 = vpop.xlane.xlu0 %2132
  %v2134 = vsel %vm667, %v2118, -inf
  %2135 = vmax.xlane.f32.xlu0 %v2134
  %v2136 = vpop.xlane.xlu0 %2135
  %v2137 = vsel %vm667, %v2119, -inf
  %2138 = vmax.xlane.f32.xlu0 %v2137
  %v2139 = vpop.xlane.xlu0 %2138
  %v2140 = vsel %vm667, %v2120, -inf
  %2141 = vmax.xlane.f32.xlu0 %v2140
  %v2142 = vpop.xlane.xlu0 %2141
  %v2143 = vsel %vm667, %v2121, -inf
  %2144 = vmax.xlane.f32.xlu0 %v2143
  %v2145 = vpop.xlane.xlu0 %2144
  %v2146 = vsub.f32 %v2114, %v2124
  %v2147 = vsub.f32 %v2115, %v2127
  %v2148 = vsub.f32 %v2116, %v2130
  %v2149 = vsub.f32 %v2117, %v2133
  %v2150 = vsub.f32 %v2118, %v2136
  %v2151 = vsub.f32 %v2119, %v2139
  %v2152 = vsub.f32 %v2120, %v2142
  %v2153 = vsub.f32 %v2121, %v2145
  %v2154 = vmul.f32 %v2146, 1.442695
  %v2155 = vpow.pop %v2154
  %v2156 = vmul.f32 %v2147, 1.442695
  %v2157 = vpow.pop %v2156
  %v2158 = vmul.f32 %v2148, 1.442695
  %v2159 = vpow.pop %v2158
  %v2160 = vmul.f32 %v2149, 1.442695
  %v2161 = vpow.pop %v2160
  %v2162 = vmul.f32 %v2150, 1.442695
  %v2163 = vpow.pop %v2162
  %v2164 = vmul.f32 %v2151, 1.442695
  %v2165 = vpow.pop %v2164
  %v2166 = vmul.f32 %v2152, 1.442695
  %v2167 = vpow.pop %v2166
  %v2168 = vmul.f32 %v2153, 1.442695
  %v2169 = vpow.pop %v2168
  %v2170 = vsel %vm667, %v2155, 0.0
  %2171 = vadd.xlane.f32.xlu0 %v2170
  %v2172 = vpop.xlane.xlu0 %2171
  %v2173 = vsel %vm667, %v2157, 0.0
  %2174 = vadd.xlane.f32.xlu0 %v2173
  %v2175 = vpop.xlane.xlu0 %2174
  %v2176 = vsel %vm667, %v2159, 0.0
  %2177 = vadd.xlane.f32.xlu0 %v2176
  %v2178 = vpop.xlane.xlu0 %2177
  %v2179 = vsel %vm667, %v2161, 0.0
  %2180 = vadd.xlane.f32.xlu0 %v2179
  %v2181 = vpop.xlane.xlu0 %2180
  %v2182 = vsel %vm667, %v2163, 0.0
  %2183 = vadd.xlane.f32.xlu0 %v2182
  %v2184 = vpop.xlane.xlu0 %2183
  %v2185 = vsel %vm667, %v2165, 0.0
  %2186 = vadd.xlane.f32.xlu0 %v2185
  %v2187 = vpop.xlane.xlu0 %2186
  %v2188 = vsel %vm667, %v2167, 0.0
  %2189 = vadd.xlane.f32.xlu0 %v2188
  %v2190 = vpop.xlane.xlu0 %2189
  %v2191 = vsel %vm667, %v2169, 0.0
  %2192 = vadd.xlane.f32.xlu0 %v2191
  %v2193 = vpop.xlane.xlu0 %2192
  %v2194 = vrcp.pop %v2172
  %v2195 = vrcp.pop %v2175
  %v2196 = vrcp.pop %v2178
  %v2197 = vrcp.pop %v2181
  %v2198 = vrcp.pop %v2184
  %v2199 = vrcp.pop %v2187
  %v2200 = vrcp.pop %v2190
  %v2201 = vrcp.pop %v2193
  %v2202 = vmul.f32 %v2155, %v2194
  %v2203 = vmul.f32 %v2157, %v2195
  %v2204 = vmul.f32 %v2159, %v2196
  %v2205 = vmul.f32 %v2161, %v2197
  %v2206 = vmul.f32 %v2163, %v2198
  %v2207 = vmul.f32 %v2165, %v2199
  %v2208 = vmul.f32 %v2167, %v2200
  %v2209 = vmul.f32 %v2169, %v2201
  %2218 = vrot.lane.b32.xlu0 %v1434, 120
  %v2219 = vpop.permute.xlu0 %2218
  %2220 = vrot.lane.b32.xlu0 %v1439, 120
  %v2221 = vpop.permute.xlu0 %2220
  %2222 = vrot.lane.b32.xlu0 %v1444, 120
  %v2223 = vpop.permute.xlu0 %2222
  %2224 = vrot.lane.b32.xlu0 %v1449, 120
  %v2225 = vpop.permute.xlu0 %2224
  %2226 = vrot.lane.b32.xlu0 %v1454, 120
  %v2227 = vpop.permute.xlu0 %2226
  %2228 = vrot.lane.b32.xlu0 %v1459, 120
  %v2229 = vpop.permute.xlu0 %2228
  %2230 = vrot.lane.b32.xlu0 %v1464, 120
  %v2231 = vpop.permute.xlu0 %2230
  %2232 = vrot.lane.b32.xlu0 %v1469, 120
  %v2233 = vpop.permute.xlu0 %2232
  %v2243 = vsel %vm667, %v2202, 0
  %v2246 = vsel %vm667, %v2203, 0
  %v2249 = vsel %vm667, %v2204, 0
  %v2252 = vsel %vm667, %v2205, 0
  %v2255 = vsel %vm667, %v2206, 0
  %v2258 = vsel %vm667, %v2207, 0
  %v2261 = vsel %vm667, %v2208, 0
  %v2264 = vsel %vm667, %v2209, 0
  %2266 = vmatprep.subr.mxu0 0.0
  %2267 = vmatpush1.msra.mxu0 0.0
  %2268 = vmatprep.subr.mxu0 0.0
  %2269 = vmatpush1.msra.mxu0 0.0
  %2270 = vmatprep.subr.mxu0 0.0
  %2271 = vmatpush1.msra.mxu0 0.0
  %2272 = vmatprep.subr.mxu0 0.0
  %2273 = vmatpush1.msra.mxu0 0.0
  %2274 = vmatprep.subr.mxu0 0.0
  %2275 = vmatpush1.msra.mxu0 0.0
  %2276 = vmatprep.subr.mxu0 0.0
  %2277 = vmatpush1.msra.mxu0 0.0
  %2278 = vmatprep.subr.mxu0 0.0
  %2279 = vmatpush1.msra.mxu0 0.0
  %2280 = vmatprep.subr.mxu0 0.0
  %2281 = vmatpush1.msra.mxu0 0.0
  %2282 = vmatprep.subr.mxu0 0.0
  %2283 = vmatpush1.msra.mxu0 %v2233
  %2284 = vmatprep.subr.mxu0 0.0
  %2285 = vmatpush1.msra.mxu0 %v2231
  %2286 = vmatprep.subr.mxu0 0.0
  %2287 = vmatpush1.msra.mxu0 %v2229
  %2288 = vmatprep.subr.mxu0 0.0
  %2289 = vmatpush1.msra.mxu0 %v2227
  %2290 = vmatprep.subr.mxu0 0.0
  %2291 = vmatpush1.msra.mxu0 %v2225
  %2292 = vmatprep.subr.mxu0 0.0
  %2293 = vmatpush1.msra.mxu0 %v2223
  %2294 = vmatprep.subr.mxu0 0.0
  %2295 = vmatpush1.msra.mxu0 %v2221
  %2296 = vmatprep.subr.mxu0 0.0
  %2297 = vmatpush1.msra.mxu0 %v2219
  %2298 = vmatprep.subr.mxu0 0.0
  %2299 = vmatpush2.msra.mxu0 0.0
  %2300 = vmatprep.subr.mxu0 0.0
  %2301 = vmatpush2.msra.mxu0 0.0
  %2302 = vmatprep.subr.mxu0 0.0
  %2303 = vmatpush2.msra.mxu0 0.0
  %2304 = vmatprep.subr.mxu0 0.0
  %2305 = vmatpush2.msra.mxu0 0.0
  %2306 = vmatprep.subr.mxu0 0.0
  %2307 = vmatpush2.msra.mxu0 0.0
  %2308 = vmatprep.subr.mxu0 0.0
  %2309 = vmatpush2.msra.mxu0 0.0
  %2310 = vmatprep.subr.mxu0 0.0
  %2311 = vmatpush2.msra.mxu0 0.0
  %2312 = vmatprep.subr.mxu0 0.0
  %2313 = vmatpush2.msra.mxu0 0.0
  %2314 = vmatprep.subr.mxu0 0.0
  %2315 = vmatpush2.msra.mxu0 0.0
  %2316 = vmatprep.subr.mxu0 0.0
  %2317 = vmatpush2.msra.mxu0 0.0
  %2318 = vmatprep.subr.mxu0 0.0
  %2319 = vmatpush2.msra.mxu0 0.0
  %2320 = vmatprep.subr.mxu0 0.0
  %2321 = vmatpush2.msra.mxu0 0.0
  %2322 = vmatprep.subr.mxu0 0.0
  %2323 = vmatpush2.msra.mxu0 0.0
  %2324 = vmatprep.subr.mxu0 0.0
  %2325 = vmatpush2.msra.mxu0 0.0
  %2326 = vmatprep.subr.mxu0 0.0
  %2327 = vmatpush2.msra.mxu0 0.0
  %2328 = vmatprep.subr.mxu0 0.0
  %2329 = vmatpush2.msra.mxu0 0.0
  %2330 = vmatprep.mubr.f32.mxu0 0.0
  %2331 = vmatmul.mubr.f32.gmra.mxu0 %v2243
  %v2332 = vpop.f32.mrf.mxu0
  %v2333 = vadd.f32 0.0, %v2332
  %v2334 = vpop.f32.mrf.mxu0
  %2335 = vmatprep.mubr.f32.mxu0 0.0
  %2336 = vmatmul.mubr.f32.gmra.mxu0 %v2246
  %v2337 = vpop.f32.mrf.mxu0
  %v2338 = vadd.f32 0.0, %v2337
  %v2339 = vpop.f32.mrf.mxu0
  %2340 = vmatprep.mubr.f32.mxu0 0.0
  %2341 = vmatmul.mubr.f32.gmra.mxu0 %v2249
  %v2342 = vpop.f32.mrf.mxu0
  %v2343 = vadd.f32 0.0, %v2342
  %v2344 = vpop.f32.mrf.mxu0
  %2345 = vmatprep.mubr.f32.mxu0 0.0
  %2346 = vmatmul.mubr.f32.gmra.mxu0 %v2252
  %v2347 = vpop.f32.mrf.mxu0
  %v2348 = vadd.f32 0.0, %v2347
  %v2349 = vpop.f32.mrf.mxu0
  %2350 = vmatprep.mubr.f32.mxu0 0.0
  %2351 = vmatmul.mubr.f32.gmra.mxu0 %v2255
  %v2352 = vpop.f32.mrf.mxu0
  %v2353 = vadd.f32 0.0, %v2352
  %v2354 = vpop.f32.mrf.mxu0
  %2355 = vmatprep.mubr.f32.mxu0 0.0
  %2356 = vmatmul.mubr.f32.gmra.mxu0 %v2258
  %v2357 = vpop.f32.mrf.mxu0
  %v2358 = vadd.f32 0.0, %v2357
  %v2359 = vpop.f32.mrf.mxu0
  %2360 = vmatprep.mubr.f32.mxu0 0.0
  %2361 = vmatmul.mubr.f32.gmra.mxu0 %v2261
  %v2362 = vpop.f32.mrf.mxu0
  %v2363 = vadd.f32 0.0, %v2362
  %v2364 = vpop.f32.mrf.mxu0
  %2365 = vmatprep.mubr.f32.mxu0 0.0
  %2366 = vmatmul.mubr.f32.gmra.mxu0 %v2264
  %v2367 = vpop.f32.mrf.mxu0
  %v2368 = vadd.f32 0.0, %v2367
  %v2369 = vpop.f32.mrf.mxu0
  %2370 = vdwg.mxu0
  %vm2371 = vcmp.gt.f32.partialorder %v2333, 0.0
  %vm2372 = vcmp.gt.f32.partialorder %v2338, 0.0
  %vm2373 = vcmp.gt.f32.partialorder %v2343, 0.0
  %vm2374 = vcmp.gt.f32.partialorder %v2348, 0.0
  %vm2375 = vcmp.gt.f32.partialorder %v2353, 0.0
  %vm2376 = vcmp.gt.f32.partialorder %v2358, 0.0
  %vm2377 = vcmp.gt.f32.partialorder %v2363, 0.0
  %vm2378 = vcmp.gt.f32.partialorder %v2368, 0.0
  %v2379 = vmin.f32 %v2333, 0.0
  %v2380 = vmin.f32 %v2338, 0.0
  %v2381 = vmin.f32 %v2343, 0.0
  %v2382 = vmin.f32 %v2348, 0.0
  %v2383 = vmin.f32 %v2353, 0.0
  %v2384 = vmin.f32 %v2358, 0.0
  %v2385 = vmin.f32 %v2363, 0.0
  %v2386 = vmin.f32 %v2368, 0.0
  %v2387 = vmul.f32 %v2379, 1.442695
  %v2388 = vpow.pop %v2387
  %v2389 = vmul.f32 %v2380, 1.442695
  %v2390 = vpow.pop %v2389
  %v2391 = vmul.f32 %v2381, 1.442695
  %v2392 = vpow.pop %v2391
  %v2393 = vmul.f32 %v2382, 1.442695
  %v2394 = vpow.pop %v2393
  %v2395 = vmul.f32 %v2383, 1.442695
  %v2396 = vpow.pop %v2395
  %v2397 = vmul.f32 %v2384, 1.442695
  %v2398 = vpow.pop %v2397
  %v2399 = vmul.f32 %v2385, 1.442695
  %v2400 = vpow.pop %v2399
  %v2401 = vmul.f32 %v2386, 1.442695
  %v2402 = vpow.pop %v2401
  %v2403 = vsub.f32 %v2388, 1.0
  %v2404 = vsub.f32 %v2390, 1.0
  %v2405 = vsub.f32 %v2392, 1.0
  %v2406 = vsub.f32 %v2394, 1.0
  %v2407 = vsub.f32 %v2396, 1.0
  %v2408 = vsub.f32 %v2398, 1.0
  %v2409 = vsub.f32 %v2400, 1.0
  %v2410 = vsub.f32 %v2402, 1.0
  %v2411 = vsel %vm2371, %v2333, %v2403
  %v2412 = vsel %vm2372, %v2338, %v2404
  %v2413 = vsel %vm2373, %v2343, %v2405
  %v2414 = vsel %vm2374, %v2348, %v2406
  %v2415 = vsel %vm2375, %v2353, %v2407
  %v2416 = vsel %vm2376, %v2358, %v2408
  %v2417 = vsel %vm2377, %v2363, %v2409
  %v2418 = vsel %vm2378, %v2368, %v2410
  %vm2419 = vcmask 64512
  %v2421 = vsel %vm2419, %v2411, 0
  %v2424 = vsel %vm2419, %v2412, 0
  %v2427 = vsel %vm2419, %v2413, 0
  %v2430 = vsel %vm2419, %v2414, 0
  %v2433 = vsel %vm2419, %v2415, 0
  %v2436 = vsel %vm2419, %v2416, 0
  %v2439 = vsel %vm2419, %v2417, 0
  %v2442 = vsel %vm2419, %v2418, 0
  %2444 = vmatprep.subr.mxu0 0.0
  %2445 = vmatpush1.msra.mxu0 0.0
  %2446 = vmatprep.subr.mxu0 0.0
  %2447 = vmatpush1.msra.mxu0 0.0
  %2448 = vmatprep.subr.mxu0 0.0
  %2449 = vmatpush1.msra.mxu0 0.0
  %2450 = vmatprep.subr.mxu0 0.0
  %2451 = vmatpush1.msra.mxu0 0.0
  %2452 = vmatprep.subr.mxu0 0.0
  %2453 = vmatpush1.msra.mxu0 0.0
  %2454 = vmatprep.subr.mxu0 0.0
  %2455 = vmatpush1.msra.mxu0 0.0
  %2456 = vmatprep.subr.mxu0 0.0
  %2457 = vmatpush1.msra.mxu0 0.0
  %2458 = vmatprep.subr.mxu0 0.0
  %2459 = vmatpush1.msra.mxu0 0.0
  %2460 = vmatprep.subr.mxu0 0.0
  %2461 = vmatpush1.msra.mxu0 0.0
  %2462 = vmatprep.subr.mxu0 0.0
  %2463 = vmatpush1.msra.mxu0 0.0
  %2464 = vmatprep.subr.mxu0 0.0
  %2465 = vmatpush1.msra.mxu0 0.0
  %2466 = vmatprep.subr.mxu0 0.0
  %2467 = vmatpush1.msra.mxu0 0.0
  %2468 = vmatprep.subr.mxu0 0.0
  %2469 = vmatpush1.msra.mxu0 0.0
  %2470 = vmatprep.subr.mxu0 0.0
  %2471 = vmatpush1.msra.mxu0 0.0
  %2472 = vmatprep.subr.mxu0 0.0
  %2473 = vmatpush1.msra.mxu0 0.0
  %2474 = vmatprep.subr.mxu0 0.0
  %2475 = vmatpush1.msra.mxu0 %v1594
  %2476 = vmatprep.subr.mxu0 0.0
  %2477 = vmatpush2.msra.mxu0 0.0
  %2478 = vmatprep.subr.mxu0 0.0
  %2479 = vmatpush2.msra.mxu0 0.0
  %2480 = vmatprep.subr.mxu0 0.0
  %2481 = vmatpush2.msra.mxu0 0.0
  %2482 = vmatprep.subr.mxu0 0.0
  %2483 = vmatpush2.msra.mxu0 0.0
  %2484 = vmatprep.subr.mxu0 0.0
  %2485 = vmatpush2.msra.mxu0 0.0
  %2486 = vmatprep.subr.mxu0 0.0
  %2487 = vmatpush2.msra.mxu0 0.0
  %2488 = vmatprep.subr.mxu0 0.0
  %2489 = vmatpush2.msra.mxu0 0.0
  %2490 = vmatprep.subr.mxu0 0.0
  %2491 = vmatpush2.msra.mxu0 0.0
  %2492 = vmatprep.subr.mxu0 0.0
  %2493 = vmatpush2.msra.mxu0 0.0
  %2494 = vmatprep.subr.mxu0 0.0
  %2495 = vmatpush2.msra.mxu0 0.0
  %2496 = vmatprep.subr.mxu0 0.0
  %2497 = vmatpush2.msra.mxu0 0.0
  %2498 = vmatprep.subr.mxu0 0.0
  %2499 = vmatpush2.msra.mxu0 0.0
  %2500 = vmatprep.subr.mxu0 0.0
  %2501 = vmatpush2.msra.mxu0 0.0
  %2502 = vmatprep.subr.mxu0 0.0
  %2503 = vmatpush2.msra.mxu0 0.0
  %2504 = vmatprep.subr.mxu0 0.0
  %2505 = vmatpush2.msra.mxu0 0.0
  %2506 = vmatprep.subr.mxu0 0.0
  %2507 = vmatpush2.msra.mxu0 0.0
  %2508 = vmatprep.mubr.f32.mxu0 0.0
  %2509 = vmatmul.mubr.f32.gmra.mxu0 %v2421
  %v2510 = vpop.f32.mrf.mxu0
  %v2511 = vadd.f32 0.0, %v2510
  %v2512 = vpop.f32.mrf.mxu0
  %2513 = vmatprep.mubr.f32.mxu0 0.0
  %2514 = vmatmul.mubr.f32.gmra.mxu0 %v2424
  %v2515 = vpop.f32.mrf.mxu0
  %v2516 = vadd.f32 0.0, %v2515
  %v2517 = vpop.f32.mrf.mxu0
  %2518 = vmatprep.mubr.f32.mxu0 0.0
  %2519 = vmatmul.mubr.f32.gmra.mxu0 %v2427
  %v2520 = vpop.f32.mrf.mxu0
  %v2521 = vadd.f32 0.0, %v2520
  %v2522 = vpop.f32.mrf.mxu0
  %2523 = vmatprep.mubr.f32.mxu0 0.0
  %2524 = vmatmul.mubr.f32.gmra.mxu0 %v2430
  %v2525 = vpop.f32.mrf.mxu0
  %v2526 = vadd.f32 0.0, %v2525
  %v2527 = vpop.f32.mrf.mxu0
  %2528 = vmatprep.mubr.f32.mxu0 0.0
  %2529 = vmatmul.mubr.f32.gmra.mxu0 %v2433
  %v2530 = vpop.f32.mrf.mxu0
  %v2531 = vadd.f32 0.0, %v2530
  %v2532 = vpop.f32.mrf.mxu0
  %2533 = vmatprep.mubr.f32.mxu0 0.0
  %2534 = vmatmul.mubr.f32.gmra.mxu0 %v2436
  %v2535 = vpop.f32.mrf.mxu0
  %v2536 = vadd.f32 0.0, %v2535
  %v2537 = vpop.f32.mrf.mxu0
  %2538 = vmatprep.mubr.f32.mxu0 0.0
  %2539 = vmatmul.mubr.f32.gmra.mxu0 %v2439
  %v2540 = vpop.f32.mrf.mxu0
  %v2541 = vadd.f32 0.0, %v2540
  %v2542 = vpop.f32.mrf.mxu0
  %2543 = vmatprep.mubr.f32.mxu0 0.0
  %2544 = vmatmul.mubr.f32.gmra.mxu0 %v2442
  %v2545 = vpop.f32.mrf.mxu0
  %v2546 = vadd.f32 0.0, %v2545
  %v2547 = vpop.f32.mrf.mxu0
  %2548 = vdwg.mxu0
  %v2550 = vsel %vm2419, %v1990, 0
  %v2553 = vsel %vm2419, %v1991, 0
  %v2556 = vsel %vm2419, %v1992, 0
  %v2559 = vsel %vm2419, %v1993, 0
  %v2562 = vsel %vm2419, %v1994, 0
  %v2565 = vsel %vm2419, %v1995, 0
  %v2568 = vsel %vm2419, %v1996, 0
  %v2571 = vsel %vm2419, %v1997, 0
  %2573 = vmatprep.subr.mxu0 0.0
  %2574 = vmatpush1.msra.mxu0 0.0
  %2575 = vmatprep.subr.mxu0 0.0
  %2576 = vmatpush1.msra.mxu0 0.0
  %2577 = vmatprep.subr.mxu0 0.0
  %2578 = vmatpush1.msra.mxu0 0.0
  %2579 = vmatprep.subr.mxu0 0.0
  %2580 = vmatpush1.msra.mxu0 0.0
  %2581 = vmatprep.subr.mxu0 0.0
  %2582 = vmatpush1.msra.mxu0 0.0
  %2583 = vmatprep.subr.mxu0 0.0
  %2584 = vmatpush1.msra.mxu0 0.0
  %2585 = vmatprep.subr.mxu0 0.0
  %2586 = vmatpush1.msra.mxu0 0.0
  %2587 = vmatprep.subr.mxu0 0.0
  %2588 = vmatpush1.msra.mxu0 0.0
  %2589 = vmatprep.subr.mxu0 0.0
  %2590 = vmatpush1.msra.mxu0 0.0
  %2591 = vmatprep.subr.mxu0 0.0
  %2592 = vmatpush1.msra.mxu0 0.0
  %2593 = vmatprep.subr.mxu0 0.0
  %2594 = vmatpush1.msra.mxu0 0.0
  %2595 = vmatprep.subr.mxu0 0.0
  %2596 = vmatpush1.msra.mxu0 0.0
  %2597 = vmatprep.subr.mxu0 0.0
  %2598 = vmatpush1.msra.mxu0 0.0
  %2599 = vmatprep.subr.mxu0 0.0
  %2600 = vmatpush1.msra.mxu0 0.0
  %2601 = vmatprep.subr.mxu0 0.0
  %2602 = vmatpush1.msra.mxu0 0.0
  %2603 = vmatprep.subr.mxu0 0.0
  %2604 = vmatpush1.msra.mxu0 %v1593
  %2605 = vmatprep.subr.mxu0 0.0
  %2606 = vmatpush2.msra.mxu0 0.0
  %2607 = vmatprep.subr.mxu0 0.0
  %2608 = vmatpush2.msra.mxu0 0.0
  %2609 = vmatprep.subr.mxu0 0.0
  %2610 = vmatpush2.msra.mxu0 0.0
  %2611 = vmatprep.subr.mxu0 0.0
  %2612 = vmatpush2.msra.mxu0 0.0
  %2613 = vmatprep.subr.mxu0 0.0
  %2614 = vmatpush2.msra.mxu0 0.0
  %2615 = vmatprep.subr.mxu0 0.0
  %2616 = vmatpush2.msra.mxu0 0.0
  %2617 = vmatprep.subr.mxu0 0.0
  %2618 = vmatpush2.msra.mxu0 0.0
  %2619 = vmatprep.subr.mxu0 0.0
  %2620 = vmatpush2.msra.mxu0 0.0
  %2621 = vmatprep.subr.mxu0 0.0
  %2622 = vmatpush2.msra.mxu0 0.0
  %2623 = vmatprep.subr.mxu0 0.0
  %2624 = vmatpush2.msra.mxu0 0.0
  %2625 = vmatprep.subr.mxu0 0.0
  %2626 = vmatpush2.msra.mxu0 0.0
  %2627 = vmatprep.subr.mxu0 0.0
  %2628 = vmatpush2.msra.mxu0 0.0
  %2629 = vmatprep.subr.mxu0 0.0
  %2630 = vmatpush2.msra.mxu0 0.0
  %2631 = vmatprep.subr.mxu0 0.0
  %2632 = vmatpush2.msra.mxu0 0.0
  %2633 = vmatprep.subr.mxu0 0.0
  %2634 = vmatpush2.msra.mxu0 0.0
  %2635 = vmatprep.subr.mxu0 0.0
  %2636 = vmatpush2.msra.mxu0 0.0
  %2637 = vmatprep.mubr.f32.mxu0 0.0
  %2638 = vmatmul.mubr.f32.gmra.mxu0 %v2550
  %v2639 = vpop.f32.mrf.mxu0
  %v2640 = vadd.f32 %v2511, %v2639
  %v2641 = vpop.f32.mrf.mxu0
  %2642 = vmatprep.mubr.f32.mxu0 0.0
  %2643 = vmatmul.mubr.f32.gmra.mxu0 %v2553
  %v2644 = vpop.f32.mrf.mxu0
  %v2645 = vadd.f32 %v2516, %v2644
  %v2646 = vpop.f32.mrf.mxu0
  %2647 = vmatprep.mubr.f32.mxu0 0.0
  %2648 = vmatmul.mubr.f32.gmra.mxu0 %v2556
  %v2649 = vpop.f32.mrf.mxu0
  %v2650 = vadd.f32 %v2521, %v2649
  %v2651 = vpop.f32.mrf.mxu0
  %2652 = vmatprep.mubr.f32.mxu0 0.0
  %2653 = vmatmul.mubr.f32.gmra.mxu0 %v2559
  %v2654 = vpop.f32.mrf.mxu0
  %v2655 = vadd.f32 %v2526, %v2654
  %v2656 = vpop.f32.mrf.mxu0
  %2657 = vmatprep.mubr.f32.mxu0 0.0
  %2658 = vmatmul.mubr.f32.gmra.mxu0 %v2562
  %v2659 = vpop.f32.mrf.mxu0
  %v2660 = vadd.f32 %v2531, %v2659
  %v2661 = vpop.f32.mrf.mxu0
  %2662 = vmatprep.mubr.f32.mxu0 0.0
  %2663 = vmatmul.mubr.f32.gmra.mxu0 %v2565
  %v2664 = vpop.f32.mrf.mxu0
  %v2665 = vadd.f32 %v2536, %v2664
  %v2666 = vpop.f32.mrf.mxu0
  %2667 = vmatprep.mubr.f32.mxu0 0.0
  %2668 = vmatmul.mubr.f32.gmra.mxu0 %v2568
  %v2669 = vpop.f32.mrf.mxu0
  %v2670 = vadd.f32 %v2541, %v2669
  %v2671 = vpop.f32.mrf.mxu0
  %2672 = vmatprep.mubr.f32.mxu0 0.0
  %2673 = vmatmul.mubr.f32.gmra.mxu0 %v2571
  %v2674 = vpop.f32.mrf.mxu0
  %v2675 = vadd.f32 %v2546, %v2674
  %v2676 = vpop.f32.mrf.mxu0
  %2677 = vdwg.mxu0
  %2678 = vmatprep.subr.mxu0 0.0
  %2679 = vmatpush1.msra.mxu0 0.0
  %2680 = vmatprep.subr.mxu0 0.0
  %2681 = vmatpush1.msra.mxu0 0.0
  %2682 = vmatprep.subr.mxu0 0.0
  %2683 = vmatpush1.msra.mxu0 0.0
  %2684 = vmatprep.subr.mxu0 0.0
  %2685 = vmatpush1.msra.mxu0 0.0
  %2686 = vmatprep.subr.mxu0 0.0
  %2687 = vmatpush1.msra.mxu0 0.0
  %2688 = vmatprep.subr.mxu0 0.0
  %2689 = vmatpush1.msra.mxu0 0.0
  %2690 = vmatprep.subr.mxu0 0.0
  %2691 = vmatpush1.msra.mxu0 0.0
  %2692 = vmatprep.subr.mxu0 0.0
  %2693 = vmatpush1.msra.mxu0 0.0
  %2694 = vmatprep.subr.mxu0 0.0
  %2695 = vmatpush1.msra.mxu0 0.0
  %2696 = vmatprep.subr.mxu0 0.0
  %2697 = vmatpush1.msra.mxu0 0.0
  %2698 = vmatprep.subr.mxu0 0.0
  %2699 = vmatpush1.msra.mxu0 0.0
  %2700 = vmatprep.subr.mxu0 0.0
  %2701 = vmatpush1.msra.mxu0 0.0
  %2702 = vmatprep.subr.mxu0 0.0
  %2703 = vmatpush1.msra.mxu0 0.0
  %2704 = vmatprep.subr.mxu0 0.0
  %2705 = vmatpush1.msra.mxu0 0.0
  %2706 = vmatprep.subr.mxu0 0.0
  %2707 = vmatpush1.msra.mxu0 0.0
  %2708 = vmatprep.subr.mxu0 0.0
  %2709 = vmatpush1.msra.mxu0 %v1598
  %2710 = vmatprep.subr.mxu0 0.0
  %2711 = vmatpush2.msra.mxu0 0.0
  %2712 = vmatprep.subr.mxu0 0.0
  %2713 = vmatpush2.msra.mxu0 0.0
  %2714 = vmatprep.subr.mxu0 0.0
  %2715 = vmatpush2.msra.mxu0 0.0
  %2716 = vmatprep.subr.mxu0 0.0
  %2717 = vmatpush2.msra.mxu0 0.0
  %2718 = vmatprep.subr.mxu0 0.0
  %2719 = vmatpush2.msra.mxu0 0.0
  %2720 = vmatprep.subr.mxu0 0.0
  %2721 = vmatpush2.msra.mxu0 0.0
  %2722 = vmatprep.subr.mxu0 0.0
  %2723 = vmatpush2.msra.mxu0 0.0
  %2724 = vmatprep.subr.mxu0 0.0
  %2725 = vmatpush2.msra.mxu0 0.0
  %2726 = vmatprep.subr.mxu0 0.0
  %2727 = vmatpush2.msra.mxu0 0.0
  %2728 = vmatprep.subr.mxu0 0.0
  %2729 = vmatpush2.msra.mxu0 0.0
  %2730 = vmatprep.subr.mxu0 0.0
  %2731 = vmatpush2.msra.mxu0 0.0
  %2732 = vmatprep.subr.mxu0 0.0
  %2733 = vmatpush2.msra.mxu0 0.0
  %2734 = vmatprep.subr.mxu0 0.0
  %2735 = vmatpush2.msra.mxu0 0.0
  %2736 = vmatprep.subr.mxu0 0.0
  %2737 = vmatpush2.msra.mxu0 0.0
  %2738 = vmatprep.subr.mxu0 0.0
  %2739 = vmatpush2.msra.mxu0 0.0
  %2740 = vmatprep.subr.mxu0 0.0
  %2741 = vmatpush2.msra.mxu0 0.0
  %2742 = vmatprep.mubr.f32.mxu0 0.0
  %2743 = vmatmul.mubr.f32.gmra.mxu0 %v2421
  %v2744 = vpop.f32.mrf.mxu0
  %v2745 = vadd.f32 0.0, %v2744
  %v2746 = vpop.f32.mrf.mxu0
  %2747 = vmatprep.mubr.f32.mxu0 0.0
  %2748 = vmatmul.mubr.f32.gmra.mxu0 %v2424
  %v2749 = vpop.f32.mrf.mxu0
  %v2750 = vadd.f32 0.0, %v2749
  %v2751 = vpop.f32.mrf.mxu0
  %2752 = vmatprep.mubr.f32.mxu0 0.0
  %2753 = vmatmul.mubr.f32.gmra.mxu0 %v2427
  %v2754 = vpop.f32.mrf.mxu0
  %v2755 = vadd.f32 0.0, %v2754
  %v2756 = vpop.f32.mrf.mxu0
  %2757 = vmatprep.mubr.f32.mxu0 0.0
  %2758 = vmatmul.mubr.f32.gmra.mxu0 %v2430
  %v2759 = vpop.f32.mrf.mxu0
  %v2760 = vadd.f32 0.0, %v2759
  %v2761 = vpop.f32.mrf.mxu0
  %2762 = vmatprep.mubr.f32.mxu0 0.0
  %2763 = vmatmul.mubr.f32.gmra.mxu0 %v2433
  %v2764 = vpop.f32.mrf.mxu0
  %v2765 = vadd.f32 0.0, %v2764
  %v2766 = vpop.f32.mrf.mxu0
  %2767 = vmatprep.mubr.f32.mxu0 0.0
  %2768 = vmatmul.mubr.f32.gmra.mxu0 %v2436
  %v2769 = vpop.f32.mrf.mxu0
  %v2770 = vadd.f32 0.0, %v2769
  %v2771 = vpop.f32.mrf.mxu0
  %2772 = vmatprep.mubr.f32.mxu0 0.0
  %2773 = vmatmul.mubr.f32.gmra.mxu0 %v2439
  %v2774 = vpop.f32.mrf.mxu0
  %v2775 = vadd.f32 0.0, %v2774
  %v2776 = vpop.f32.mrf.mxu0
  %2777 = vmatprep.mubr.f32.mxu0 0.0
  %2778 = vmatmul.mubr.f32.gmra.mxu0 %v2442
  %v2779 = vpop.f32.mrf.mxu0
  %v2780 = vadd.f32 0.0, %v2779
  %v2781 = vpop.f32.mrf.mxu0
  %2782 = vdwg.mxu0
  %2783 = vmatprep.subr.mxu0 0.0
  %2784 = vmatpush1.msra.mxu0 0.0
  %2785 = vmatprep.subr.mxu0 0.0
  %2786 = vmatpush1.msra.mxu0 0.0
  %2787 = vmatprep.subr.mxu0 0.0
  %2788 = vmatpush1.msra.mxu0 0.0
  %2789 = vmatprep.subr.mxu0 0.0
  %2790 = vmatpush1.msra.mxu0 0.0
  %2791 = vmatprep.subr.mxu0 0.0
  %2792 = vmatpush1.msra.mxu0 0.0
  %2793 = vmatprep.subr.mxu0 0.0
  %2794 = vmatpush1.msra.mxu0 0.0
  %2795 = vmatprep.subr.mxu0 0.0
  %2796 = vmatpush1.msra.mxu0 0.0
  %2797 = vmatprep.subr.mxu0 0.0
  %2798 = vmatpush1.msra.mxu0 0.0
  %2799 = vmatprep.subr.mxu0 0.0
  %2800 = vmatpush1.msra.mxu0 0.0
  %2801 = vmatprep.subr.mxu0 0.0
  %2802 = vmatpush1.msra.mxu0 0.0
  %2803 = vmatprep.subr.mxu0 0.0
  %2804 = vmatpush1.msra.mxu0 0.0
  %2805 = vmatprep.subr.mxu0 0.0
  %2806 = vmatpush1.msra.mxu0 0.0
  %2807 = vmatprep.subr.mxu0 0.0
  %2808 = vmatpush1.msra.mxu0 0.0
  %2809 = vmatprep.subr.mxu0 0.0
  %2810 = vmatpush1.msra.mxu0 0.0
  %2811 = vmatprep.subr.mxu0 0.0
  %2812 = vmatpush1.msra.mxu0 0.0
  %2813 = vmatprep.subr.mxu0 0.0
  %2814 = vmatpush1.msra.mxu0 %v1597
  %2815 = vmatprep.subr.mxu0 0.0
  %2816 = vmatpush2.msra.mxu0 0.0
  %2817 = vmatprep.subr.mxu0 0.0
  %2818 = vmatpush2.msra.mxu0 0.0
  %2819 = vmatprep.subr.mxu0 0.0
  %2820 = vmatpush2.msra.mxu0 0.0
  %2821 = vmatprep.subr.mxu0 0.0
  %2822 = vmatpush2.msra.mxu0 0.0
  %2823 = vmatprep.subr.mxu0 0.0
  %2824 = vmatpush2.msra.mxu0 0.0
  %2825 = vmatprep.subr.mxu0 0.0
  %2826 = vmatpush2.msra.mxu0 0.0
  %2827 = vmatprep.subr.mxu0 0.0
  %2828 = vmatpush2.msra.mxu0 0.0
  %2829 = vmatprep.subr.mxu0 0.0
  %2830 = vmatpush2.msra.mxu0 0.0
  %2831 = vmatprep.subr.mxu0 0.0
  %2832 = vmatpush2.msra.mxu0 0.0
  %2833 = vmatprep.subr.mxu0 0.0
  %2834 = vmatpush2.msra.mxu0 0.0
  %2835 = vmatprep.subr.mxu0 0.0
  %2836 = vmatpush2.msra.mxu0 0.0
  %2837 = vmatprep.subr.mxu0 0.0
  %2838 = vmatpush2.msra.mxu0 0.0
  %2839 = vmatprep.subr.mxu0 0.0
  %2840 = vmatpush2.msra.mxu0 0.0
  %2841 = vmatprep.subr.mxu0 0.0
  %2842 = vmatpush2.msra.mxu0 0.0
  %2843 = vmatprep.subr.mxu0 0.0
  %2844 = vmatpush2.msra.mxu0 0.0
  %2845 = vmatprep.subr.mxu0 0.0
  %2846 = vmatpush2.msra.mxu0 0.0
  %2847 = vmatprep.mubr.f32.mxu0 0.0
  %2848 = vmatmul.mubr.f32.gmra.mxu0 %v2550
  %v2849 = vpop.f32.mrf.mxu0
  %v2850 = vadd.f32 %v2745, %v2849
  %v2851 = vpop.f32.mrf.mxu0
  %2852 = vmatprep.mubr.f32.mxu0 0.0
  %2853 = vmatmul.mubr.f32.gmra.mxu0 %v2553
  %v2854 = vpop.f32.mrf.mxu0
  %v2855 = vadd.f32 %v2750, %v2854
  %v2856 = vpop.f32.mrf.mxu0
  %2857 = vmatprep.mubr.f32.mxu0 0.0
  %2858 = vmatmul.mubr.f32.gmra.mxu0 %v2556
  %v2859 = vpop.f32.mrf.mxu0
  %v2860 = vadd.f32 %v2755, %v2859
  %v2861 = vpop.f32.mrf.mxu0
  %2862 = vmatprep.mubr.f32.mxu0 0.0
  %2863 = vmatmul.mubr.f32.gmra.mxu0 %v2559
  %v2864 = vpop.f32.mrf.mxu0
  %v2865 = vadd.f32 %v2760, %v2864
  %v2866 = vpop.f32.mrf.mxu0
  %2867 = vmatprep.mubr.f32.mxu0 0.0
  %2868 = vmatmul.mubr.f32.gmra.mxu0 %v2562
  %v2869 = vpop.f32.mrf.mxu0
  %v2870 = vadd.f32 %v2765, %v2869
  %v2871 = vpop.f32.mrf.mxu0
  %2872 = vmatprep.mubr.f32.mxu0 0.0
  %2873 = vmatmul.mubr.f32.gmra.mxu0 %v2565
  %v2874 = vpop.f32.mrf.mxu0
  %v2875 = vadd.f32 %v2770, %v2874
  %v2876 = vpop.f32.mrf.mxu0
  %2877 = vmatprep.mubr.f32.mxu0 0.0
  %2878 = vmatmul.mubr.f32.gmra.mxu0 %v2568
  %v2879 = vpop.f32.mrf.mxu0
  %v2880 = vadd.f32 %v2775, %v2879
  %v2881 = vpop.f32.mrf.mxu0
  %2882 = vmatprep.mubr.f32.mxu0 0.0
  %2883 = vmatmul.mubr.f32.gmra.mxu0 %v2571
  %v2884 = vpop.f32.mrf.mxu0
  %v2885 = vadd.f32 %v2780, %v2884
  %v2886 = vpop.f32.mrf.mxu0
  %2887 = vdwg.mxu0
  %2888 = vrot.lane.b32.xlu0 %v1555, 122
  %v2889 = vpop.permute.xlu0 %2888
  %2890 = vrot.lane.b32.xlu0 %v1560, 122
  %v2891 = vpop.permute.xlu0 %2890
  %2892 = vrot.lane.b32.xlu0 %v1565, 122
  %v2893 = vpop.permute.xlu0 %2892
  %2894 = vrot.lane.b32.xlu0 %v1570, 122
  %v2895 = vpop.permute.xlu0 %2894
  %2896 = vrot.lane.b32.xlu0 %v1575, 122
  %v2897 = vpop.permute.xlu0 %2896
  %2898 = vrot.lane.b32.xlu0 %v1580, 122
  %v2899 = vpop.permute.xlu0 %2898
  %2900 = vrot.lane.b32.xlu0 %v1585, 122
  %v2901 = vpop.permute.xlu0 %2900
  %2902 = vrot.lane.b32.xlu0 %v1590, 122
  %v2903 = vpop.permute.xlu0 %2902
  %2912 = vxpose.xlu0.b32.start [1/16] %v2889, 128
  %2913 = vxpose.xlu0.b32.cont [2/16] %v2891, 128
  %2914 = vxpose.xlu0.b32.cont [3/16] %v2893, 128
  %2915 = vxpose.xlu0.b32.cont [4/16] %v2895, 128
  %2916 = vxpose.xlu0.b32.cont [5/16] %v2897, 128
  %2917 = vxpose.xlu0.b32.cont [6/16] %v2899, 128
  %2918 = vxpose.xlu0.b32.cont [7/16] %v2901, 128
  %2919 = vxpose.xlu0.b32.cont [8/16] %v2903, 128
  %2920 = vxpose.xlu0.b32.cont [9/16] 0.0, 128
  %2921 = vxpose.xlu0.b32.cont [10/16] 0.0, 128
  %2922 = vxpose.xlu0.b32.cont [11/16] 0.0, 128
  %2923 = vxpose.xlu0.b32.cont [12/16] 0.0, 128
  %2924 = vxpose.xlu0.b32.cont [13/16] 0.0, 128
  %2925 = vxpose.xlu0.b32.cont [14/16] 0.0, 128
  %2926 = vxpose.xlu0.b32.cont [15/16] 0.0, 128
  %2927 = vxpose.xlu0.b32.end [16/16] 0.0, 128
  %v2928 = vpop.trf.xlu0
  %v2929 = vpop.trf.xlu0
  %v2930 = vpop.trf.xlu0
  %v2931 = vpop.trf.xlu0
  %v2932 = vpop.trf.xlu0
  %v2933 = vpop.trf.xlu0
  %v2934 = vpop.trf.xlu0
  %v2935 = vpop.trf.xlu0
  %v2936 = vpop.trf.xlu0
  %v2937 = vpop.trf.xlu0
  %v2938 = vpop.trf.xlu0
  %v2939 = vpop.trf.xlu0
  %v2940 = vpop.trf.xlu0
  %v2941 = vpop.trf.xlu0
  %v2942 = vpop.trf.xlu0
  %v2943 = vpop.trf.xlu0
  %2944 = vset.pattern.permute.xlu0 2
  %2945 = vperm.xlu0 %2944, %v1555
  %v2946 = vpop.permute.xlu0 %2945
  %2948 = vset.pattern.permute.xlu0 2
  %2949 = vperm.xlu0 %2948, %v1560
  %v2950 = vpop.permute.xlu0 %2949
  %2952 = vset.pattern.permute.xlu0 2
  %2953 = vperm.xlu0 %2952, %v1565
  %v2954 = vpop.permute.xlu0 %2953
  %2956 = vset.pattern.permute.xlu0 2
  %2957 = vperm.xlu0 %2956, %v1570
  %v2958 = vpop.permute.xlu0 %2957
  %2960 = vset.pattern.permute.xlu0 2
  %2961 = vperm.xlu0 %2960, %v1575
  %v2962 = vpop.permute.xlu0 %2961
  %2964 = vset.pattern.permute.xlu0 2
  %2965 = vperm.xlu0 %2964, %v1580
  %v2966 = vpop.permute.xlu0 %2965
  %2968 = vset.pattern.permute.xlu0 2
  %2969 = vperm.xlu0 %2968, %v1585
  %v2970 = vpop.permute.xlu0 %2969
  %2972 = vset.pattern.permute.xlu0 2
  %2973 = vperm.xlu0 %2972, %v1590
  %v2974 = vpop.permute.xlu0 %2973
  %v2976 = vlaneseq
  %v2977 = vshrl.u32 %v2976, 7
  %v2978 = vsub.s32 0, %v2977
  %v2979 = vrot.slane %v2928, %v2978
  %v2980 = vadd.f32 %v2946, %v2979
  %v2981 = vadd.f32 %v2950, %v2979
  %v2982 = vadd.f32 %v2954, %v2979
  %v2983 = vadd.f32 %v2958, %v2979
  %v2984 = vadd.f32 %v2962, %v2979
  %v2985 = vadd.f32 %v2966, %v2979
  %v2986 = vadd.f32 %v2970, %v2979
  %v2987 = vadd.f32 %v2974, %v2979
  %vm2988 = vcmp.gt.f32.partialorder %v2980, 0.0
  %vm2989 = vcmp.gt.f32.partialorder %v2981, 0.0
  %vm2990 = vcmp.gt.f32.partialorder %v2982, 0.0
  %vm2991 = vcmp.gt.f32.partialorder %v2983, 0.0
  %vm2992 = vcmp.gt.f32.partialorder %v2984, 0.0
  %vm2993 = vcmp.gt.f32.partialorder %v2985, 0.0
  %vm2994 = vcmp.gt.f32.partialorder %v2986, 0.0
  %vm2995 = vcmp.gt.f32.partialorder %v2987, 0.0
  %v2996 = vmul.f32 %v2980, 0.2
  %v2997 = vmul.f32 %v2981, 0.2
  %v2998 = vmul.f32 %v2982, 0.2
  %v2999 = vmul.f32 %v2983, 0.2
  %v3000 = vmul.f32 %v2984, 0.2
  %v3001 = vmul.f32 %v2985, 0.2
  %v3002 = vmul.f32 %v2986, 0.2
  %v3003 = vmul.f32 %v2987, 0.2
  %v3004 = vsel %vm2988, %v2980, %v2996
  %v3005 = vsel %vm2989, %v2981, %v2997
  %v3006 = vsel %vm2990, %v2982, %v2998
  %v3007 = vsel %vm2991, %v2983, %v2999
  %v3008 = vsel %vm2992, %v2984, %v3000
  %v3009 = vsel %vm2993, %v2985, %v3001
  %v3010 = vsel %vm2994, %v2986, %v3002
  %v3011 = vsel %vm2995, %v2987, %v3003
  %v3012 = vsel %vm667, %v3004, -inf
  %3013 = vmax.xlane.f32.xlu0 %v3012
  %v3014 = vpop.xlane.xlu0 %3013
  %v3015 = vsel %vm667, %v3005, -inf
  %3016 = vmax.xlane.f32.xlu0 %v3015
  %v3017 = vpop.xlane.xlu0 %3016
  %v3018 = vsel %vm667, %v3006, -inf
  %3019 = vmax.xlane.f32.xlu0 %v3018
  %v3020 = vpop.xlane.xlu0 %3019
  %v3021 = vsel %vm667, %v3007, -inf
  %3022 = vmax.xlane.f32.xlu0 %v3021
  %v3023 = vpop.xlane.xlu0 %3022
  %v3024 = vsel %vm667, %v3008, -inf
  %3025 = vmax.xlane.f32.xlu0 %v3024
  %v3026 = vpop.xlane.xlu0 %3025
  %v3027 = vsel %vm667, %v3009, -inf
  %3028 = vmax.xlane.f32.xlu0 %v3027
  %v3029 = vpop.xlane.xlu0 %3028
  %v3030 = vsel %vm667, %v3010, -inf
  %3031 = vmax.xlane.f32.xlu0 %v3030
  %v3032 = vpop.xlane.xlu0 %3031
  %v3033 = vsel %vm667, %v3011, -inf
  %3034 = vmax.xlane.f32.xlu0 %v3033
  %v3035 = vpop.xlane.xlu0 %3034
  %v3036 = vsub.f32 %v3004, %v3014
  %v3037 = vsub.f32 %v3005, %v3017
  %v3038 = vsub.f32 %v3006, %v3020
  %v3039 = vsub.f32 %v3007, %v3023
  %v3040 = vsub.f32 %v3008, %v3026
  %v3041 = vsub.f32 %v3009, %v3029
  %v3042 = vsub.f32 %v3010, %v3032
  %v3043 = vsub.f32 %v3011, %v3035
  %v3044 = vmul.f32 %v3036, 1.442695
  %v3045 = vpow.pop %v3044
  %v3046 = vmul.f32 %v3037, 1.442695
  %v3047 = vpow.pop %v3046
  %v3048 = vmul.f32 %v3038, 1.442695
  %v3049 = vpow.pop %v3048
  %v3050 = vmul.f32 %v3039, 1.442695
  %v3051 = vpow.pop %v3050
  %v3052 = vmul.f32 %v3040, 1.442695
  %v3053 = vpow.pop %v3052
  %v3054 = vmul.f32 %v3041, 1.442695
  %v3055 = vpow.pop %v3054
  %v3056 = vmul.f32 %v3042, 1.442695
  %v3057 = vpow.pop %v3056
  %v3058 = vmul.f32 %v3043, 1.442695
  %v3059 = vpow.pop %v3058
  %v3060 = vsel %vm667, %v3045, 0.0
  %3061 = vadd.xlane.f32.xlu0 %v3060
  %v3062 = vpop.xlane.xlu0 %3061
  %v3063 = vsel %vm667, %v3047, 0.0
  %3064 = vadd.xlane.f32.xlu0 %v3063
  %v3065 = vpop.xlane.xlu0 %3064
  %v3066 = vsel %vm667, %v3049, 0.0
  %3067 = vadd.xlane.f32.xlu0 %v3066
  %v3068 = vpop.xlane.xlu0 %3067
  %v3069 = vsel %vm667, %v3051, 0.0
  %3070 = vadd.xlane.f32.xlu0 %v3069
  %v3071 = vpop.xlane.xlu0 %3070
  %v3072 = vsel %vm667, %v3053, 0.0
  %3073 = vadd.xlane.f32.xlu0 %v3072
  %v3074 = vpop.xlane.xlu0 %3073
  %v3075 = vsel %vm667, %v3055, 0.0
  %3076 = vadd.xlane.f32.xlu0 %v3075
  %v3077 = vpop.xlane.xlu0 %3076
  %v3078 = vsel %vm667, %v3057, 0.0
  %3079 = vadd.xlane.f32.xlu0 %v3078
  %v3080 = vpop.xlane.xlu0 %3079
  %v3081 = vsel %vm667, %v3059, 0.0
  %3082 = vadd.xlane.f32.xlu0 %v3081
  %v3083 = vpop.xlane.xlu0 %3082
  %v3084 = vrcp.pop %v3062
  %v3085 = vrcp.pop %v3065
  %v3086 = vrcp.pop %v3068
  %v3087 = vrcp.pop %v3071
  %v3088 = vrcp.pop %v3074
  %v3089 = vrcp.pop %v3077
  %v3090 = vrcp.pop %v3080
  %v3091 = vrcp.pop %v3083
  %v3092 = vmul.f32 %v3045, %v3084
  %v3093 = vmul.f32 %v3047, %v3085
  %v3094 = vmul.f32 %v3049, %v3086
  %v3095 = vmul.f32 %v3051, %v3087
  %v3096 = vmul.f32 %v3053, %v3088
  %v3097 = vmul.f32 %v3055, %v3089
  %v3098 = vmul.f32 %v3057, %v3090
  %v3099 = vmul.f32 %v3059, %v3091
  %3100 = vrot.lane.b32.xlu0 %v1434, 112
  %v3101 = vpop.permute.xlu0 %3100
  %3102 = vrot.lane.b32.xlu0 %v1439, 112
  %v3103 = vpop.permute.xlu0 %3102
  %3104 = vrot.lane.b32.xlu0 %v1444, 112
  %v3105 = vpop.permute.xlu0 %3104
  %3106 = vrot.lane.b32.xlu0 %v1449, 112
  %v3107 = vpop.permute.xlu0 %3106
  %3108 = vrot.lane.b32.xlu0 %v1454, 112
  %v3109 = vpop.permute.xlu0 %3108
  %3110 = vrot.lane.b32.xlu0 %v1459, 112
  %v3111 = vpop.permute.xlu0 %3110
  %3112 = vrot.lane.b32.xlu0 %v1464, 112
  %v3113 = vpop.permute.xlu0 %3112
  %3114 = vrot.lane.b32.xlu0 %v1469, 112
  %v3115 = vpop.permute.xlu0 %3114
  %v3125 = vsel %vm667, %v3092, 0
  %v3128 = vsel %vm667, %v3093, 0
  %v3131 = vsel %vm667, %v3094, 0
  %v3134 = vsel %vm667, %v3095, 0
  %v3137 = vsel %vm667, %v3096, 0
  %v3140 = vsel %vm667, %v3097, 0
  %v3143 = vsel %vm667, %v3098, 0
  %v3146 = vsel %vm667, %v3099, 0
  %3148 = vmatprep.subr.mxu0 0.0
  %3149 = vmatpush1.msra.mxu0 0.0
  %3150 = vmatprep.subr.mxu0 0.0
  %3151 = vmatpush1.msra.mxu0 0.0
  %3152 = vmatprep.subr.mxu0 0.0
  %3153 = vmatpush1.msra.mxu0 0.0
  %3154 = vmatprep.subr.mxu0 0.0
  %3155 = vmatpush1.msra.mxu0 0.0
  %3156 = vmatprep.subr.mxu0 0.0
  %3157 = vmatpush1.msra.mxu0 0.0
  %3158 = vmatprep.subr.mxu0 0.0
  %3159 = vmatpush1.msra.mxu0 0.0
  %3160 = vmatprep.subr.mxu0 0.0
  %3161 = vmatpush1.msra.mxu0 0.0
  %3162 = vmatprep.subr.mxu0 0.0
  %3163 = vmatpush1.msra.mxu0 0.0
  %3164 = vmatprep.subr.mxu0 0.0
  %3165 = vmatpush1.msra.mxu0 %v3115
  %3166 = vmatprep.subr.mxu0 0.0
  %3167 = vmatpush1.msra.mxu0 %v3113
  %3168 = vmatprep.subr.mxu0 0.0
  %3169 = vmatpush1.msra.mxu0 %v3111
  %3170 = vmatprep.subr.mxu0 0.0
  %3171 = vmatpush1.msra.mxu0 %v3109
  %3172 = vmatprep.subr.mxu0 0.0
  %3173 = vmatpush1.msra.mxu0 %v3107
  %3174 = vmatprep.subr.mxu0 0.0
  %3175 = vmatpush1.msra.mxu0 %v3105
  %3176 = vmatprep.subr.mxu0 0.0
  %3177 = vmatpush1.msra.mxu0 %v3103
  %3178 = vmatprep.subr.mxu0 0.0
  %3179 = vmatpush1.msra.mxu0 %v3101
  %3180 = vmatprep.subr.mxu0 0.0
  %3181 = vmatpush2.msra.mxu0 0.0
  %3182 = vmatprep.subr.mxu0 0.0
  %3183 = vmatpush2.msra.mxu0 0.0
  %3184 = vmatprep.subr.mxu0 0.0
  %3185 = vmatpush2.msra.mxu0 0.0
  %3186 = vmatprep.subr.mxu0 0.0
  %3187 = vmatpush2.msra.mxu0 0.0
  %3188 = vmatprep.subr.mxu0 0.0
  %3189 = vmatpush2.msra.mxu0 0.0
  %3190 = vmatprep.subr.mxu0 0.0
  %3191 = vmatpush2.msra.mxu0 0.0
  %3192 = vmatprep.subr.mxu0 0.0
  %3193 = vmatpush2.msra.mxu0 0.0
  %3194 = vmatprep.subr.mxu0 0.0
  %3195 = vmatpush2.msra.mxu0 0.0
  %3196 = vmatprep.subr.mxu0 0.0
  %3197 = vmatpush2.msra.mxu0 0.0
  %3198 = vmatprep.subr.mxu0 0.0
  %3199 = vmatpush2.msra.mxu0 0.0
  %3200 = vmatprep.subr.mxu0 0.0
  %3201 = vmatpush2.msra.mxu0 0.0
  %3202 = vmatprep.subr.mxu0 0.0
  %3203 = vmatpush2.msra.mxu0 0.0
  %3204 = vmatprep.subr.mxu0 0.0
  %3205 = vmatpush2.msra.mxu0 0.0
  %3206 = vmatprep.subr.mxu0 0.0
  %3207 = vmatpush2.msra.mxu0 0.0
  %3208 = vmatprep.subr.mxu0 0.0
  %3209 = vmatpush2.msra.mxu0 0.0
  %3210 = vmatprep.subr.mxu0 0.0
  %3211 = vmatpush2.msra.mxu0 0.0
  %3212 = vmatprep.mubr.f32.mxu0 0.0
  %3213 = vmatmul.mubr.f32.gmra.mxu0 %v3125
  %v3214 = vpop.f32.mrf.mxu0
  %v3215 = vadd.f32 0.0, %v3214
  %v3216 = vpop.f32.mrf.mxu0
  %3217 = vmatprep.mubr.f32.mxu0 0.0
  %3218 = vmatmul.mubr.f32.gmra.mxu0 %v3128
  %v3219 = vpop.f32.mrf.mxu0
  %v3220 = vadd.f32 0.0, %v3219
  %v3221 = vpop.f32.mrf.mxu0
  %3222 = vmatprep.mubr.f32.mxu0 0.0
  %3223 = vmatmul.mubr.f32.gmra.mxu0 %v3131
  %v3224 = vpop.f32.mrf.mxu0
  %v3225 = vadd.f32 0.0, %v3224
  %v3226 = vpop.f32.mrf.mxu0
  %3227 = vmatprep.mubr.f32.mxu0 0.0
  %3228 = vmatmul.mubr.f32.gmra.mxu0 %v3134
  %v3229 = vpop.f32.mrf.mxu0
  %v3230 = vadd.f32 0.0, %v3229
  %v3231 = vpop.f32.mrf.mxu0
  %3232 = vmatprep.mubr.f32.mxu0 0.0
  %3233 = vmatmul.mubr.f32.gmra.mxu0 %v3137
  %v3234 = vpop.f32.mrf.mxu0
  %v3235 = vadd.f32 0.0, %v3234
  %v3236 = vpop.f32.mrf.mxu0
  %3237 = vmatprep.mubr.f32.mxu0 0.0
  %3238 = vmatmul.mubr.f32.gmra.mxu0 %v3140
  %v3239 = vpop.f32.mrf.mxu0
  %v3240 = vadd.f32 0.0, %v3239
  %v3241 = vpop.f32.mrf.mxu0
  %3242 = vmatprep.mubr.f32.mxu0 0.0
  %3243 = vmatmul.mubr.f32.gmra.mxu0 %v3143
  %v3244 = vpop.f32.mrf.mxu0
  %v3245 = vadd.f32 0.0, %v3244
  %v3246 = vpop.f32.mrf.mxu0
  %3247 = vmatprep.mubr.f32.mxu0 0.0
  %3248 = vmatmul.mubr.f32.gmra.mxu0 %v3146
  %v3249 = vpop.f32.mrf.mxu0
  %v3250 = vadd.f32 0.0, %v3249
  %v3251 = vpop.f32.mrf.mxu0
  %3252 = vdwg.mxu0
  %vm3253 = vcmp.gt.f32.partialorder %v3215, 0.0
  %vm3254 = vcmp.gt.f32.partialorder %v3220, 0.0
  %vm3255 = vcmp.gt.f32.partialorder %v3225, 0.0
  %vm3256 = vcmp.gt.f32.partialorder %v3230, 0.0
  %vm3257 = vcmp.gt.f32.partialorder %v3235, 0.0
  %vm3258 = vcmp.gt.f32.partialorder %v3240, 0.0
  %vm3259 = vcmp.gt.f32.partialorder %v3245, 0.0
  %vm3260 = vcmp.gt.f32.partialorder %v3250, 0.0
  %v3261 = vmin.f32 %v3215, 0.0
  %v3262 = vmin.f32 %v3220, 0.0
  %v3263 = vmin.f32 %v3225, 0.0
  %v3264 = vmin.f32 %v3230, 0.0
  %v3265 = vmin.f32 %v3235, 0.0
  %v3266 = vmin.f32 %v3240, 0.0
  %v3267 = vmin.f32 %v3245, 0.0
  %v3268 = vmin.f32 %v3250, 0.0
  %v3269 = vmul.f32 %v3261, 1.442695
  %v3270 = vpow.pop %v3269
  %v3271 = vmul.f32 %v3262, 1.442695
  %v3272 = vpow.pop %v3271
  %v3273 = vmul.f32 %v3263, 1.442695
  %v3274 = vpow.pop %v3273
  %v3275 = vmul.f32 %v3264, 1.442695
  %v3276 = vpow.pop %v3275
  %v3277 = vmul.f32 %v3265, 1.442695
  %v3278 = vpow.pop %v3277
  %v3279 = vmul.f32 %v3266, 1.442695
  %v3280 = vpow.pop %v3279
  %v3281 = vmul.f32 %v3267, 1.442695
  %v3282 = vpow.pop %v3281
  %v3283 = vmul.f32 %v3268, 1.442695
  %v3284 = vpow.pop %v3283
  %v3285 = vsub.f32 %v3270, 1.0
  %v3286 = vsub.f32 %v3272, 1.0
  %v3287 = vsub.f32 %v3274, 1.0
  %v3288 = vsub.f32 %v3276, 1.0
  %v3289 = vsub.f32 %v3278, 1.0
  %v3290 = vsub.f32 %v3280, 1.0
  %v3291 = vsub.f32 %v3282, 1.0
  %v3292 = vsub.f32 %v3284, 1.0
  %v3293 = vsel %vm3253, %v3215, %v3285
  %v3294 = vsel %vm3254, %v3220, %v3286
  %v3295 = vsel %vm3255, %v3225, %v3287
  %v3296 = vsel %vm3256, %v3230, %v3288
  %v3297 = vsel %vm3257, %v3235, %v3289
  %v3298 = vsel %vm3258, %v3240, %v3290
  %v3299 = vsel %vm3259, %v3245, %v3291
  %v3300 = vsel %vm3260, %v3250, %v3292
  %v3302 = vsel %vm2419, %v3293, 0
  %v3305 = vsel %vm2419, %v3294, 0
  %v3308 = vsel %vm2419, %v3295, 0
  %v3311 = vsel %vm2419, %v3296, 0
  %v3314 = vsel %vm2419, %v3297, 0
  %v3317 = vsel %vm2419, %v3298, 0
  %v3320 = vsel %vm2419, %v3299, 0
  %v3323 = vsel %vm2419, %v3300, 0
  %3325 = vmatprep.subr.mxu0 0.0
  %3326 = vmatpush1.msra.mxu0 0.0
  %3327 = vmatprep.subr.mxu0 0.0
  %3328 = vmatpush1.msra.mxu0 0.0
  %3329 = vmatprep.subr.mxu0 0.0
  %3330 = vmatpush1.msra.mxu0 0.0
  %3331 = vmatprep.subr.mxu0 0.0
  %3332 = vmatpush1.msra.mxu0 0.0
  %3333 = vmatprep.subr.mxu0 0.0
  %3334 = vmatpush1.msra.mxu0 0.0
  %3335 = vmatprep.subr.mxu0 0.0
  %3336 = vmatpush1.msra.mxu0 0.0
  %3337 = vmatprep.subr.mxu0 0.0
  %3338 = vmatpush1.msra.mxu0 0.0
  %3339 = vmatprep.subr.mxu0 0.0
  %3340 = vmatpush1.msra.mxu0 0.0
  %3341 = vmatprep.subr.mxu0 0.0
  %3342 = vmatpush1.msra.mxu0 0.0
  %3343 = vmatprep.subr.mxu0 0.0
  %3344 = vmatpush1.msra.mxu0 0.0
  %3345 = vmatprep.subr.mxu0 0.0
  %3346 = vmatpush1.msra.mxu0 0.0
  %3347 = vmatprep.subr.mxu0 0.0
  %3348 = vmatpush1.msra.mxu0 0.0
  %3349 = vmatprep.subr.mxu0 0.0
  %3350 = vmatpush1.msra.mxu0 0.0
  %3351 = vmatprep.subr.mxu0 0.0
  %3352 = vmatpush1.msra.mxu0 0.0
  %3353 = vmatprep.subr.mxu0 0.0
  %3354 = vmatpush1.msra.mxu0 0.0
  %3355 = vmatprep.subr.mxu0 0.0
  %3356 = vmatpush1.msra.mxu0 %v1595
  %3357 = vmatprep.subr.mxu0 0.0
  %3358 = vmatpush2.msra.mxu0 0.0
  %3359 = vmatprep.subr.mxu0 0.0
  %3360 = vmatpush2.msra.mxu0 0.0
  %3361 = vmatprep.subr.mxu0 0.0
  %3362 = vmatpush2.msra.mxu0 0.0
  %3363 = vmatprep.subr.mxu0 0.0
  %3364 = vmatpush2.msra.mxu0 0.0
  %3365 = vmatprep.subr.mxu0 0.0
  %3366 = vmatpush2.msra.mxu0 0.0
  %3367 = vmatprep.subr.mxu0 0.0
  %3368 = vmatpush2.msra.mxu0 0.0
  %3369 = vmatprep.subr.mxu0 0.0
  %3370 = vmatpush2.msra.mxu0 0.0
  %3371 = vmatprep.subr.mxu0 0.0
  %3372 = vmatpush2.msra.mxu0 0.0
  %3373 = vmatprep.subr.mxu0 0.0
  %3374 = vmatpush2.msra.mxu0 0.0
  %3375 = vmatprep.subr.mxu0 0.0
  %3376 = vmatpush2.msra.mxu0 0.0
  %3377 = vmatprep.subr.mxu0 0.0
  %3378 = vmatpush2.msra.mxu0 0.0
  %3379 = vmatprep.subr.mxu0 0.0
  %3380 = vmatpush2.msra.mxu0 0.0
  %3381 = vmatprep.subr.mxu0 0.0
  %3382 = vmatpush2.msra.mxu0 0.0
  %3383 = vmatprep.subr.mxu0 0.0
  %3384 = vmatpush2.msra.mxu0 0.0
  %3385 = vmatprep.subr.mxu0 0.0
  %3386 = vmatpush2.msra.mxu0 0.0
  %3387 = vmatprep.subr.mxu0 0.0
  %3388 = vmatpush2.msra.mxu0 0.0
  %3389 = vmatprep.mubr.f32.mxu0 0.0
  %3390 = vmatmul.mubr.f32.gmra.mxu0 %v3302
  %v3391 = vpop.f32.mrf.mxu0
  %v3392 = vadd.f32 0.0, %v3391
  %v3393 = vpop.f32.mrf.mxu0
  %3394 = vmatprep.mubr.f32.mxu0 0.0
  %3395 = vmatmul.mubr.f32.gmra.mxu0 %v3305
  %v3396 = vpop.f32.mrf.mxu0
  %v3397 = vadd.f32 0.0, %v3396
  %v3398 = vpop.f32.mrf.mxu0
  %3399 = vmatprep.mubr.f32.mxu0 0.0
  %3400 = vmatmul.mubr.f32.gmra.mxu0 %v3308
  %v3401 = vpop.f32.mrf.mxu0
  %v3402 = vadd.f32 0.0, %v3401
  %v3403 = vpop.f32.mrf.mxu0
  %3404 = vmatprep.mubr.f32.mxu0 0.0
  %3405 = vmatmul.mubr.f32.gmra.mxu0 %v3311
  %v3406 = vpop.f32.mrf.mxu0
  %v3407 = vadd.f32 0.0, %v3406
  %v3408 = vpop.f32.mrf.mxu0
  %3409 = vmatprep.mubr.f32.mxu0 0.0
  %3410 = vmatmul.mubr.f32.gmra.mxu0 %v3314
  %v3411 = vpop.f32.mrf.mxu0
  %v3412 = vadd.f32 0.0, %v3411
  %v3413 = vpop.f32.mrf.mxu0
  %3414 = vmatprep.mubr.f32.mxu0 0.0
  %3415 = vmatmul.mubr.f32.gmra.mxu0 %v3317
  %v3416 = vpop.f32.mrf.mxu0
  %v3417 = vadd.f32 0.0, %v3416
  %v3418 = vpop.f32.mrf.mxu0
  %3419 = vmatprep.mubr.f32.mxu0 0.0
  %3420 = vmatmul.mubr.f32.gmra.mxu0 %v3320
  %v3421 = vpop.f32.mrf.mxu0
  %v3422 = vadd.f32 0.0, %v3421
  %v3423 = vpop.f32.mrf.mxu0
  %3424 = vmatprep.mubr.f32.mxu0 0.0
  %3425 = vmatmul.mubr.f32.gmra.mxu0 %v3323
  %v3426 = vpop.f32.mrf.mxu0
  %v3427 = vadd.f32 0.0, %v3426
  %v3428 = vpop.f32.mrf.mxu0
  %3429 = vdwg.mxu0
  %v3430 = vadd.f32 %v2640, %v3392
  %v3431 = vadd.f32 %v2645, %v3397
  %v3432 = vadd.f32 %v2650, %v3402
  %v3433 = vadd.f32 %v2655, %v3407
  %v3434 = vadd.f32 %v2660, %v3412
  %v3435 = vadd.f32 %v2665, %v3417
  %v3436 = vadd.f32 %v2670, %v3422
  %v3437 = vadd.f32 %v2675, %v3427
  %3438 = vmatprep.subr.mxu0 0.0
  %3439 = vmatpush1.msra.mxu0 0.0
  %3440 = vmatprep.subr.mxu0 0.0
  %3441 = vmatpush1.msra.mxu0 0.0
  %3442 = vmatprep.subr.mxu0 0.0
  %3443 = vmatpush1.msra.mxu0 0.0
  %3444 = vmatprep.subr.mxu0 0.0
  %3445 = vmatpush1.msra.mxu0 0.0
  %3446 = vmatprep.subr.mxu0 0.0
  %3447 = vmatpush1.msra.mxu0 0.0
  %3448 = vmatprep.subr.mxu0 0.0
  %3449 = vmatpush1.msra.mxu0 0.0
  %3450 = vmatprep.subr.mxu0 0.0
  %3451 = vmatpush1.msra.mxu0 0.0
  %3452 = vmatprep.subr.mxu0 0.0
  %3453 = vmatpush1.msra.mxu0 0.0
  %3454 = vmatprep.subr.mxu0 0.0
  %3455 = vmatpush1.msra.mxu0 0.0
  %3456 = vmatprep.subr.mxu0 0.0
  %3457 = vmatpush1.msra.mxu0 0.0
  %3458 = vmatprep.subr.mxu0 0.0
  %3459 = vmatpush1.msra.mxu0 0.0
  %3460 = vmatprep.subr.mxu0 0.0
  %3461 = vmatpush1.msra.mxu0 0.0
  %3462 = vmatprep.subr.mxu0 0.0
  %3463 = vmatpush1.msra.mxu0 0.0
  %3464 = vmatprep.subr.mxu0 0.0
  %3465 = vmatpush1.msra.mxu0 0.0
  %3466 = vmatprep.subr.mxu0 0.0
  %3467 = vmatpush1.msra.mxu0 0.0
  %3468 = vmatprep.subr.mxu0 0.0
  %3469 = vmatpush1.msra.mxu0 %v1599
  %3470 = vmatprep.subr.mxu0 0.0
  %3471 = vmatpush2.msra.mxu0 0.0
  %3472 = vmatprep.subr.mxu0 0.0
  %3473 = vmatpush2.msra.mxu0 0.0
  %3474 = vmatprep.subr.mxu0 0.0
  %3475 = vmatpush2.msra.mxu0 0.0
  %3476 = vmatprep.subr.mxu0 0.0
  %3477 = vmatpush2.msra.mxu0 0.0
  %3478 = vmatprep.subr.mxu0 0.0
  %3479 = vmatpush2.msra.mxu0 0.0
  %3480 = vmatprep.subr.mxu0 0.0
  %3481 = vmatpush2.msra.mxu0 0.0
  %3482 = vmatprep.subr.mxu0 0.0
  %3483 = vmatpush2.msra.mxu0 0.0
  %3484 = vmatprep.subr.mxu0 0.0
  %3485 = vmatpush2.msra.mxu0 0.0
  %3486 = vmatprep.subr.mxu0 0.0
  %3487 = vmatpush2.msra.mxu0 0.0
  %3488 = vmatprep.subr.mxu0 0.0
  %3489 = vmatpush2.msra.mxu0 0.0
  %3490 = vmatprep.subr.mxu0 0.0
  %3491 = vmatpush2.msra.mxu0 0.0
  %3492 = vmatprep.subr.mxu0 0.0
  %3493 = vmatpush2.msra.mxu0 0.0
  %3494 = vmatprep.subr.mxu0 0.0
  %3495 = vmatpush2.msra.mxu0 0.0
  %3496 = vmatprep.subr.mxu0 0.0
  %3497 = vmatpush2.msra.mxu0 0.0
  %3498 = vmatprep.subr.mxu0 0.0
  %3499 = vmatpush2.msra.mxu0 0.0
  %3500 = vmatprep.subr.mxu0 0.0
  %3501 = vmatpush2.msra.mxu0 0.0
  %3502 = vmatprep.mubr.f32.mxu0 0.0
  %3503 = vmatmul.mubr.f32.gmra.mxu0 %v3302
  %v3504 = vpop.f32.mrf.mxu0
  %v3505 = vadd.f32 0.0, %v3504
  %v3506 = vpop.f32.mrf.mxu0
  %3507 = vmatprep.mubr.f32.mxu0 0.0
  %3508 = vmatmul.mubr.f32.gmra.mxu0 %v3305
  %v3509 = vpop.f32.mrf.mxu0
  %v3510 = vadd.f32 0.0, %v3509
  %v3511 = vpop.f32.mrf.mxu0
  %3512 = vmatprep.mubr.f32.mxu0 0.0
  %3513 = vmatmul.mubr.f32.gmra.mxu0 %v3308
  %v3514 = vpop.f32.mrf.mxu0
  %v3515 = vadd.f32 0.0, %v3514
  %v3516 = vpop.f32.mrf.mxu0
  %3517 = vmatprep.mubr.f32.mxu0 0.0
  %3518 = vmatmul.mubr.f32.gmra.mxu0 %v3311
  %v3519 = vpop.f32.mrf.mxu0
  %v3520 = vadd.f32 0.0, %v3519
  %v3521 = vpop.f32.mrf.mxu0
  %3522 = vmatprep.mubr.f32.mxu0 0.0
  %3523 = vmatmul.mubr.f32.gmra.mxu0 %v3314
  %v3524 = vpop.f32.mrf.mxu0
  %v3525 = vadd.f32 0.0, %v3524
  %v3526 = vpop.f32.mrf.mxu0
  %3527 = vmatprep.mubr.f32.mxu0 0.0
  %3528 = vmatmul.mubr.f32.gmra.mxu0 %v3317
  %v3529 = vpop.f32.mrf.mxu0
  %v3530 = vadd.f32 0.0, %v3529
  %v3531 = vpop.f32.mrf.mxu0
  %3532 = vmatprep.mubr.f32.mxu0 0.0
  %3533 = vmatmul.mubr.f32.gmra.mxu0 %v3320
  %v3534 = vpop.f32.mrf.mxu0
  %v3535 = vadd.f32 0.0, %v3534
  %v3536 = vpop.f32.mrf.mxu0
  %3537 = vmatprep.mubr.f32.mxu0 0.0
  %3538 = vmatmul.mubr.f32.gmra.mxu0 %v3323
  %v3539 = vpop.f32.mrf.mxu0
  %v3540 = vadd.f32 0.0, %v3539
  %v3541 = vpop.f32.mrf.mxu0
  %3542 = vdwg.mxu0
  %v3543 = vadd.f32 %v2850, %v3505
  %v3544 = vadd.f32 %v2855, %v3510
  %v3545 = vadd.f32 %v2860, %v3515
  %v3546 = vadd.f32 %v2865, %v3520
  %v3547 = vadd.f32 %v2870, %v3525
  %v3548 = vadd.f32 %v2875, %v3530
  %v3549 = vadd.f32 %v2880, %v3535
  %v3550 = vadd.f32 %v2885, %v3540
  %3551 = vrot.lane.b32.xlu0 %v1555, 121
  %v3552 = vpop.permute.xlu0 %3551
  %3553 = vrot.lane.b32.xlu0 %v1560, 121
  %v3554 = vpop.permute.xlu0 %3553
  %3555 = vrot.lane.b32.xlu0 %v1565, 121
  %v3556 = vpop.permute.xlu0 %3555
  %3557 = vrot.lane.b32.xlu0 %v1570, 121
  %v3558 = vpop.permute.xlu0 %3557
  %3559 = vrot.lane.b32.xlu0 %v1575, 121
  %v3560 = vpop.permute.xlu0 %3559
  %3561 = vrot.lane.b32.xlu0 %v1580, 121
  %v3562 = vpop.permute.xlu0 %3561
  %3563 = vrot.lane.b32.xlu0 %v1585, 121
  %v3564 = vpop.permute.xlu0 %3563
  %3565 = vrot.lane.b32.xlu0 %v1590, 121
  %v3566 = vpop.permute.xlu0 %3565
  %3575 = vxpose.xlu0.b32.start [1/16] %v3552, 128
  %3576 = vxpose.xlu0.b32.cont [2/16] %v3554, 128
  %3577 = vxpose.xlu0.b32.cont [3/16] %v3556, 128
  %3578 = vxpose.xlu0.b32.cont [4/16] %v3558, 128
  %3579 = vxpose.xlu0.b32.cont [5/16] %v3560, 128
  %3580 = vxpose.xlu0.b32.cont [6/16] %v3562, 128
  %3581 = vxpose.xlu0.b32.cont [7/16] %v3564, 128
  %3582 = vxpose.xlu0.b32.cont [8/16] %v3566, 128
  %3583 = vxpose.xlu0.b32.cont [9/16] 0.0, 128
  %3584 = vxpose.xlu0.b32.cont [10/16] 0.0, 128
  %3585 = vxpose.xlu0.b32.cont [11/16] 0.0, 128
  %3586 = vxpose.xlu0.b32.cont [12/16] 0.0, 128
  %3587 = vxpose.xlu0.b32.cont [13/16] 0.0, 128
  %3588 = vxpose.xlu0.b32.cont [14/16] 0.0, 128
  %3589 = vxpose.xlu0.b32.cont [15/16] 0.0, 128
  %3590 = vxpose.xlu0.b32.end [16/16] 0.0, 128
  %v3591 = vpop.trf.xlu0
  %v3592 = vpop.trf.xlu0
  %v3593 = vpop.trf.xlu0
  %v3594 = vpop.trf.xlu0
  %v3595 = vpop.trf.xlu0
  %v3596 = vpop.trf.xlu0
  %v3597 = vpop.trf.xlu0
  %v3598 = vpop.trf.xlu0
  %v3599 = vpop.trf.xlu0
  %v3600 = vpop.trf.xlu0
  %v3601 = vpop.trf.xlu0
  %v3602 = vpop.trf.xlu0
  %v3603 = vpop.trf.xlu0
  %v3604 = vpop.trf.xlu0
  %v3605 = vpop.trf.xlu0
  %v3606 = vpop.trf.xlu0
  %3607 = vset.pattern.permute.xlu0 3
  %3608 = vperm.xlu0 %3607, %v1555
  %v3609 = vpop.permute.xlu0 %3608
  %3611 = vset.pattern.permute.xlu0 3
  %3612 = vperm.xlu0 %3611, %v1560
  %v3613 = vpop.permute.xlu0 %3612
  %3615 = vset.pattern.permute.xlu0 3
  %3616 = vperm.xlu0 %3615, %v1565
  %v3617 = vpop.permute.xlu0 %3616
  %3619 = vset.pattern.permute.xlu0 3
  %3620 = vperm.xlu0 %3619, %v1570
  %v3621 = vpop.permute.xlu0 %3620
  %3623 = vset.pattern.permute.xlu0 3
  %3624 = vperm.xlu0 %3623, %v1575
  %v3625 = vpop.permute.xlu0 %3624
  %3627 = vset.pattern.permute.xlu0 3
  %3628 = vperm.xlu0 %3627, %v1580
  %v3629 = vpop.permute.xlu0 %3628
  %3631 = vset.pattern.permute.xlu0 3
  %3632 = vperm.xlu0 %3631, %v1585
  %v3633 = vpop.permute.xlu0 %3632
  %3635 = vset.pattern.permute.xlu0 3
  %3636 = vperm.xlu0 %3635, %v1590
  %v3637 = vpop.permute.xlu0 %3636
  %v3639 = vlaneseq
  %v3640 = vshrl.u32 %v3639, 7
  %v3641 = vsub.s32 0, %v3640
  %v3642 = vrot.slane %v3591, %v3641
  %v3643 = vadd.f32 %v3609, %v3642
  %v3644 = vadd.f32 %v3613, %v3642
  %v3645 = vadd.f32 %v3617, %v3642
  %v3646 = vadd.f32 %v3621, %v3642
  %v3647 = vadd.f32 %v3625, %v3642
  %v3648 = vadd.f32 %v3629, %v3642
  %v3649 = vadd.f32 %v3633, %v3642
  %v3650 = vadd.f32 %v3637, %v3642
  %vm3651 = vcmp.gt.f32.partialorder %v3643, 0.0
  %vm3652 = vcmp.gt.f32.partialorder %v3644, 0.0
  %vm3653 = vcmp.gt.f32.partialorder %v3645, 0.0
  %vm3654 = vcmp.gt.f32.partialorder %v3646, 0.0
  %vm3655 = vcmp.gt.f32.partialorder %v3647, 0.0
  %vm3656 = vcmp.gt.f32.partialorder %v3648, 0.0
  %vm3657 = vcmp.gt.f32.partialorder %v3649, 0.0
  %vm3658 = vcmp.gt.f32.partialorder %v3650, 0.0
  %v3659 = vmul.f32 %v3643, 0.2
  %v3660 = vmul.f32 %v3644, 0.2
  %v3661 = vmul.f32 %v3645, 0.2
  %v3662 = vmul.f32 %v3646, 0.2
  %v3663 = vmul.f32 %v3647, 0.2
  %v3664 = vmul.f32 %v3648, 0.2
  %v3665 = vmul.f32 %v3649, 0.2
  %v3666 = vmul.f32 %v3650, 0.2
  %v3667 = vsel %vm3651, %v3643, %v3659
  %v3668 = vsel %vm3652, %v3644, %v3660
  %v3669 = vsel %vm3653, %v3645, %v3661
  %v3670 = vsel %vm3654, %v3646, %v3662
  %v3671 = vsel %vm3655, %v3647, %v3663
  %v3672 = vsel %vm3656, %v3648, %v3664
  %v3673 = vsel %vm3657, %v3649, %v3665
  %v3674 = vsel %vm3658, %v3650, %v3666
  %v3675 = vsel %vm667, %v3667, -inf
  %3676 = vmax.xlane.f32.xlu0 %v3675
  %v3677 = vpop.xlane.xlu0 %3676
  %v3678 = vsel %vm667, %v3668, -inf
  %3679 = vmax.xlane.f32.xlu0 %v3678
  %v3680 = vpop.xlane.xlu0 %3679
  %v3681 = vsel %vm667, %v3669, -inf
  %3682 = vmax.xlane.f32.xlu0 %v3681
  %v3683 = vpop.xlane.xlu0 %3682
  %v3684 = vsel %vm667, %v3670, -inf
  %3685 = vmax.xlane.f32.xlu0 %v3684
  %v3686 = vpop.xlane.xlu0 %3685
  %v3687 = vsel %vm667, %v3671, -inf
  %3688 = vmax.xlane.f32.xlu0 %v3687
  %v3689 = vpop.xlane.xlu0 %3688
  %v3690 = vsel %vm667, %v3672, -inf
  %3691 = vmax.xlane.f32.xlu0 %v3690
  %v3692 = vpop.xlane.xlu0 %3691
  %v3693 = vsel %vm667, %v3673, -inf
  %3694 = vmax.xlane.f32.xlu0 %v3693
  %v3695 = vpop.xlane.xlu0 %3694
  %v3696 = vsel %vm667, %v3674, -inf
  %3697 = vmax.xlane.f32.xlu0 %v3696
  %v3698 = vpop.xlane.xlu0 %3697
  %v3699 = vsub.f32 %v3667, %v3677
  %v3700 = vsub.f32 %v3668, %v3680
  %v3701 = vsub.f32 %v3669, %v3683
  %v3702 = vsub.f32 %v3670, %v3686
  %v3703 = vsub.f32 %v3671, %v3689
  %v3704 = vsub.f32 %v3672, %v3692
  %v3705 = vsub.f32 %v3673, %v3695
  %v3706 = vsub.f32 %v3674, %v3698
  %v3707 = vmul.f32 %v3699, 1.442695
  %v3708 = vpow.pop %v3707
  %v3709 = vmul.f32 %v3700, 1.442695
  %v3710 = vpow.pop %v3709
  %v3711 = vmul.f32 %v3701, 1.442695
  %v3712 = vpow.pop %v3711
  %v3713 = vmul.f32 %v3702, 1.442695
  %v3714 = vpow.pop %v3713
  %v3715 = vmul.f32 %v3703, 1.442695
  %v3716 = vpow.pop %v3715
  %v3717 = vmul.f32 %v3704, 1.442695
  %v3718 = vpow.pop %v3717
  %v3719 = vmul.f32 %v3705, 1.442695
  %v3720 = vpow.pop %v3719
  %v3721 = vmul.f32 %v3706, 1.442695
  %v3722 = vpow.pop %v3721
  %v3723 = vsel %vm667, %v3708, 0.0
  %3724 = vadd.xlane.f32.xlu0 %v3723
  %v3725 = vpop.xlane.xlu0 %3724
  %v3726 = vsel %vm667, %v3710, 0.0
  %3727 = vadd.xlane.f32.xlu0 %v3726
  %v3728 = vpop.xlane.xlu0 %3727
  %v3729 = vsel %vm667, %v3712, 0.0
  %3730 = vadd.xlane.f32.xlu0 %v3729
  %v3731 = vpop.xlane.xlu0 %3730
  %v3732 = vsel %vm667, %v3714, 0.0
  %3733 = vadd.xlane.f32.xlu0 %v3732
  %v3734 = vpop.xlane.xlu0 %3733
  %v3735 = vsel %vm667, %v3716, 0.0
  %3736 = vadd.xlane.f32.xlu0 %v3735
  %v3737 = vpop.xlane.xlu0 %3736
  %v3738 = vsel %vm667, %v3718, 0.0
  %3739 = vadd.xlane.f32.xlu0 %v3738
  %v3740 = vpop.xlane.xlu0 %3739
  %v3741 = vsel %vm667, %v3720, 0.0
  %3742 = vadd.xlane.f32.xlu0 %v3741
  %v3743 = vpop.xlane.xlu0 %3742
  %v3744 = vsel %vm667, %v3722, 0.0
  %3745 = vadd.xlane.f32.xlu0 %v3744
  %v3746 = vpop.xlane.xlu0 %3745
  %v3747 = vrcp.pop %v3725
  %v3748 = vrcp.pop %v3728
  %v3749 = vrcp.pop %v3731
  %v3750 = vrcp.pop %v3734
  %v3751 = vrcp.pop %v3737
  %v3752 = vrcp.pop %v3740
  %v3753 = vrcp.pop %v3743
  %v3754 = vrcp.pop %v3746
  %v3755 = vmul.f32 %v3708, %v3747
  %v3756 = vmul.f32 %v3710, %v3748
  %v3757 = vmul.f32 %v3712, %v3749
  %v3758 = vmul.f32 %v3714, %v3750
  %v3759 = vmul.f32 %v3716, %v3751
  %v3760 = vmul.f32 %v3718, %v3752
  %v3761 = vmul.f32 %v3720, %v3753
  %v3762 = vmul.f32 %v3722, %v3754
  %3763 = vrot.lane.b32.xlu0 %v1434, 104
  %v3764 = vpop.permute.xlu0 %3763
  %3765 = vrot.lane.b32.xlu0 %v1439, 104
  %v3766 = vpop.permute.xlu0 %3765
  %3767 = vrot.lane.b32.xlu0 %v1444, 104
  %v3768 = vpop.permute.xlu0 %3767
  %3769 = vrot.lane.b32.xlu0 %v1449, 104
  %v3770 = vpop.permute.xlu0 %3769
  %3771 = vrot.lane.b32.xlu0 %v1454, 104
  %v3772 = vpop.permute.xlu0 %3771
  %3773 = vrot.lane.b32.xlu0 %v1459, 104
  %v3774 = vpop.permute.xlu0 %3773
  %3775 = vrot.lane.b32.xlu0 %v1464, 104
  %v3776 = vpop.permute.xlu0 %3775
  %3777 = vrot.lane.b32.xlu0 %v1469, 104
  %v3778 = vpop.permute.xlu0 %3777
  %v3788 = vsel %vm667, %v3755, 0
  %v3791 = vsel %vm667, %v3756, 0
  %v3794 = vsel %vm667, %v3757, 0
  %v3797 = vsel %vm667, %v3758, 0
  %v3800 = vsel %vm667, %v3759, 0
  %v3803 = vsel %vm667, %v3760, 0
  %v3806 = vsel %vm667, %v3761, 0
  %v3809 = vsel %vm667, %v3762, 0
  %3811 = vmatprep.subr.mxu0 0.0
  %3812 = vmatpush1.msra.mxu0 0.0
  %3813 = vmatprep.subr.mxu0 0.0
  %3814 = vmatpush1.msra.mxu0 0.0
  %3815 = vmatprep.subr.mxu0 0.0
  %3816 = vmatpush1.msra.mxu0 0.0
  %3817 = vmatprep.subr.mxu0 0.0
  %3818 = vmatpush1.msra.mxu0 0.0
  %3819 = vmatprep.subr.mxu0 0.0
  %3820 = vmatpush1.msra.mxu0 0.0
  %3821 = vmatprep.subr.mxu0 0.0
  %3822 = vmatpush1.msra.mxu0 0.0
  %3823 = vmatprep.subr.mxu0 0.0
  %3824 = vmatpush1.msra.mxu0 0.0
  %3825 = vmatprep.subr.mxu0 0.0
  %3826 = vmatpush1.msra.mxu0 0.0
  %3827 = vmatprep.subr.mxu0 0.0
  %3828 = vmatpush1.msra.mxu0 %v3778
  %3829 = vmatprep.subr.mxu0 0.0
  %3830 = vmatpush1.msra.mxu0 %v3776
  %3831 = vmatprep.subr.mxu0 0.0
  %3832 = vmatpush1.msra.mxu0 %v3774
  %3833 = vmatprep.subr.mxu0 0.0
  %3834 = vmatpush1.msra.mxu0 %v3772
  %3835 = vmatprep.subr.mxu0 0.0
  %3836 = vmatpush1.msra.mxu0 %v3770
  %3837 = vmatprep.subr.mxu0 0.0
  %3838 = vmatpush1.msra.mxu0 %v3768
  %3839 = vmatprep.subr.mxu0 0.0
  %3840 = vmatpush1.msra.mxu0 %v3766
  %3841 = vmatprep.subr.mxu0 0.0
  %3842 = vmatpush1.msra.mxu0 %v3764
  %3843 = vmatprep.subr.mxu0 0.0
  %3844 = vmatpush2.msra.mxu0 0.0
  %3845 = vmatprep.subr.mxu0 0.0
  %3846 = vmatpush2.msra.mxu0 0.0
  %3847 = vmatprep.subr.mxu0 0.0
  %3848 = vmatpush2.msra.mxu0 0.0
  %3849 = vmatprep.subr.mxu0 0.0
  %3850 = vmatpush2.msra.mxu0 0.0
  %3851 = vmatprep.subr.mxu0 0.0
  %3852 = vmatpush2.msra.mxu0 0.0
  %3853 = vmatprep.subr.mxu0 0.0
  %3854 = vmatpush2.msra.mxu0 0.0
  %3855 = vmatprep.subr.mxu0 0.0
  %3856 = vmatpush2.msra.mxu0 0.0
  %3857 = vmatprep.subr.mxu0 0.0
  %3858 = vmatpush2.msra.mxu0 0.0
  %3859 = vmatprep.subr.mxu0 0.0
  %3860 = vmatpush2.msra.mxu0 0.0
  %3861 = vmatprep.subr.mxu0 0.0
  %3862 = vmatpush2.msra.mxu0 0.0
  %3863 = vmatprep.subr.mxu0 0.0
  %3864 = vmatpush2.msra.mxu0 0.0
  %3865 = vmatprep.subr.mxu0 0.0
  %3866 = vmatpush2.msra.mxu0 0.0
  %3867 = vmatprep.subr.mxu0 0.0
  %3868 = vmatpush2.msra.mxu0 0.0
  %3869 = vmatprep.subr.mxu0 0.0
  %3870 = vmatpush2.msra.mxu0 0.0
  %3871 = vmatprep.subr.mxu0 0.0
  %3872 = vmatpush2.msra.mxu0 0.0
  %3873 = vmatprep.subr.mxu0 0.0
  %3874 = vmatpush2.msra.mxu0 0.0
  %3875 = vmatprep.mubr.f32.mxu0 0.0
  %3876 = vmatmul.mubr.f32.gmra.mxu0 %v3788
  %v3877 = vpop.f32.mrf.mxu0
  %v3878 = vadd.f32 0.0, %v3877
  %v3879 = vpop.f32.mrf.mxu0
  %3880 = vmatprep.mubr.f32.mxu0 0.0
  %3881 = vmatmul.mubr.f32.gmra.mxu0 %v3791
  %v3882 = vpop.f32.mrf.mxu0
  %v3883 = vadd.f32 0.0, %v3882
  %v3884 = vpop.f32.mrf.mxu0
  %3885 = vmatprep.mubr.f32.mxu0 0.0
  %3886 = vmatmul.mubr.f32.gmra.mxu0 %v3794
  %v3887 = vpop.f32.mrf.mxu0
  %v3888 = vadd.f32 0.0, %v3887
  %v3889 = vpop.f32.mrf.mxu0
  %3890 = vmatprep.mubr.f32.mxu0 0.0
  %3891 = vmatmul.mubr.f32.gmra.mxu0 %v3797
  %v3892 = vpop.f32.mrf.mxu0
  %v3893 = vadd.f32 0.0, %v3892
  %v3894 = vpop.f32.mrf.mxu0
  %3895 = vmatprep.mubr.f32.mxu0 0.0
  %3896 = vmatmul.mubr.f32.gmra.mxu0 %v3800
  %v3897 = vpop.f32.mrf.mxu0
  %v3898 = vadd.f32 0.0, %v3897
  %v3899 = vpop.f32.mrf.mxu0
  %3900 = vmatprep.mubr.f32.mxu0 0.0
  %3901 = vmatmul.mubr.f32.gmra.mxu0 %v3803
  %v3902 = vpop.f32.mrf.mxu0
  %v3903 = vadd.f32 0.0, %v3902
  %v3904 = vpop.f32.mrf.mxu0
  %3905 = vmatprep.mubr.f32.mxu0 0.0
  %3906 = vmatmul.mubr.f32.gmra.mxu0 %v3806
  %v3907 = vpop.f32.mrf.mxu0
  %v3908 = vadd.f32 0.0, %v3907
  %v3909 = vpop.f32.mrf.mxu0
  %3910 = vmatprep.mubr.f32.mxu0 0.0
  %3911 = vmatmul.mubr.f32.gmra.mxu0 %v3809
  %v3912 = vpop.f32.mrf.mxu0
  %v3913 = vadd.f32 0.0, %v3912
  %v3914 = vpop.f32.mrf.mxu0
  %3915 = vdwg.mxu0
  %vm3916 = vcmp.gt.f32.partialorder %v3878, 0.0
  %vm3917 = vcmp.gt.f32.partialorder %v3883, 0.0
  %vm3918 = vcmp.gt.f32.partialorder %v3888, 0.0
  %vm3919 = vcmp.gt.f32.partialorder %v3893, 0.0
  %vm3920 = vcmp.gt.f32.partialorder %v3898, 0.0
  %vm3921 = vcmp.gt.f32.partialorder %v3903, 0.0
  %vm3922 = vcmp.gt.f32.partialorder %v3908, 0.0
  %vm3923 = vcmp.gt.f32.partialorder %v3913, 0.0
  %v3924 = vmin.f32 %v3878, 0.0
  %v3925 = vmin.f32 %v3883, 0.0
  %v3926 = vmin.f32 %v3888, 0.0
  %v3927 = vmin.f32 %v3893, 0.0
  %v3928 = vmin.f32 %v3898, 0.0
  %v3929 = vmin.f32 %v3903, 0.0
  %v3930 = vmin.f32 %v3908, 0.0
  %v3931 = vmin.f32 %v3913, 0.0
  %v3932 = vmul.f32 %v3924, 1.442695
  %v3933 = vpow.pop %v3932
  %v3934 = vmul.f32 %v3925, 1.442695
  %v3935 = vpow.pop %v3934
  %v3936 = vmul.f32 %v3926, 1.442695
  %v3937 = vpow.pop %v3936
  %v3938 = vmul.f32 %v3927, 1.442695
  %v3939 = vpow.pop %v3938
  %v3940 = vmul.f32 %v3928, 1.442695
  %v3941 = vpow.pop %v3940
  %v3942 = vmul.f32 %v3929, 1.442695
  %v3943 = vpow.pop %v3942
  %v3944 = vmul.f32 %v3930, 1.442695
  %v3945 = vpow.pop %v3944
  %v3946 = vmul.f32 %v3931, 1.442695
  %v3947 = vpow.pop %v3946
  %v3948 = vsub.f32 %v3933, 1.0
  %v3949 = vsub.f32 %v3935, 1.0
  %v3950 = vsub.f32 %v3937, 1.0
  %v3951 = vsub.f32 %v3939, 1.0
  %v3952 = vsub.f32 %v3941, 1.0
  %v3953 = vsub.f32 %v3943, 1.0
  %v3954 = vsub.f32 %v3945, 1.0
  %v3955 = vsub.f32 %v3947, 1.0
  %v3956 = vsel %vm3916, %v3878, %v3948
  %v3957 = vsel %vm3917, %v3883, %v3949
  %v3958 = vsel %vm3918, %v3888, %v3950
  %v3959 = vsel %vm3919, %v3893, %v3951
  %v3960 = vsel %vm3920, %v3898, %v3952
  %v3961 = vsel %vm3921, %v3903, %v3953
  %v3962 = vsel %vm3922, %v3908, %v3954
  %v3963 = vsel %vm3923, %v3913, %v3955
  %v3965 = vsel %vm2419, %v3956, 0
  %v3968 = vsel %vm2419, %v3957, 0
  %v3971 = vsel %vm2419, %v3958, 0
  %v3974 = vsel %vm2419, %v3959, 0
  %v3977 = vsel %vm2419, %v3960, 0
  %v3980 = vsel %vm2419, %v3961, 0
  %v3983 = vsel %vm2419, %v3962, 0
  %v3986 = vsel %vm2419, %v3963, 0
  %3988 = vmatprep.subr.mxu0 0.0
  %3989 = vmatpush1.msra.mxu0 0.0
  %3990 = vmatprep.subr.mxu0 0.0
  %3991 = vmatpush1.msra.mxu0 0.0
  %3992 = vmatprep.subr.mxu0 0.0
  %3993 = vmatpush1.msra.mxu0 0.0
  %3994 = vmatprep.subr.mxu0 0.0
  %3995 = vmatpush1.msra.mxu0 0.0
  %3996 = vmatprep.subr.mxu0 0.0
  %3997 = vmatpush1.msra.mxu0 0.0
  %3998 = vmatprep.subr.mxu0 0.0
  %3999 = vmatpush1.msra.mxu0 0.0
  %4000 = vmatprep.subr.mxu0 0.0
  %4001 = vmatpush1.msra.mxu0 0.0
  %4002 = vmatprep.subr.mxu0 0.0
  %4003 = vmatpush1.msra.mxu0 0.0
  %4004 = vmatprep.subr.mxu0 0.0
  %4005 = vmatpush1.msra.mxu0 0.0
  %4006 = vmatprep.subr.mxu0 0.0
  %4007 = vmatpush1.msra.mxu0 0.0
  %4008 = vmatprep.subr.mxu0 0.0
  %4009 = vmatpush1.msra.mxu0 0.0
  %4010 = vmatprep.subr.mxu0 0.0
  %4011 = vmatpush1.msra.mxu0 0.0
  %4012 = vmatprep.subr.mxu0 0.0
  %4013 = vmatpush1.msra.mxu0 0.0
  %4014 = vmatprep.subr.mxu0 0.0
  %4015 = vmatpush1.msra.mxu0 0.0
  %4016 = vmatprep.subr.mxu0 0.0
  %4017 = vmatpush1.msra.mxu0 0.0
  %4018 = vmatprep.subr.mxu0 0.0
  %4019 = vmatpush1.msra.mxu0 %v1596
  %4020 = vmatprep.subr.mxu0 0.0
  %4021 = vmatpush2.msra.mxu0 0.0
  %4022 = vmatprep.subr.mxu0 0.0
  %4023 = vmatpush2.msra.mxu0 0.0
  %4024 = vmatprep.subr.mxu0 0.0
  %4025 = vmatpush2.msra.mxu0 0.0
  %4026 = vmatprep.subr.mxu0 0.0
  %4027 = vmatpush2.msra.mxu0 0.0
  %4028 = vmatprep.subr.mxu0 0.0
  %4029 = vmatpush2.msra.mxu0 0.0
  %4030 = vmatprep.subr.mxu0 0.0
  %4031 = vmatpush2.msra.mxu0 0.0
  %4032 = vmatprep.subr.mxu0 0.0
  %4033 = vmatpush2.msra.mxu0 0.0
  %4034 = vmatprep.subr.mxu0 0.0
  %4035 = vmatpush2.msra.mxu0 0.0
  %4036 = vmatprep.subr.mxu0 0.0
  %4037 = vmatpush2.msra.mxu0 0.0
  %4038 = vmatprep.subr.mxu0 0.0
  %4039 = vmatpush2.msra.mxu0 0.0
  %4040 = vmatprep.subr.mxu0 0.0
  %4041 = vmatpush2.msra.mxu0 0.0
  %4042 = vmatprep.subr.mxu0 0.0
  %4043 = vmatpush2.msra.mxu0 0.0
  %4044 = vmatprep.subr.mxu0 0.0
  %4045 = vmatpush2.msra.mxu0 0.0
  %4046 = vmatprep.subr.mxu0 0.0
  %4047 = vmatpush2.msra.mxu0 0.0
  %4048 = vmatprep.subr.mxu0 0.0
  %4049 = vmatpush2.msra.mxu0 0.0
  %4050 = vmatprep.subr.mxu0 0.0
  %4051 = vmatpush2.msra.mxu0 0.0
  %4052 = vmatprep.mubr.f32.mxu0 0.0
  %4053 = vmatmul.mubr.f32.gmra.mxu0 %v3965
  %v4054 = vpop.f32.mrf.mxu0
  %v4055 = vadd.f32 0.0, %v4054
  %v4056 = vpop.f32.mrf.mxu0
  %4057 = vmatprep.mubr.f32.mxu0 0.0
  %4058 = vmatmul.mubr.f32.gmra.mxu0 %v3968
  %v4059 = vpop.f32.mrf.mxu0
  %v4060 = vadd.f32 0.0, %v4059
  %v4061 = vpop.f32.mrf.mxu0
  %4062 = vmatprep.mubr.f32.mxu0 0.0
  %4063 = vmatmul.mubr.f32.gmra.mxu0 %v3971
  %v4064 = vpop.f32.mrf.mxu0
  %v4065 = vadd.f32 0.0, %v4064
  %v4066 = vpop.f32.mrf.mxu0
  %4067 = vmatprep.mubr.f32.mxu0 0.0
  %4068 = vmatmul.mubr.f32.gmra.mxu0 %v3974
  %v4069 = vpop.f32.mrf.mxu0
  %v4070 = vadd.f32 0.0, %v4069
  %v4071 = vpop.f32.mrf.mxu0
  %4072 = vmatprep.mubr.f32.mxu0 0.0
  %4073 = vmatmul.mubr.f32.gmra.mxu0 %v3977
  %v4074 = vpop.f32.mrf.mxu0
  %v4075 = vadd.f32 0.0, %v4074
  %v4076 = vpop.f32.mrf.mxu0
  %4077 = vmatprep.mubr.f32.mxu0 0.0
  %4078 = vmatmul.mubr.f32.gmra.mxu0 %v3980
  %v4079 = vpop.f32.mrf.mxu0
  %v4080 = vadd.f32 0.0, %v4079
  %v4081 = vpop.f32.mrf.mxu0
  %4082 = vmatprep.mubr.f32.mxu0 0.0
  %4083 = vmatmul.mubr.f32.gmra.mxu0 %v3983
  %v4084 = vpop.f32.mrf.mxu0
  %v4085 = vadd.f32 0.0, %v4084
  %v4086 = vpop.f32.mrf.mxu0
  %4087 = vmatprep.mubr.f32.mxu0 0.0
  %4088 = vmatmul.mubr.f32.gmra.mxu0 %v3986
  %v4089 = vpop.f32.mrf.mxu0
  %v4090 = vadd.f32 0.0, %v4089
  %v4091 = vpop.f32.mrf.mxu0
  %4092 = vdwg.mxu0
  %v4093 = vadd.f32 %v3430, %v4055
  %v4094 = vadd.f32 %v3431, %v4060
  %v4095 = vadd.f32 %v3432, %v4065
  %v4096 = vadd.f32 %v3433, %v4070
  %v4097 = vadd.f32 %v3434, %v4075
  %v4098 = vadd.f32 %v3435, %v4080
  %v4099 = vadd.f32 %v3436, %v4085
  %v4100 = vadd.f32 %v3437, %v4090
  %4101 = vmatprep.subr.mxu0 0.0
  %4102 = vmatpush1.msra.mxu0 0.0
  %4103 = vmatprep.subr.mxu0 0.0
  %4104 = vmatpush1.msra.mxu0 0.0
  %4105 = vmatprep.subr.mxu0 0.0
  %4106 = vmatpush1.msra.mxu0 0.0
  %4107 = vmatprep.subr.mxu0 0.0
  %4108 = vmatpush1.msra.mxu0 0.0
  %4109 = vmatprep.subr.mxu0 0.0
  %4110 = vmatpush1.msra.mxu0 0.0
  %4111 = vmatprep.subr.mxu0 0.0
  %4112 = vmatpush1.msra.mxu0 0.0
  %4113 = vmatprep.subr.mxu0 0.0
  %4114 = vmatpush1.msra.mxu0 0.0
  %4115 = vmatprep.subr.mxu0 0.0
  %4116 = vmatpush1.msra.mxu0 0.0
  %4117 = vmatprep.subr.mxu0 0.0
  %4118 = vmatpush1.msra.mxu0 0.0
  %4119 = vmatprep.subr.mxu0 0.0
  %4120 = vmatpush1.msra.mxu0 0.0
  %4121 = vmatprep.subr.mxu0 0.0
  %4122 = vmatpush1.msra.mxu0 0.0
  %4123 = vmatprep.subr.mxu0 0.0
  %4124 = vmatpush1.msra.mxu0 0.0
  %4125 = vmatprep.subr.mxu0 0.0
  %4126 = vmatpush1.msra.mxu0 0.0
  %4127 = vmatprep.subr.mxu0 0.0
  %4128 = vmatpush1.msra.mxu0 0.0
  %4129 = vmatprep.subr.mxu0 0.0
  %4130 = vmatpush1.msra.mxu0 0.0
  %4131 = vmatprep.subr.mxu0 0.0
  %4132 = vmatpush1.msra.mxu0 %v1600
  %4133 = vmatprep.subr.mxu0 0.0
  %4134 = vmatpush2.msra.mxu0 0.0
  %4135 = vmatprep.subr.mxu0 0.0
  %4136 = vmatpush2.msra.mxu0 0.0
  %4137 = vmatprep.subr.mxu0 0.0
  %4138 = vmatpush2.msra.mxu0 0.0
  %4139 = vmatprep.subr.mxu0 0.0
  %4140 = vmatpush2.msra.mxu0 0.0
  %4141 = vmatprep.subr.mxu0 0.0
  %4142 = vmatpush2.msra.mxu0 0.0
  %4143 = vmatprep.subr.mxu0 0.0
  %4144 = vmatpush2.msra.mxu0 0.0
  %4145 = vmatprep.subr.mxu0 0.0
  %4146 = vmatpush2.msra.mxu0 0.0
  %4147 = vmatprep.subr.mxu0 0.0
  %4148 = vmatpush2.msra.mxu0 0.0
  %4149 = vmatprep.subr.mxu0 0.0
  %4150 = vmatpush2.msra.mxu0 0.0
  %4151 = vmatprep.subr.mxu0 0.0
  %4152 = vmatpush2.msra.mxu0 0.0
  %4153 = vmatprep.subr.mxu0 0.0
  %4154 = vmatpush2.msra.mxu0 0.0
  %4155 = vmatprep.subr.mxu0 0.0
  %4156 = vmatpush2.msra.mxu0 0.0
  %4157 = vmatprep.subr.mxu0 0.0
  %4158 = vmatpush2.msra.mxu0 0.0
  %4159 = vmatprep.subr.mxu0 0.0
  %4160 = vmatpush2.msra.mxu0 0.0
  %4161 = vmatprep.subr.mxu0 0.0
  %4162 = vmatpush2.msra.mxu0 0.0
  %4163 = vmatprep.subr.mxu0 0.0
  %4164 = vmatpush2.msra.mxu0 0.0
  %4165 = vmatprep.mubr.f32.mxu0 0.0
  %4166 = vmatmul.mubr.f32.gmra.mxu0 %v3965
  %v4167 = vpop.f32.mrf.mxu0
  %v4168 = vadd.f32 0.0, %v4167
  %v4169 = vpop.f32.mrf.mxu0
  %4170 = vmatprep.mubr.f32.mxu0 0.0
  %4171 = vmatmul.mubr.f32.gmra.mxu0 %v3968
  %v4172 = vpop.f32.mrf.mxu0
  %v4173 = vadd.f32 0.0, %v4172
  %v4174 = vpop.f32.mrf.mxu0
  %4175 = vmatprep.mubr.f32.mxu0 0.0
  %4176 = vmatmul.mubr.f32.gmra.mxu0 %v3971
  %v4177 = vpop.f32.mrf.mxu0
  %v4178 = vadd.f32 0.0, %v4177
  %v4179 = vpop.f32.mrf.mxu0
  %4180 = vmatprep.mubr.f32.mxu0 0.0
  %4181 = vmatmul.mubr.f32.gmra.mxu0 %v3974
  %v4182 = vpop.f32.mrf.mxu0
  %v4183 = vadd.f32 0.0, %v4182
  %v4184 = vpop.f32.mrf.mxu0
  %4185 = vmatprep.mubr.f32.mxu0 0.0
  %4186 = vmatmul.mubr.f32.gmra.mxu0 %v3977
  %v4187 = vpop.f32.mrf.mxu0
  %v4188 = vadd.f32 0.0, %v4187
  %v4189 = vpop.f32.mrf.mxu0
  %4190 = vmatprep.mubr.f32.mxu0 0.0
  %4191 = vmatmul.mubr.f32.gmra.mxu0 %v3980
  %v4192 = vpop.f32.mrf.mxu0
  %v4193 = vadd.f32 0.0, %v4192
  %v4194 = vpop.f32.mrf.mxu0
  %4195 = vmatprep.mubr.f32.mxu0 0.0
  %4196 = vmatmul.mubr.f32.gmra.mxu0 %v3983
  %v4197 = vpop.f32.mrf.mxu0
  %v4198 = vadd.f32 0.0, %v4197
  %v4199 = vpop.f32.mrf.mxu0
  %4200 = vmatprep.mubr.f32.mxu0 0.0
  %4201 = vmatmul.mubr.f32.gmra.mxu0 %v3986
  %v4202 = vpop.f32.mrf.mxu0
  %v4203 = vadd.f32 0.0, %v4202
  %v4204 = vpop.f32.mrf.mxu0
  %4205 = vdwg.mxu0
  %v4206 = vadd.f32 %v3543, %v4168
  %v4207 = vadd.f32 %v3544, %v4173
  %v4208 = vadd.f32 %v3545, %v4178
  %v4209 = vadd.f32 %v3546, %v4183
  %v4210 = vadd.f32 %v3547, %v4188
  %v4211 = vadd.f32 %v3548, %v4193
  %v4212 = vadd.f32 %v3549, %v4198
  %v4213 = vadd.f32 %v3550, %v4203
  %4222 = vrot.lane.b32.xlu0 %v4206, 127
  %v4223 = vpop.permute.xlu0 %4222
  %4224 = vrot.lane.b32.xlu0 %v4207, 127
  %v4225 = vpop.permute.xlu0 %4224
  %4226 = vrot.lane.b32.xlu0 %v4208, 127
  %v4227 = vpop.permute.xlu0 %4226
  %4228 = vrot.lane.b32.xlu0 %v4209, 127
  %v4229 = vpop.permute.xlu0 %4228
  %4230 = vrot.lane.b32.xlu0 %v4210, 127
  %v4231 = vpop.permute.xlu0 %4230
  %4232 = vrot.lane.b32.xlu0 %v4211, 127
  %v4233 = vpop.permute.xlu0 %4232
  %4234 = vrot.lane.b32.xlu0 %v4212, 127
  %v4235 = vpop.permute.xlu0 %4234
  %4236 = vrot.lane.b32.xlu0 %v4213, 127
  %v4237 = vpop.permute.xlu0 %4236
  %4246 = vxpose.xlu0.b32.start [1/16] %v4223, 128
  %4247 = vxpose.xlu0.b32.cont [2/16] %v4225, 128
  %4248 = vxpose.xlu0.b32.cont [3/16] %v4227, 128
  %4249 = vxpose.xlu0.b32.cont [4/16] %v4229, 128
  %4250 = vxpose.xlu0.b32.cont [5/16] %v4231, 128
  %4251 = vxpose.xlu0.b32.cont [6/16] %v4233, 128
  %4252 = vxpose.xlu0.b32.cont [7/16] %v4235, 128
  %4253 = vxpose.xlu0.b32.cont [8/16] %v4237, 128
  %4254 = vxpose.xlu0.b32.cont [9/16] 0.0, 128
  %4255 = vxpose.xlu0.b32.cont [10/16] 0.0, 128
  %4256 = vxpose.xlu0.b32.cont [11/16] 0.0, 128
  %4257 = vxpose.xlu0.b32.cont [12/16] 0.0, 128
  %4258 = vxpose.xlu0.b32.cont [13/16] 0.0, 128
  %4259 = vxpose.xlu0.b32.cont [14/16] 0.0, 128
  %4260 = vxpose.xlu0.b32.cont [15/16] 0.0, 128
  %4261 = vxpose.xlu0.b32.end [16/16] 0.0, 128
  %v4262 = vpop.trf.xlu0
  %v4263 = vpop.trf.xlu0
  %v4264 = vpop.trf.xlu0
  %v4265 = vpop.trf.xlu0
  %v4266 = vpop.trf.xlu0
  %v4267 = vpop.trf.xlu0
  %v4268 = vpop.trf.xlu0
  %v4269 = vpop.trf.xlu0
  %v4270 = vpop.trf.xlu0
  %v4271 = vpop.trf.xlu0
  %v4272 = vpop.trf.xlu0
  %v4273 = vpop.trf.xlu0
  %v4274 = vpop.trf.xlu0
  %v4275 = vpop.trf.xlu0
  %v4276 = vpop.trf.xlu0
  %v4277 = vpop.trf.xlu0
  %4278 = vset.pattern.permute.xlu0 0
  %4279 = vperm.xlu0 %4278, %v4206
  %v4280 = vpop.permute.xlu0 %4279
  %4282 = vset.pattern.permute.xlu0 0
  %4283 = vperm.xlu0 %4282, %v4207
  %v4284 = vpop.permute.xlu0 %4283
  %4286 = vset.pattern.permute.xlu0 0
  %4287 = vperm.xlu0 %4286, %v4208
  %v4288 = vpop.permute.xlu0 %4287
  %4290 = vset.pattern.permute.xlu0 0
  %4291 = vperm.xlu0 %4290, %v4209
  %v4292 = vpop.permute.xlu0 %4291
  %4294 = vset.pattern.permute.xlu0 0
  %4295 = vperm.xlu0 %4294, %v4210
  %v4296 = vpop.permute.xlu0 %4295
  %4298 = vset.pattern.permute.xlu0 0
  %4299 = vperm.xlu0 %4298, %v4211
  %v4300 = vpop.permute.xlu0 %4299
  %4302 = vset.pattern.permute.xlu0 0
  %4303 = vperm.xlu0 %4302, %v4212
  %v4304 = vpop.permute.xlu0 %4303
  %4306 = vset.pattern.permute.xlu0 0
  %4307 = vperm.xlu0 %4306, %v4213
  %v4308 = vpop.permute.xlu0 %4307
  %v4310 = vlaneseq
  %v4311 = vshrl.u32 %v4310, 7
  %v4312 = vsub.s32 0, %v4311
  %v4313 = vrot.slane %v4262, %v4312
  %v4314 = vadd.f32 %v4280, %v4313
  %v4315 = vadd.f32 %v4284, %v4313
  %v4316 = vadd.f32 %v4288, %v4313
  %v4317 = vadd.f32 %v4292, %v4313
  %v4318 = vadd.f32 %v4296, %v4313
  %v4319 = vadd.f32 %v4300, %v4313
  %v4320 = vadd.f32 %v4304, %v4313
  %v4321 = vadd.f32 %v4308, %v4313
  %vm4322 = vcmp.gt.f32.partialorder %v4314, 0.0
  %vm4323 = vcmp.gt.f32.partialorder %v4315, 0.0
  %vm4324 = vcmp.gt.f32.partialorder %v4316, 0.0
  %vm4325 = vcmp.gt.f32.partialorder %v4317, 0.0
  %vm4326 = vcmp.gt.f32.partialorder %v4318, 0.0
  %vm4327 = vcmp.gt.f32.partialorder %v4319, 0.0
  %vm4328 = vcmp.gt.f32.partialorder %v4320, 0.0
  %vm4329 = vcmp.gt.f32.partialorder %v4321, 0.0
  %v4330 = vmul.f32 %v4314, 0.2
  %v4331 = vmul.f32 %v4315, 0.2
  %v4332 = vmul.f32 %v4316, 0.2
  %v4333 = vmul.f32 %v4317, 0.2
  %v4334 = vmul.f32 %v4318, 0.2
  %v4335 = vmul.f32 %v4319, 0.2
  %v4336 = vmul.f32 %v4320, 0.2
  %v4337 = vmul.f32 %v4321, 0.2
  %v4338 = vsel %vm4322, %v4314, %v4330
  %v4339 = vsel %vm4323, %v4315, %v4331
  %v4340 = vsel %vm4324, %v4316, %v4332
  %v4341 = vsel %vm4325, %v4317, %v4333
  %v4342 = vsel %vm4326, %v4318, %v4334
  %v4343 = vsel %vm4327, %v4319, %v4335
  %v4344 = vsel %vm4328, %v4320, %v4336
  %v4345 = vsel %vm4329, %v4321, %v4337
  %v4346 = vsel %vm667, %v4338, -inf
  %4347 = vmax.xlane.f32.xlu0 %v4346
  %v4348 = vpop.xlane.xlu0 %4347
  %v4349 = vsel %vm667, %v4339, -inf
  %4350 = vmax.xlane.f32.xlu0 %v4349
  %v4351 = vpop.xlane.xlu0 %4350
  %v4352 = vsel %vm667, %v4340, -inf
  %4353 = vmax.xlane.f32.xlu0 %v4352
  %v4354 = vpop.xlane.xlu0 %4353
  %v4355 = vsel %vm667, %v4341, -inf
  %4356 = vmax.xlane.f32.xlu0 %v4355
  %v4357 = vpop.xlane.xlu0 %4356
  %v4358 = vsel %vm667, %v4342, -inf
  %4359 = vmax.xlane.f32.xlu0 %v4358
  %v4360 = vpop.xlane.xlu0 %4359
  %v4361 = vsel %vm667, %v4343, -inf
  %4362 = vmax.xlane.f32.xlu0 %v4361
  %v4363 = vpop.xlane.xlu0 %4362
  %v4364 = vsel %vm667, %v4344, -inf
  %4365 = vmax.xlane.f32.xlu0 %v4364
  %v4366 = vpop.xlane.xlu0 %4365
  %v4367 = vsel %vm667, %v4345, -inf
  %4368 = vmax.xlane.f32.xlu0 %v4367
  %v4369 = vpop.xlane.xlu0 %4368
  %v4370 = vsub.f32 %v4338, %v4348
  %v4371 = vsub.f32 %v4339, %v4351
  %v4372 = vsub.f32 %v4340, %v4354
  %v4373 = vsub.f32 %v4341, %v4357
  %v4374 = vsub.f32 %v4342, %v4360
  %v4375 = vsub.f32 %v4343, %v4363
  %v4376 = vsub.f32 %v4344, %v4366
  %v4377 = vsub.f32 %v4345, %v4369
  %v4378 = vmul.f32 %v4370, 1.442695
  %v4379 = vpow.pop %v4378
  %v4380 = vmul.f32 %v4371, 1.442695
  %v4381 = vpow.pop %v4380
  %v4382 = vmul.f32 %v4372, 1.442695
  %v4383 = vpow.pop %v4382
  %v4384 = vmul.f32 %v4373, 1.442695
  %v4385 = vpow.pop %v4384
  %v4386 = vmul.f32 %v4374, 1.442695
  %v4387 = vpow.pop %v4386
  %v4388 = vmul.f32 %v4375, 1.442695
  %v4389 = vpow.pop %v4388
  %v4390 = vmul.f32 %v4376, 1.442695
  %v4391 = vpow.pop %v4390
  %v4392 = vmul.f32 %v4377, 1.442695
  %v4393 = vpow.pop %v4392
  %v4394 = vsel %vm667, %v4379, 0.0
  %4395 = vadd.xlane.f32.xlu0 %v4394
  %v4396 = vpop.xlane.xlu0 %4395
  %v4397 = vsel %vm667, %v4381, 0.0
  %4398 = vadd.xlane.f32.xlu0 %v4397
  %v4399 = vpop.xlane.xlu0 %4398
  %v4400 = vsel %vm667, %v4383, 0.0
  %4401 = vadd.xlane.f32.xlu0 %v4400
  %v4402 = vpop.xlane.xlu0 %4401
  %v4403 = vsel %vm667, %v4385, 0.0
  %4404 = vadd.xlane.f32.xlu0 %v4403
  %v4405 = vpop.xlane.xlu0 %4404
  %v4406 = vsel %vm667, %v4387, 0.0
  %4407 = vadd.xlane.f32.xlu0 %v4406
  %v4408 = vpop.xlane.xlu0 %4407
  %v4409 = vsel %vm667, %v4389, 0.0
  %4410 = vadd.xlane.f32.xlu0 %v4409
  %v4411 = vpop.xlane.xlu0 %4410
  %v4412 = vsel %vm667, %v4391, 0.0
  %4413 = vadd.xlane.f32.xlu0 %v4412
  %v4414 = vpop.xlane.xlu0 %4413
  %v4415 = vsel %vm667, %v4393, 0.0
  %4416 = vadd.xlane.f32.xlu0 %v4415
  %v4417 = vpop.xlane.xlu0 %4416
  %v4418 = vrcp.pop %v4396
  %v4419 = vrcp.pop %v4399
  %v4420 = vrcp.pop %v4402
  %v4421 = vrcp.pop %v4405
  %v4422 = vrcp.pop %v4408
  %v4423 = vrcp.pop %v4411
  %v4424 = vrcp.pop %v4414
  %v4425 = vrcp.pop %v4417
  %v4426 = vmul.f32 %v4379, %v4418
  %v4427 = vmul.f32 %v4381, %v4419
  %v4428 = vmul.f32 %v4383, %v4420
  %v4429 = vmul.f32 %v4385, %v4421
  %v4430 = vmul.f32 %v4387, %v4422
  %v4431 = vmul.f32 %v4389, %v4423
  %v4432 = vmul.f32 %v4391, %v4424
  %v4433 = vmul.f32 %v4393, %v4425
  %v4435 = vsel %vm667, %v4426, 0
  %v4438 = vsel %vm667, %v4427, 0
  %v4441 = vsel %vm667, %v4428, 0
  %v4444 = vsel %vm667, %v4429, 0
  %v4447 = vsel %vm667, %v4430, 0
  %v4450 = vsel %vm667, %v4431, 0
  %v4453 = vsel %vm667, %v4432, 0
  %v4456 = vsel %vm667, %v4433, 0
  %4458 = vmatprep.subr.mxu0 0.0
  %4459 = vmatpush1.msra.mxu0 0.0
  %4460 = vmatprep.subr.mxu0 0.0
  %4461 = vmatpush1.msra.mxu0 0.0
  %4462 = vmatprep.subr.mxu0 0.0
  %4463 = vmatpush1.msra.mxu0 0.0
  %4464 = vmatprep.subr.mxu0 0.0
  %4465 = vmatpush1.msra.mxu0 0.0
  %4466 = vmatprep.subr.mxu0 0.0
  %4467 = vmatpush1.msra.mxu0 0.0
  %4468 = vmatprep.subr.mxu0 0.0
  %4469 = vmatpush1.msra.mxu0 0.0
  %4470 = vmatprep.subr.mxu0 0.0
  %4471 = vmatpush1.msra.mxu0 0.0
  %4472 = vmatprep.subr.mxu0 0.0
  %4473 = vmatpush1.msra.mxu0 0.0
  %4474 = vmatprep.subr.mxu0 0.0
  %4475 = vmatpush1.msra.mxu0 %v4100
  %4476 = vmatprep.subr.mxu0 0.0
  %4477 = vmatpush1.msra.mxu0 %v4099
  %4478 = vmatprep.subr.mxu0 0.0
  %4479 = vmatpush1.msra.mxu0 %v4098
  %4480 = vmatprep.subr.mxu0 0.0
  %4481 = vmatpush1.msra.mxu0 %v4097
  %4482 = vmatprep.subr.mxu0 0.0
  %4483 = vmatpush1.msra.mxu0 %v4096
  %4484 = vmatprep.subr.mxu0 0.0
  %4485 = vmatpush1.msra.mxu0 %v4095
  %4486 = vmatprep.subr.mxu0 0.0
  %4487 = vmatpush1.msra.mxu0 %v4094
  %4488 = vmatprep.subr.mxu0 0.0
  %4489 = vmatpush1.msra.mxu0 %v4093
  %4490 = vmatprep.subr.mxu0 0.0
  %4491 = vmatpush2.msra.mxu0 0.0
  %4492 = vmatprep.subr.mxu0 0.0
  %4493 = vmatpush2.msra.mxu0 0.0
  %4494 = vmatprep.subr.mxu0 0.0
  %4495 = vmatpush2.msra.mxu0 0.0
  %4496 = vmatprep.subr.mxu0 0.0
  %4497 = vmatpush2.msra.mxu0 0.0
  %4498 = vmatprep.subr.mxu0 0.0
  %4499 = vmatpush2.msra.mxu0 0.0
  %4500 = vmatprep.subr.mxu0 0.0
  %4501 = vmatpush2.msra.mxu0 0.0
  %4502 = vmatprep.subr.mxu0 0.0
  %4503 = vmatpush2.msra.mxu0 0.0
  %4504 = vmatprep.subr.mxu0 0.0
  %4505 = vmatpush2.msra.mxu0 0.0
  %4506 = vmatprep.subr.mxu0 0.0
  %4507 = vmatpush2.msra.mxu0 0.0
  %4508 = vmatprep.subr.mxu0 0.0
  %4509 = vmatpush2.msra.mxu0 0.0
  %4510 = vmatprep.subr.mxu0 0.0
  %4511 = vmatpush2.msra.mxu0 0.0
  %4512 = vmatprep.subr.mxu0 0.0
  %4513 = vmatpush2.msra.mxu0 0.0
  %4514 = vmatprep.subr.mxu0 0.0
  %4515 = vmatpush2.msra.mxu0 0.0
  %4516 = vmatprep.subr.mxu0 0.0
  %4517 = vmatpush2.msra.mxu0 0.0
  %4518 = vmatprep.subr.mxu0 0.0
  %4519 = vmatpush2.msra.mxu0 0.0
  %4520 = vmatprep.subr.mxu0 0.0
  %4521 = vmatpush2.msra.mxu0 0.0
  %4522 = vmatprep.mubr.f32.mxu0 0.0
  %4523 = vmatmul.mubr.f32.gmra.mxu0 %v4435
  %v4524 = vpop.f32.mrf.mxu0
  %v4525 = vadd.f32 0.0, %v4524
  %v4526 = vpop.f32.mrf.mxu0
  %4527 = vmatprep.mubr.f32.mxu0 0.0
  %4528 = vmatmul.mubr.f32.gmra.mxu0 %v4438
  %v4529 = vpop.f32.mrf.mxu0
  %v4530 = vadd.f32 0.0, %v4529
  %v4531 = vpop.f32.mrf.mxu0
  %4532 = vmatprep.mubr.f32.mxu0 0.0
  %4533 = vmatmul.mubr.f32.gmra.mxu0 %v4441
  %v4534 = vpop.f32.mrf.mxu0
  %v4535 = vadd.f32 0.0, %v4534
  %v4536 = vpop.f32.mrf.mxu0
  %4537 = vmatprep.mubr.f32.mxu0 0.0
  %4538 = vmatmul.mubr.f32.gmra.mxu0 %v4444
  %v4539 = vpop.f32.mrf.mxu0
  %v4540 = vadd.f32 0.0, %v4539
  %v4541 = vpop.f32.mrf.mxu0
  %4542 = vmatprep.mubr.f32.mxu0 0.0
  %4543 = vmatmul.mubr.f32.gmra.mxu0 %v4447
  %v4544 = vpop.f32.mrf.mxu0
  %v4545 = vadd.f32 0.0, %v4544
  %v4546 = vpop.f32.mrf.mxu0
  %4547 = vmatprep.mubr.f32.mxu0 0.0
  %4548 = vmatmul.mubr.f32.gmra.mxu0 %v4450
  %v4549 = vpop.f32.mrf.mxu0
  %v4550 = vadd.f32 0.0, %v4549
  %v4551 = vpop.f32.mrf.mxu0
  %4552 = vmatprep.mubr.f32.mxu0 0.0
  %4553 = vmatmul.mubr.f32.gmra.mxu0 %v4453
  %v4554 = vpop.f32.mrf.mxu0
  %v4555 = vadd.f32 0.0, %v4554
  %v4556 = vpop.f32.mrf.mxu0
  %4557 = vmatprep.mubr.f32.mxu0 0.0
  %4558 = vmatmul.mubr.f32.gmra.mxu0 %v4456
  %v4559 = vpop.f32.mrf.mxu0
  %v4560 = vadd.f32 0.0, %v4559
  %v4561 = vpop.f32.mrf.mxu0
  %4562 = vdwg.mxu0
  %vm4563 = vcmp.gt.f32.partialorder %v4525, 0.0
  %vm4564 = vcmp.gt.f32.partialorder %v4530, 0.0
  %vm4565 = vcmp.gt.f32.partialorder %v4535, 0.0
  %vm4566 = vcmp.gt.f32.partialorder %v4540, 0.0
  %vm4567 = vcmp.gt.f32.partialorder %v4545, 0.0
  %vm4568 = vcmp.gt.f32.partialorder %v4550, 0.0
  %vm4569 = vcmp.gt.f32.partialorder %v4555, 0.0
  %vm4570 = vcmp.gt.f32.partialorder %v4560, 0.0
  %v4571 = vmin.f32 %v4525, 0.0
  %v4572 = vmin.f32 %v4530, 0.0
  %v4573 = vmin.f32 %v4535, 0.0
  %v4574 = vmin.f32 %v4540, 0.0
  %v4575 = vmin.f32 %v4545, 0.0
  %v4576 = vmin.f32 %v4550, 0.0
  %v4577 = vmin.f32 %v4555, 0.0
  %v4578 = vmin.f32 %v4560, 0.0
  %v4579 = vmul.f32 %v4571, 1.442695
  %v4580 = vpow.pop %v4579
  %v4581 = vmul.f32 %v4572, 1.442695
  %v4582 = vpow.pop %v4581
  %v4583 = vmul.f32 %v4573, 1.442695
  %v4584 = vpow.pop %v4583
  %v4585 = vmul.f32 %v4574, 1.442695
  %v4586 = vpow.pop %v4585
  %v4587 = vmul.f32 %v4575, 1.442695
  %v4588 = vpow.pop %v4587
  %v4589 = vmul.f32 %v4576, 1.442695
  %v4590 = vpow.pop %v4589
  %v4591 = vmul.f32 %v4577, 1.442695
  %v4592 = vpow.pop %v4591
  %v4593 = vmul.f32 %v4578, 1.442695
  %v4594 = vpow.pop %v4593
  %v4595 = vsub.f32 %v4580, 1.0
  %v4596 = vsub.f32 %v4582, 1.0
  %v4597 = vsub.f32 %v4584, 1.0
  %v4598 = vsub.f32 %v4586, 1.0
  %v4599 = vsub.f32 %v4588, 1.0
  %v4600 = vsub.f32 %v4590, 1.0
  %v4601 = vsub.f32 %v4592, 1.0
  %v4602 = vsub.f32 %v4594, 1.0
  %v4603 = vsel %vm4563, %v4525, %v4595
  %v4604 = vsel %vm4564, %v4530, %v4596
  %v4605 = vsel %vm4565, %v4535, %v4597
  %v4606 = vsel %vm4566, %v4540, %v4598
  %v4607 = vsel %vm4567, %v4545, %v4599
  %v4608 = vsel %vm4568, %v4550, %v4600
  %v4609 = vsel %vm4569, %v4555, %v4601
  %v4610 = vsel %vm4570, %v4560, %v4602
  %v4611 = vlaneseq
  %v4612 = vand.u32 %v4611, 127
  %vm4613 = vcmp.lt.s32.totalorder %v4612, 7
  %v4614 = vsel %vm4613, %v4603, -1e+30
  %v4615 = vsel %vm4613, %v4604, -1e+30
  %v4616 = vsel %vm4613, %v4605, -1e+30
  %v4617 = vsel %vm4613, %v4606, -1e+30
  %v4618 = vsel %vm4613, %v4607, -1e+30
  %v4619 = vsel %vm4613, %v4608, -1e+30
  %v4620 = vsel %vm4613, %v4609, -1e+30
  %v4621 = vsel %vm4613, %v4610, -1e+30
  %4622 = vmax.xlane.f32.xlu0 %v4614
  %v4623 = vpop.xlane.xlu0 %4622
  %4624 = vmax.xlane.f32.xlu0 %v4615
  %v4625 = vpop.xlane.xlu0 %4624
  %4626 = vmax.xlane.f32.xlu0 %v4616
  %v4627 = vpop.xlane.xlu0 %4626
  %4628 = vmax.xlane.f32.xlu0 %v4617
  %v4629 = vpop.xlane.xlu0 %4628
  %4630 = vmax.xlane.f32.xlu0 %v4618
  %v4631 = vpop.xlane.xlu0 %4630
  %4632 = vmax.xlane.f32.xlu0 %v4619
  %v4633 = vpop.xlane.xlu0 %4632
  %4634 = vmax.xlane.f32.xlu0 %v4620
  %v4635 = vpop.xlane.xlu0 %4634
  %4636 = vmax.xlane.f32.xlu0 %v4621
  %v4637 = vpop.xlane.xlu0 %4636
  %v4638 = vsub.f32 %v4614, %v4623
  %v4639 = vsub.f32 %v4615, %v4625
  %v4640 = vsub.f32 %v4616, %v4627
  %v4641 = vsub.f32 %v4617, %v4629
  %v4642 = vsub.f32 %v4618, %v4631
  %v4643 = vsub.f32 %v4619, %v4633
  %v4644 = vsub.f32 %v4620, %v4635
  %v4645 = vsub.f32 %v4621, %v4637
  %v4646 = vmul.f32 %v4638, 1.442695
  %v4647 = vpow.pop %v4646
  %v4648 = vmul.f32 %v4639, 1.442695
  %v4649 = vpow.pop %v4648
  %v4650 = vmul.f32 %v4640, 1.442695
  %v4651 = vpow.pop %v4650
  %v4652 = vmul.f32 %v4641, 1.442695
  %v4653 = vpow.pop %v4652
  %v4654 = vmul.f32 %v4642, 1.442695
  %v4655 = vpow.pop %v4654
  %v4656 = vmul.f32 %v4643, 1.442695
  %v4657 = vpow.pop %v4656
  %v4658 = vmul.f32 %v4644, 1.442695
  %v4659 = vpow.pop %v4658
  %v4660 = vmul.f32 %v4645, 1.442695
  %v4661 = vpow.pop %v4660
  %4662 = vadd.xlane.f32.xlu0 %v4647
  %v4663 = vpop.xlane.xlu0 %4662
  %4664 = vadd.xlane.f32.xlu0 %v4649
  %v4665 = vpop.xlane.xlu0 %4664
  %4666 = vadd.xlane.f32.xlu0 %v4651
  %v4667 = vpop.xlane.xlu0 %4666
  %4668 = vadd.xlane.f32.xlu0 %v4653
  %v4669 = vpop.xlane.xlu0 %4668
  %4670 = vadd.xlane.f32.xlu0 %v4655
  %v4671 = vpop.xlane.xlu0 %4670
  %4672 = vadd.xlane.f32.xlu0 %v4657
  %v4673 = vpop.xlane.xlu0 %4672
  %4674 = vadd.xlane.f32.xlu0 %v4659
  %v4675 = vpop.xlane.xlu0 %4674
  %4676 = vadd.xlane.f32.xlu0 %v4661
  %v4677 = vpop.xlane.xlu0 %4676
  %v4678 = vlog2.pop %v4663
  %v4679 = vmul.f32 %v4678, 0.6931472
  %v4680 = vlog2.pop %v4665
  %v4681 = vmul.f32 %v4680, 0.6931472
  %v4682 = vlog2.pop %v4667
  %v4683 = vmul.f32 %v4682, 0.6931472
  %v4684 = vlog2.pop %v4669
  %v4685 = vmul.f32 %v4684, 0.6931472
  %v4686 = vlog2.pop %v4671
  %v4687 = vmul.f32 %v4686, 0.6931472
  %v4688 = vlog2.pop %v4673
  %v4689 = vmul.f32 %v4688, 0.6931472
  %v4690 = vlog2.pop %v4675
  %v4691 = vmul.f32 %v4690, 0.6931472
  %v4692 = vlog2.pop %v4677
  %v4693 = vmul.f32 %v4692, 0.6931472
  %v4694 = vsub.f32 %v4638, %v4679
  %v4695 = vsub.f32 %v4639, %v4681
  %v4696 = vsub.f32 %v4640, %v4683
  %v4697 = vsub.f32 %v4641, %v4685
  %v4698 = vsub.f32 %v4642, %v4687
  %v4699 = vsub.f32 %v4643, %v4689
  %v4700 = vsub.f32 %v4644, %v4691
  %v4701 = vsub.f32 %v4645, %v4693
  %4702 = vst [vmem:[%s13] sm:$0xff] %v4694
  %4703 = vst [vmem:[%s13 + $0x8] sm:$0xff] %v4695
  %4704 = vst [vmem:[%s13 + $0x10] sm:$0xff] %v4696
  %4705 = vst [vmem:[%s13 + $0x18] sm:$0xff] %v4697
  %4706 = vst [vmem:[%s13 + $0x20] sm:$0xff] %v4698
  %4707 = vst [vmem:[%s13 + $0x28] sm:$0xff] %v4699
  %4708 = vst [vmem:[%s13 + $0x30] sm:$0xff] %v4700
  %4709 = vst [vmem:[%s13 + $0x38] sm:$0xff] %v4701
  // Predicated region
  $region54: #{gat_forward.1} parent=0 // pred_check
    _
  $region55: #{gat_forward.1} parent=0 // pred_check_branch
    %4711 = sbr.rel (0) target = $region57
  $region56: #{gat_forward.1} parent=0 // pred_region
    _
  $region57: #{gat_forward.1} parent=0 // pred_fallthru
    _
  // Predicated region
  $region58: #{gat_forward.1} parent=0 // pred_check
    _
  $region59: #{gat_forward.1} parent=0 // pred_check_branch
    %4713 = sbr.rel (0) target = $region61
  $region60: #{gat_forward.1} parent=0 // pred_region
    _
  $region61: #{gat_forward.1} parent=0 // pred_fallthru
    _

</llo_original>
